<compile_context>
chip_gen: v7x
topology: tpu7x:2x2x1
jax: 0.10.0
libtpu: 0.0.40
codegen_flags: <defaults>
</compile_context>

<pallas_src>
import functools

import numpy as np
import jax
import jax.numpy as jnp
from jax import lax
from jax.experimental import pallas as pl
from jax.experimental.pallas import tpu as pltpu


# ----------------------------------------------------------------------------
# small in-kernel helpers (pure jnp, traced inside the kernels, all f32)
# ----------------------------------------------------------------------------
def _layer_norm(x, g, b, eps=1e-12):
    mu = jnp.mean(x, axis=-1, keepdims=True)
    var = jnp.mean((x - mu) * (x - mu), axis=-1, keepdims=True)
    return (x - mu) * lax.rsqrt(var + eps) * g + b


def _gelu(x):
    return 0.5 * x * (1.0 + jnp.tanh(0.7978845608028654 * (x + 0.044715 * x * x * x)))


# ----------------------------------------------------------------------------
# Kernel 1: single-layer transformer encoder, TB sentences per grid step.
#   matmul operands in bf16 (MXU), elementwise / statistics in f32 (v5e-safe).
# ----------------------------------------------------------------------------
def encoder_kernel(x_ref, am_ref, wq_ref, wk_ref, wv_ref, wo_ref,
                   g1_ref, b1_ref, w1_ref, c1_ref, w2_ref, c2_ref,
                   g2_ref, b2_ref, out_ref):
    TB, S, D = x_ref.shape
    x = x_ref[...].reshape(TB * S, D)            # (TB*S, D) f32
    am = am_ref[...]                             # (TB, 1, S) 1.0 real / 0.0 pad
    xb = x.astype(jnp.bfloat16)

    q = jnp.dot(xb, wq_ref[...], preferred_element_type=jnp.float32)
    k = jnp.dot(xb, wk_ref[...], preferred_element_type=jnp.float32)
    v = jnp.dot(xb, wv_ref[...], preferred_element_type=jnp.float32)
    q3 = q.reshape(TB, S, D).astype(jnp.bfloat16)
    k3 = k.reshape(TB, S, D).astype(jnp.bfloat16)
    v3 = v.reshape(TB, S, D).astype(jnp.bfloat16)

    scores = jnp.einsum('bqd,bkd->bqk', q3, k3,
                        preferred_element_type=jnp.float32)      # (TB, S, S)
    scores = scores * (1.0 / jnp.sqrt(jnp.float32(D))) + (am - 1.0) * 1e9
    mx = jnp.max(scores, axis=-1, keepdims=True)
    p = jnp.exp(scores - mx)
    inv = pl.reciprocal(jnp.sum(p, axis=-1, keepdims=True), approx=True)
    attn = (p * inv).astype(jnp.bfloat16)
    ctx = jnp.einsum('bqk,bkd->bqd', attn, v3,
                     preferred_element_type=jnp.float32)
    ctx = ctx.reshape(TB * S, D).astype(jnp.bfloat16)

    h = _layer_norm(
        x + jnp.dot(ctx, wo_ref[...], preferred_element_type=jnp.float32),
        g1_ref[...], b1_ref[...])
    f = _gelu(jnp.dot(h.astype(jnp.bfloat16), w1_ref[...],
                      preferred_element_type=jnp.float32) + c1_ref[...])
    f = jnp.dot(f.astype(jnp.bfloat16), w2_ref[...],
                preferred_element_type=jnp.float32) + c2_ref[...]
    y = _layer_norm(h + f, g2_ref[...], b2_ref[...])
    out_ref[...] = y.reshape(TB, S, D)


def run_encoder(p, x_emb, attn_mask3, tb=8):
    N, S, D = x_emb.shape
    F = p["w1"].shape[1]
    npad = (-N) % tb
    if npad:
        x_emb = jnp.pad(x_emb, ((0, npad), (0, 0), (0, 0)))
        attn_mask3 = jnp.pad(attn_mask3, ((0, npad), (0, 0), (0, 0)))
    NB = (N + npad) // tb
    bf = lambda a: a.astype(jnp.bfloat16)

    def const(shape):
        return pl.BlockSpec(shape, lambda b: (0, 0))
    # TODO(synk): on v7x (64 MiB VMEM) at BERT scale, mark the constant weight
    # BlockSpecs pipeline_mode=pl.Buffered(1) to avoid double-buffering them.

    in_specs = [
        pl.BlockSpec((tb, S, D), lambda b: (b, 0, 0)),
        pl.BlockSpec((tb, 1, S), lambda b: (b, 0, 0)),
        const((D, D)), const((D, D)), const((D, D)), const((D, D)),
        const((1, D)), const((1, D)),
        const((D, F)), const((1, F)), const((F, D)), const((1, D)),
        const((1, D)), const((1, D)),
    ]
    out = pl.pallas_call(
        encoder_kernel,
        out_shape=jax.ShapeDtypeStruct((N + npad, S, D), jnp.float32),
        grid=(NB,),
        in_specs=in_specs,
        out_specs=pl.BlockSpec((tb, S, D), lambda b: (b, 0, 0)),
        compiler_params=pltpu.CompilerParams(dimension_semantics=("parallel",)),
    )(x_emb, attn_mask3, bf(p["wq"]), bf(p["wk"]), bf(p["wv"]), bf(p["wo"]),
      p["ln1_g"], p["ln1_b"], bf(p["w1"]), p["c1"], bf(p["w2"]), p["c2"],
      p["ln2_g"], p["ln2_b"])
    return out[:N]


# ----------------------------------------------------------------------------
# Kernel 2: LM head + masked cross entropy (ignore_index = -100).
#   grid = (sentence-blocks, vocab-tiles); per-row online logsumexp across the
#   vocab tiles, resident (1,1) sum / count accumulators.
# ----------------------------------------------------------------------------
def mlm_kernel(hid_ref, dec_ref, bias_ref, lab_ref, sum_ref, cnt_ref,
               m_sc, l_sc, pk_sc):
    b = pl.program_id(0)
    v = pl.program_id(1)
    nv = pl.num_programs(1)
    TB, S, D = hid_ref.shape
    TV = dec_ref.shape[1]
    R = TB * S

    @pl.when(jnp.logical_and(b == 0, v == 0))
    def _init_out():
        sum_ref[...] = jnp.zeros_like(sum_ref)
        cnt_ref[...] = jnp.zeros_like(cnt_ref)

    @pl.when(v == 0)
    def _init_rows():
        m_sc[...] = jnp.full(m_sc.shape, -jnp.inf, m_sc.dtype)
        l_sc[...] = jnp.zeros(l_sc.shape, l_sc.dtype)
        pk_sc[...] = jnp.zeros(pk_sc.shape, pk_sc.dtype)

    h = hid_ref[...].reshape(R, D).astype(jnp.bfloat16)
    logits = jnp.dot(h, dec_ref[...],
                     preferred_element_type=jnp.float32) + bias_ref[...]  # (R, TV)

    # online logsumexp across vocab tiles (f32)
    m_new = jnp.maximum(m_sc[...], jnp.max(logits, axis=-1, keepdims=True))
    alpha = jnp.exp(m_sc[...] - m_new)
    l_sc[...] = alpha * l_sc[...] + jnp.sum(jnp.exp(logits - m_new),
                                            axis=-1, keepdims=True)
    m_sc[...] = m_new

    # picked (label) logit accumulation for this vocab tile
    lab = lab_ref[...].reshape(R, 1)
    local = lab - v * TV
    iot = lax.broadcasted_iota(jnp.int32, (R, TV), 1)
    pk_sc[...] = pk_sc[...] + jnp.sum(jnp.where(iot == local, logits, 0.0),
                                      axis=-1, keepdims=True)

    @pl.when(v == nv - 1)
    def _finish():
        lse = m_sc[...] + jnp.log(l_sc[...])
        valid = (lab != -100).astype(jnp.float32)
        nll = (lse - pk_sc[...]) * valid
        sum_ref[...] = sum_ref[...] + jnp.sum(nll, keepdims=True)
        cnt_ref[...] = cnt_ref[...] + jnp.sum(valid, keepdims=True)


def run_mlm(dec, bias, hidden, labels3, tb=8, tv=128):
    N, S, D = hidden.shape
    V = dec.shape[1]
    npad = (-N) % tb
    if npad:
        hidden = jnp.pad(hidden, ((0, npad), (0, 0), (0, 0)))
        labels3 = jnp.pad(labels3, ((0, npad), (0, 0), (0, 0)),
                          constant_values=-100)
    NB = (N + npad) // tb
    tv = tv if (V % tv == 0) else V
    VT = V // tv

    sums, cnts = pl.pallas_call(
        mlm_kernel,
        out_shape=(jax.ShapeDtypeStruct((1, 1), jnp.float32),
                   jax.ShapeDtypeStruct((1, 1), jnp.float32)),
        grid=(NB, VT),
        in_specs=[pl.BlockSpec((tb, S, D), lambda b, v: (b, 0, 0)),
                  pl.BlockSpec((D, tv), lambda b, v: (0, v)),
                  pl.BlockSpec((1, tv), lambda b, v: (0, v)),
                  pl.BlockSpec((tb, S, 1), lambda b, v: (b, 0, 0))],
        out_specs=(pl.BlockSpec((1, 1), lambda b, v: (0, 0)),
                   pl.BlockSpec((1, 1), lambda b, v: (0, 0))),
        scratch_shapes=[pltpu.VMEM((tb * S, 1), jnp.float32),
                        pltpu.VMEM((tb * S, 1), jnp.float32),
                        pltpu.VMEM((tb * S, 1), jnp.float32)],
        compiler_params=pltpu.CompilerParams(
            dimension_semantics=("arbitrary", "arbitrary")),
    )(hidden, dec.astype(jnp.bfloat16), bias, labels3)
    return sums[0, 0] / jnp.maximum(cnts[0, 0], 1.0)


# ----------------------------------------------------------------------------
# Kernel 3: cosine-similarity matrix of the (h_state ; t_state) embeddings
# ----------------------------------------------------------------------------
def sim_kernel(state_ref, mat_ref):
    s = state_ref[...]                                          # (N, 2D) f32
    ss = jnp.sum(s * s, axis=-1, keepdims=True)
    s = s * lax.rsqrt(jnp.maximum(ss, 1e-16))                   # eps ~ 1e-8 on norm
    mat_ref[...] = lax.dot_general(s, s, (((1,), (1,)), ((), ())),
                                   preferred_element_type=jnp.float32)


def run_sim(state):
    N = state.shape[0]
    return pl.pallas_call(
        sim_kernel, out_shape=jax.ShapeDtypeStruct((N, N), jnp.float32))(state)


# ----------------------------------------------------------------------------
# Kernel 4: NTXentLoss_noise.  The top int(0.7*P) keep-mask is computed outside
# (stable sort, earliest-index tie break); the anchor-match mask is built
# in-kernel from the small a1 / a2 index vectors (no dense f32 match matrix).
# ----------------------------------------------------------------------------
def ntxent_noise_kernel(K, temperature,
                        pos_ref, neg_ref, a1_ref, a2_ref, keep_ref, out_ref):
    pc = pos_ref[...]              # (P, 1)  positive-pair similarities
    nv = neg_ref[...]              # (1, Nn) negative-pair similarities
    a1 = a1_ref[...]               # (P, 1)  int32 anchors of positive pairs
    a2 = a2_ref[...]               # (1, Nn) int32 anchors of negative pairs
    keep = keep_ref[...]           # (P, 1)  1.0 for the kept (top-K) pairs

    inv_t = jnp.float32(1.0 / temperature)
    pp = pc * inv_t                                               # (P, 1)
    match = a1 == a2                                              # (P, Nn) bool
    negm = jnp.where(match, jnp.broadcast_to(nv * inv_t, match.shape),
                     jnp.float32(-1e30))
    # TODO(synk): torch casts the per-row neg max to fp16 (.half()) before the
    # max(); that fp16 rounding of the stabilizer is omitted here.
    mx = jnp.maximum(pp, jnp.max(negm, axis=1, keepdims=True))
    num = jnp.exp(pp - mx)
    den = jnp.sum(jnp.exp(negm - mx), axis=1, keepdims=True) + num
    log_exp = jnp.log(num * pl.reciprocal(den, approx=True) + 1e-20)
    total = jnp.sum(keep * (-log_exp), keepdims=True)             # (1, 1)
    out_ref[...] = total / jnp.float32(K)


def run_ntxent(pos_vals, neg_vals, a1, a2, K, temperature):
    P = int(pos_vals.shape[0])
    Nn = int(neg_vals.shape[0])
    # top-K positive-pair selection outside the kernel: stable descending sort
    # (earliest index wins ties, matching the previous in-kernel rank mask).
    order = jnp.argsort(-pos_vals)
    keep = jnp.zeros((P,), jnp.float32).at[order[:K]].set(1.0)
    kern = functools.partial(ntxent_noise_kernel, int(K), float(temperature))
    out = pl.pallas_call(
        kern, out_shape=jax.ShapeDtypeStruct((1, 1), jnp.float32)
    )(pos_vals.reshape(P, 1).astype(jnp.float32),
      neg_vals.reshape(1, Nn).astype(jnp.float32),
      jnp.asarray(a1, jnp.int32).reshape(P, 1),
      jnp.asarray(a2, jnp.int32).reshape(1, Nn),
      keep.reshape(P, 1))
    return out[0, 0]


# ----------------------------------------------------------------------------
# Glue: mask_tokens (random 80/10/10 corruption) and the full forward pass
# ----------------------------------------------------------------------------
def mask_tokens_jax(rng, input_ids, not_mask_pos, vocab_size, num_special,
                    mask_id, pad_id):
    k1, k2, k3, k4 = jax.random.split(rng, 4)
    shape = input_ids.shape
    special = input_ids < num_special                  # approximates special-token mask
    prob = jnp.where(special, 0.0, 0.15)
    prob = jnp.where(input_ids == pad_id, 0.0, prob)
    masked = (jax.random.uniform(k1, shape) < prob) & jnp.logical_not(
        not_mask_pos.astype(bool))
    labels = jnp.where(masked, input_ids, -100)
    replaced = (jax.random.uniform(k2, shape) < 0.8) & masked
    out = jnp.where(replaced, mask_id, input_ids)
    rand_sel = (jax.random.uniform(k3, shape) < 0.5) & masked & jnp.logical_not(replaced)
    random_words = jax.random.randint(k4, shape, 0, vocab_size, dtype=input_ids.dtype)
    out = jnp.where(rand_sel, random_words, out)
    return out, labels


def cp_noise_forward(params, cfg, input_ids, attn_mask, rel_label, h_pos, t_pos, rng):
    S = cfg["max_length"]
    inp = input_ids.reshape(-1, S)
    msk = attn_mask.reshape(-1, S).astype(jnp.float32)
    lab = rel_label.reshape(-1)
    hp = h_pos.reshape(-1)
    tp = t_pos.reshape(-1)
    N = inp.shape[0]

    pos_iota = jnp.arange(S)[None, :]
    not_mask_pos = ((pos_iota == hp[:, None]) | (pos_iota == tp[:, None])).astype(jnp.int32)

    m_input, m_labels = mask_tokens_jax(rng, inp, not_mask_pos, cfg["vocab"],
                                        cfg["num_special"], cfg["mask_id"], cfg["pad_id"])

    # embeddings (gather is glue)
    x_emb = params["word_emb"][m_input] + params["pos_emb"][None, :, :]

    hidden = run_encoder(params, x_emb.astype(jnp.float32), msk.reshape(N, 1, S))
    m_loss = run_mlm(params["lm_dec"], params["lm_bias"], hidden,
                     m_labels[..., None].astype(jnp.int32))

    idx = jnp.arange(N)
    h_state = hidden[idx, hp]
    t_state = hidden[idx, tp]
    state = jnp.concatenate([h_state, t_state], axis=1)        # (N, 2D) lane-dense

    mat = run_sim(state)

    # pair-index construction (data-dependent sizes -> numpy glue, row-major
    # order matching torch.where)
    lab_np = np.asarray(lab)
    eq = lab_np[:, None] == lab_np[None, :]
    pos_mask = eq & ~np.eye(N, dtype=bool)
    neg_mask = ~eq
    a1, p_idx = np.nonzero(pos_mask)
    a2, n_idx = np.nonzero(neg_mask)
    K = int(a1.shape[0] * 0.7)

    if a1.shape[0] == 0 or a2.shape[0] == 0 or K == 0:
        r_loss = jnp.float32(0.0)
    else:
        pos_vals = mat[a1, p_idx]
        neg_vals = mat[a2, n_idx]
        r_loss = run_ntxent(pos_vals, neg_vals, a1, a2, K, cfg["temperature"])
    return m_loss, r_loss


def init_params(key, V, S, D, F):
    ks = jax.random.split(key, 8)
    g = lambda k, shape: (0.02 * jax.random.normal(k, shape)).astype(jnp.float32)
    p = dict(
        word_emb=g(ks[0], (V, D)),
        pos_emb=g(ks[1], (S, D)),
        wq=g(ks[2], (D, D)), wk=g(ks[3], (D, D)),
        wv=g(ks[4], (D, D)), wo=g(ks[5], (D, D)),
        ln1_g=jnp.ones((1, D), jnp.float32), ln1_b=jnp.zeros((1, D), jnp.float32),
        w1=g(ks[6], (D, F)), c1=jnp.zeros((1, F), jnp.float32),
        w2=g(ks[7], (F, D)), c2=jnp.zeros((1, D), jnp.float32),
        ln2_g=jnp.ones((1, D), jnp.float32), ln2_b=jnp.zeros((1, D), jnp.float32),
        lm_bias=jnp.zeros((1, V), jnp.float32),
    )
    p["lm_dec"] = p["word_emb"].T          # tied LM decoder, (D, V)
    return p


if __name__ == "__main__":
    # lane-dense hidden size (D multiple of 128); TB*S = 8*16 = 128 matmul rows
    V, S, D, F = 256, 16, 128, 256
    NUM_SPECIAL = 5
    PAD, CLS, SEP, MASK = 0, 1, 2, 3
    cfg = dict(max_length=S, vocab=V, num_special=NUM_SPECIAL,
               mask_id=MASK, pad_id=PAD, temperature=0.05)

    key = jax.random.PRNGKey(0)
    kp, kin, kh, kt, kmask = jax.random.split(key, 5)
    params = init_params(kp, V, S, D, F)

    bags, per_bag = 4, 4           # 16 sentences, 4 per relation label
    content_len = 10
    pos = jnp.arange(S)
    ids = jax.random.randint(kin, (bags, per_bag, S), NUM_SPECIAL, V, dtype=jnp.int32)
    ids = jnp.where(pos[None, None, :] == 0, CLS, ids)
    ids = jnp.where(pos[None, None, :] == content_len + 1, SEP, ids)
    ids = jnp.where(pos[None, None, :] > content_len + 1, PAD, ids)
    attn_mask = (ids != PAD).astype(jnp.int32)
    rel_label = jnp.tile(jnp.arange(bags, dtype=jnp.int32)[:, None], (1, per_bag))
    h_pos = jax.random.randint(kh, (bags, per_bag), 1, content_len + 1, dtype=jnp.int32)
    t_pos = jax.random.randint(kt, (bags, per_bag), 1, content_len + 1, dtype=jnp.int32)

    m_loss, r_loss = cp_noise_forward(params, cfg, ids, attn_mask, rel_label,
                                      h_pos, t_pos, kmask)
    (m_loss, r_loss) = jax.block_until_ready((m_loss, r_loss))
    assert bool(jnp.isfinite(m_loss)) and bool(jnp.isfinite(r_loss))
    print("KERNEL_OK")
</pallas_src>

<mosaic_0001>
module attributes {stable_mosaic.version = 11 : i64} {
  func.func @encoder_kernel(%arg0: i32, %arg1: memref<8x16x128xf32, #tpu.memory_space<vmem>>, %arg2: memref<8x1x16xf32, #tpu.memory_space<vmem>>, %arg3: memref<128x128xbf16, #tpu.memory_space<vmem>>, %arg4: memref<128x128xbf16, #tpu.memory_space<vmem>>, %arg5: memref<128x128xbf16, #tpu.memory_space<vmem>>, %arg6: memref<128x128xbf16, #tpu.memory_space<vmem>>, %arg7: memref<1x128xf32, #tpu.memory_space<vmem>>, %arg8: memref<1x128xf32, #tpu.memory_space<vmem>>, %arg9: memref<128x256xbf16, #tpu.memory_space<vmem>>, %arg10: memref<1x256xf32, #tpu.memory_space<vmem>>, %arg11: memref<256x128xbf16, #tpu.memory_space<vmem>>, %arg12: memref<1x128xf32, #tpu.memory_space<vmem>>, %arg13: memref<1x128xf32, #tpu.memory_space<vmem>>, %arg14: memref<1x128xf32, #tpu.memory_space<vmem>>, %arg15: memref<8x16x128xf32, #tpu.memory_space<vmem>>) attributes {dimension_semantics = [#tpu.dimension_semantics<parallel>], iteration_bounds = array<i64: 2>, scalar_prefetch = 0 : i64, scratch_operands = 0 : i64, tpu.core_type = #tpu.core_type<tc>, window_params = [{transform_indices = @transform_0, window_bounds = array<i64: 8, 16, 128>}, {transform_indices = @transform_1, window_bounds = array<i64: 8, 1, 16>}, {pipeline_mode = #tpu.pipeline_mode<synchronous>, transform_indices = @transform_2, window_bounds = array<i64: 128, 128>}, {pipeline_mode = #tpu.pipeline_mode<synchronous>, transform_indices = @transform_3, window_bounds = array<i64: 128, 128>}, {pipeline_mode = #tpu.pipeline_mode<synchronous>, transform_indices = @transform_4, window_bounds = array<i64: 128, 128>}, {pipeline_mode = #tpu.pipeline_mode<synchronous>, transform_indices = @transform_5, window_bounds = array<i64: 128, 128>}, {pipeline_mode = #tpu.pipeline_mode<synchronous>, transform_indices = @transform_6, window_bounds = array<i64: 1, 128>}, {pipeline_mode = #tpu.pipeline_mode<synchronous>, transform_indices = @transform_7, window_bounds = array<i64: 1, 128>}, {pipeline_mode = #tpu.pipeline_mode<synchronous>, transform_indices = @transform_8, window_bounds = array<i64: 128, 256>}, {pipeline_mode = #tpu.pipeline_mode<synchronous>, transform_indices = @transform_9, window_bounds = array<i64: 1, 256>}, {pipeline_mode = #tpu.pipeline_mode<synchronous>, transform_indices = @transform_10, window_bounds = array<i64: 256, 128>}, {pipeline_mode = #tpu.pipeline_mode<synchronous>, transform_indices = @transform_11, window_bounds = array<i64: 1, 128>}, {pipeline_mode = #tpu.pipeline_mode<synchronous>, transform_indices = @transform_12, window_bounds = array<i64: 1, 128>}, {pipeline_mode = #tpu.pipeline_mode<synchronous>, transform_indices = @transform_13, window_bounds = array<i64: 1, 128>}, {transform_indices = @transform_14, window_bounds = array<i64: 8, 16, 128>}]} {
    %c0 = arith.constant 0 : index
    %c0_0 = arith.constant 0 : index
    %c0_1 = arith.constant 0 : index
    %0 = vector.load %arg1[%c0, %c0_0, %c0_1] : memref<8x16x128xf32, #tpu.memory_space<vmem>>, vector<8x16x128xf32>
    %1 = vector.shape_cast %0 : vector<8x16x128xf32> to vector<128x128xf32>
    %c0_2 = arith.constant 0 : index
    %c0_3 = arith.constant 0 : index
    %c0_4 = arith.constant 0 : index
    %2 = vector.load %arg2[%c0_2, %c0_3, %c0_4] : memref<8x1x16xf32, #tpu.memory_space<vmem>>, vector<8x1x16xf32>
    %3 = arith.truncf %1 : vector<128x128xf32> to vector<128x128xbf16>
    %c0_5 = arith.constant 0 : index
    %c0_6 = arith.constant 0 : index
    %4 = vector.load %arg3[%c0_5, %c0_6] : memref<128x128xbf16, #tpu.memory_space<vmem>>, vector<128x128xbf16>
    %cst = arith.constant dense<0.000000e+00> : vector<128x128xf32>
    %5 = tpu.matmul %3, %4, %cst {dimension_numbers = #tpu.dot_dimension_numbers<[1], [0], [0], [1], [0, 0, 1, 1], [], []>} : vector<128x128xbf16>, vector<128x128xbf16>, vector<128x128xf32> -> vector<128x128xf32>
    %c0_7 = arith.constant 0 : index
    %c0_8 = arith.constant 0 : index
    %6 = vector.load %arg4[%c0_7, %c0_8] : memref<128x128xbf16, #tpu.memory_space<vmem>>, vector<128x128xbf16>
    %cst_9 = arith.constant dense<0.000000e+00> : vector<128x128xf32>
    %7 = tpu.matmul %3, %6, %cst_9 {dimension_numbers = #tpu.dot_dimension_numbers<[1], [0], [0], [1], [0, 0, 1, 1], [], []>} : vector<128x128xbf16>, vector<128x128xbf16>, vector<128x128xf32> -> vector<128x128xf32>
    %c0_10 = arith.constant 0 : index
    %c0_11 = arith.constant 0 : index
    %8 = vector.load %arg5[%c0_10, %c0_11] : memref<128x128xbf16, #tpu.memory_space<vmem>>, vector<128x128xbf16>
    %cst_12 = arith.constant dense<0.000000e+00> : vector<128x128xf32>
    %9 = tpu.matmul %3, %8, %cst_12 {dimension_numbers = #tpu.dot_dimension_numbers<[1], [0], [0], [1], [0, 0, 1, 1], [], []>} : vector<128x128xbf16>, vector<128x128xbf16>, vector<128x128xf32> -> vector<128x128xf32>
    %10 = vector.shape_cast %5 : vector<128x128xf32> to vector<8x16x128xf32>
    %11 = arith.truncf %10 : vector<8x16x128xf32> to vector<8x16x128xbf16>
    %12 = vector.shape_cast %7 : vector<128x128xf32> to vector<8x16x128xf32>
    %13 = arith.truncf %12 : vector<8x16x128xf32> to vector<8x16x128xbf16>
    %14 = vector.shape_cast %9 : vector<128x128xf32> to vector<8x16x128xf32>
    %15 = arith.truncf %14 : vector<8x16x128xf32> to vector<8x16x128xbf16>
    "tpu.trace_start"() <{level = 10 : i32, message = "bqd,bkd->bqk"}> : () -> ()
    %cst_13 = arith.constant dense<0.000000e+00> : vector<8x16x16xf32>
    %16 = tpu.matmul %11, %13, %cst_13 {dimension_numbers = #tpu.dot_dimension_numbers<[2], [2], [1], [1], [0, 0, 0, 1, 1, 1], [0], [0]>} : vector<8x16x128xbf16>, vector<8x16x128xbf16>, vector<8x16x16xf32> -> vector<8x16x16xf32>
    %cst_14 = arith.constant 1.280000e+02 : f32
    "tpu.trace_stop"() : () -> ()
    %17 = math.sqrt %cst_14 : f32
    %cst_15 = arith.constant 1.000000e+00 : f32
    %18 = arith.divf %cst_15, %17 : f32
    %19 = vector.broadcast %18 : f32 to vector<8x16x16xf32>
    %20 = arith.mulf %16, %19 : vector<8x16x16xf32>
    %cst_16 = arith.constant 1.000000e+00 : f32
    %21 = vector.broadcast %cst_16 : f32 to vector<8x1x16xf32>
    %22 = arith.subf %2, %21 : vector<8x1x16xf32>
    %cst_17 = arith.constant 1.000000e+09 : f32
    %23 = vector.broadcast %cst_17 : f32 to vector<8x1x16xf32>
    %24 = arith.mulf %22, %23 : vector<8x1x16xf32>
    %25 = vector.broadcast %24 : vector<8x1x16xf32> to vector<8x16x16xf32>
    %26 = arith.addf %20, %25 : vector<8x16x16xf32>
    %cst_18 = arith.constant dense<0xFF800000> : vector<8x16xf32>
    %27 = vector.multi_reduction <maximumf>, %26, %cst_18 [2] : vector<8x16x16xf32> to vector<8x16xf32>
    %28 = vector.shape_cast %27 : vector<8x16xf32> to vector<8x16x1xf32>
    %29 = vector.broadcast %28 : vector<8x16x1xf32> to vector<8x16x16xf32>
    %30 = arith.subf %26, %29 : vector<8x16x16xf32>
    %31 = math.exp %30 : vector<8x16x16xf32>
    %cst_19 = arith.constant dense<0.000000e+00> : vector<8x16xf32>
    %32 = vector.multi_reduction <add>, %31, %cst_19 [2] : vector<8x16x16xf32> to vector<8x16xf32>
    %33 = vector.shape_cast %32 : vector<8x16xf32> to vector<8x16x1xf32>
    %34 = tpu.reciprocal %33 {approx = true} : vector<8x16x1xf32> -> vector<8x16x1xf32>
    %35 = vector.broadcast %34 : vector<8x16x1xf32> to vector<8x16x16xf32>
    %36 = arith.mulf %31, %35 : vector<8x16x16xf32>
    %37 = arith.truncf %36 : vector<8x16x16xf32> to vector<8x16x16xbf16>
    "tpu.trace_start"() <{level = 10 : i32, message = "bqk,bkd->bqd"}> : () -> ()
    %cst_20 = arith.constant dense<0.000000e+00> : vector<8x16x128xf32>
    %38 = tpu.matmul %37, %15, %cst_20 {dimension_numbers = #tpu.dot_dimension_numbers<[2], [1], [1], [2], [0, 0, 0, 1, 1, 2], [0], [0]>} : vector<8x16x16xbf16>, vector<8x16x128xbf16>, vector<8x16x128xf32> -> vector<8x16x128xf32>
    "tpu.trace_stop"() : () -> ()
    %39 = vector.shape_cast %38 : vector<8x16x128xf32> to vector<128x128xf32>
    %40 = arith.truncf %39 : vector<128x128xf32> to vector<128x128xbf16>
    %c0_21 = arith.constant 0 : index
    %c0_22 = arith.constant 0 : index
    %41 = vector.load %arg6[%c0_21, %c0_22] : memref<128x128xbf16, #tpu.memory_space<vmem>>, vector<128x128xbf16>
    %cst_23 = arith.constant dense<0.000000e+00> : vector<128x128xf32>
    %42 = tpu.matmul %40, %41, %cst_23 {dimension_numbers = #tpu.dot_dimension_numbers<[1], [0], [0], [1], [0, 0, 1, 1], [], []>} : vector<128x128xbf16>, vector<128x128xbf16>, vector<128x128xf32> -> vector<128x128xf32>
    %43 = arith.addf %1, %42 : vector<128x128xf32>
    %c0_24 = arith.constant 0 : index
    %c0_25 = arith.constant 0 : index
    %44 = vector.load %arg7[%c0_24, %c0_25] : memref<1x128xf32, #tpu.memory_space<vmem>>, vector<1x128xf32>
    %c0_26 = arith.constant 0 : index
    %c0_27 = arith.constant 0 : index
    %45 = vector.load %arg8[%c0_26, %c0_27] : memref<1x128xf32, #tpu.memory_space<vmem>>, vector<1x128xf32>
    %cst_28 = arith.constant dense<0.000000e+00> : vector<128xf32>
    %46 = vector.multi_reduction <add>, %43, %cst_28 [1] : vector<128x128xf32> to vector<128xf32>
    %47 = vector.shape_cast %46 : vector<128xf32> to vector<128x1xf32>
    %cst_29 = arith.constant 1.280000e+02 : f32
    %48 = vector.broadcast %cst_29 : f32 to vector<128x1xf32>
    %49 = arith.divf %47, %48 : vector<128x1xf32>
    %50 = vector.broadcast %49 : vector<128x1xf32> to vector<128x128xf32>
    %51 = arith.subf %43, %50 : vector<128x128xf32>
    %52 = vector.broadcast %49 : vector<128x1xf32> to vector<128x128xf32>
    %53 = arith.subf %43, %52 : vector<128x128xf32>
    %54 = arith.mulf %51, %53 : vector<128x128xf32>
    %cst_30 = arith.constant dense<0.000000e+00> : vector<128xf32>
    %55 = vector.multi_reduction <add>, %54, %cst_30 [1] : vector<128x128xf32> to vector<128xf32>
    %56 = vector.shape_cast %55 : vector<128xf32> to vector<128x1xf32>
    %cst_31 = arith.constant 1.280000e+02 : f32
    %57 = vector.broadcast %cst_31 : f32 to vector<128x1xf32>
    %58 = arith.divf %56, %57 : vector<128x1xf32>
    %59 = vector.broadcast %49 : vector<128x1xf32> to vector<128x128xf32>
    %60 = arith.subf %43, %59 : vector<128x128xf32>
    %cst_32 = arith.constant 9.99999996E-13 : f32
    %61 = vector.broadcast %cst_32 : f32 to vector<128x1xf32>
    %62 = arith.addf %58, %61 : vector<128x1xf32>
    %63 = math.rsqrt %62 : vector<128x1xf32>
    %64 = vector.broadcast %63 : vector<128x1xf32> to vector<128x128xf32>
    %65 = arith.mulf %60, %64 : vector<128x128xf32>
    %66 = vector.broadcast %44 : vector<1x128xf32> to vector<128x128xf32>
    %67 = arith.mulf %65, %66 : vector<128x128xf32>
    %68 = vector.broadcast %45 : vector<1x128xf32> to vector<128x128xf32>
    %69 = arith.addf %67, %68 : vector<128x128xf32>
    %70 = arith.truncf %69 : vector<128x128xf32> to vector<128x128xbf16>
    %c0_33 = arith.constant 0 : index
    %c0_34 = arith.constant 0 : index
    %71 = vector.load %arg9[%c0_33, %c0_34] : memref<128x256xbf16, #tpu.memory_space<vmem>>, vector<128x256xbf16>
    %cst_35 = arith.constant dense<0.000000e+00> : vector<128x256xf32>
    %72 = tpu.matmul %70, %71, %cst_35 {dimension_numbers = #tpu.dot_dimension_numbers<[1], [0], [0], [1], [0, 0, 1, 1], [], []>} : vector<128x128xbf16>, vector<128x256xbf16>, vector<128x256xf32> -> vector<128x256xf32>
    %c0_36 = arith.constant 0 : index
    %c0_37 = arith.constant 0 : index
    %73 = vector.load %arg10[%c0_36, %c0_37] : memref<1x256xf32, #tpu.memory_space<vmem>>, vector<1x256xf32>
    %74 = vector.broadcast %73 : vector<1x256xf32> to vector<128x256xf32>
    %75 = arith.addf %72, %74 : vector<128x256xf32>
    %cst_38 = arith.constant 5.000000e-01 : f32
    %76 = vector.broadcast %cst_38 : f32 to vector<128x256xf32>
    %77 = arith.mulf %76, %75 : vector<128x256xf32>
    %cst_39 = arith.constant 4.471500e-02 : f32
    %78 = vector.broadcast %cst_39 : f32 to vector<128x256xf32>
    %79 = arith.mulf %78, %75 : vector<128x256xf32>
    %80 = arith.mulf %79, %75 : vector<128x256xf32>
    %81 = arith.mulf %80, %75 : vector<128x256xf32>
    %82 = arith.addf %75, %81 : vector<128x256xf32>
    %cst_40 = arith.constant 0.797884583 : f32
    %83 = vector.broadcast %cst_40 : f32 to vector<128x256xf32>
    %84 = arith.mulf %83, %82 : vector<128x256xf32>
    %85 = math.tanh %84 : vector<128x256xf32>
    %cst_41 = arith.constant 1.000000e+00 : f32
    %86 = vector.broadcast %cst_41 : f32 to vector<128x256xf32>
    %87 = arith.addf %86, %85 : vector<128x256xf32>
    %88 = arith.mulf %77, %87 : vector<128x256xf32>
    %89 = arith.truncf %88 : vector<128x256xf32> to vector<128x256xbf16>
    %c0_42 = arith.constant 0 : index
    %c0_43 = arith.constant 0 : index
    %90 = vector.load %arg11[%c0_42, %c0_43] : memref<256x128xbf16, #tpu.memory_space<vmem>>, vector<256x128xbf16>
    %cst_44 = arith.constant dense<0.000000e+00> : vector<128x128xf32>
    %91 = tpu.matmul %89, %90, %cst_44 {dimension_numbers = #tpu.dot_dimension_numbers<[1], [0], [0], [1], [0, 0, 1, 1], [], []>} : vector<128x256xbf16>, vector<256x128xbf16>, vector<128x128xf32> -> vector<128x128xf32>
    %c0_45 = arith.constant 0 : index
    %c0_46 = arith.constant 0 : index
    %92 = vector.load %arg12[%c0_45, %c0_46] : memref<1x128xf32, #tpu.memory_space<vmem>>, vector<1x128xf32>
    %93 = vector.broadcast %92 : vector<1x128xf32> to vector<128x128xf32>
    %94 = arith.addf %91, %93 : vector<128x128xf32>
    %95 = arith.addf %69, %94 : vector<128x128xf32>
    %c0_47 = arith.constant 0 : index
    %c0_48 = arith.constant 0 : index
    %96 = vector.load %arg13[%c0_47, %c0_48] : memref<1x128xf32, #tpu.memory_space<vmem>>, vector<1x128xf32>
    %c0_49 = arith.constant 0 : index
    %c0_50 = arith.constant 0 : index
    %97 = vector.load %arg14[%c0_49, %c0_50] : memref<1x128xf32, #tpu.memory_space<vmem>>, vector<1x128xf32>
    %cst_51 = arith.constant dense<0.000000e+00> : vector<128xf32>
    %98 = vector.multi_reduction <add>, %95, %cst_51 [1] : vector<128x128xf32> to vector<128xf32>
    %99 = vector.shape_cast %98 : vector<128xf32> to vector<128x1xf32>
    %cst_52 = arith.constant 1.280000e+02 : f32
    %100 = vector.broadcast %cst_52 : f32 to vector<128x1xf32>
    %101 = arith.divf %99, %100 : vector<128x1xf32>
    %102 = vector.broadcast %101 : vector<128x1xf32> to vector<128x128xf32>
    %103 = arith.subf %95, %102 : vector<128x128xf32>
    %104 = vector.broadcast %101 : vector<128x1xf32> to vector<128x128xf32>
    %105 = arith.subf %95, %104 : vector<128x128xf32>
    %106 = arith.mulf %103, %105 : vector<128x128xf32>
    %cst_53 = arith.constant dense<0.000000e+00> : vector<128xf32>
    %107 = vector.multi_reduction <add>, %106, %cst_53 [1] : vector<128x128xf32> to vector<128xf32>
    %108 = vector.shape_cast %107 : vector<128xf32> to vector<128x1xf32>
    %cst_54 = arith.constant 1.280000e+02 : f32
    %109 = vector.broadcast %cst_54 : f32 to vector<128x1xf32>
    %110 = arith.divf %108, %109 : vector<128x1xf32>
    %111 = vector.broadcast %101 : vector<128x1xf32> to vector<128x128xf32>
    %112 = arith.subf %95, %111 : vector<128x128xf32>
    %cst_55 = arith.constant 9.99999996E-13 : f32
    %113 = vector.broadcast %cst_55 : f32 to vector<128x1xf32>
    %114 = arith.addf %110, %113 : vector<128x1xf32>
    %115 = math.rsqrt %114 : vector<128x1xf32>
    %116 = vector.broadcast %115 : vector<128x1xf32> to vector<128x128xf32>
    %117 = arith.mulf %112, %116 : vector<128x128xf32>
    %118 = vector.broadcast %96 : vector<1x128xf32> to vector<128x128xf32>
    %119 = arith.mulf %117, %118 : vector<128x128xf32>
    %120 = vector.broadcast %97 : vector<1x128xf32> to vector<128x128xf32>
    %121 = arith.addf %119, %120 : vector<128x128xf32>
    %122 = vector.shape_cast %121 : vector<128x128xf32> to vector<8x16x128xf32>
    %c0_56 = arith.constant 0 : index
    %c0_57 = arith.constant 0 : index
    %c0_58 = arith.constant 0 : index
    %123 = vector.load %arg15[%c0_56, %c0_57, %c0_58] : memref<8x16x128xf32, #tpu.memory_space<vmem>>, vector<8x16x128xf32>
    tpu.vector_store %arg15[%c0_56, %c0_57, %c0_58], %122 {strides = array<i32>} : memref<8x16x128xf32, #tpu.memory_space<vmem>>, vector<8x16x128xf32>,
    return
  }
  func.func @transform_0(%arg0: i32) -> (i32, i32, i32) {
    %c0_i32 = arith.constant 0 : i32
    %c0_i32_0 = arith.constant 0 : i32
    %c0_i32_1 = arith.constant 0 : i32
    return %arg0, %c0_i32, %c0_i32_0 : i32, i32, i32
  }
  func.func @transform_1(%arg0: i32) -> (i32, i32, i32) {
    %c0_i32 = arith.constant 0 : i32
    %c0_i32_0 = arith.constant 0 : i32
    %c0_i32_1 = arith.constant 0 : i32
    return %arg0, %c0_i32, %c0_i32_0 : i32, i32, i32
  }
  func.func @transform_2(%arg0: i32) -> (i32, i32) {
    %c0_i32 = arith.constant 0 : i32
    %c0_i32_0 = arith.constant 0 : i32
    %c0_i32_1 = arith.constant 0 : i32
    return %c0_i32, %c0_i32_0 : i32, i32
  }
  func.func @transform_3(%arg0: i32) -> (i32, i32) {
    %c0_i32 = arith.constant 0 : i32
    %c0_i32_0 = arith.constant 0 : i32
    %c0_i32_1 = arith.constant 0 : i32
    return %c0_i32, %c0_i32_0 : i32, i32
  }
  func.func @transform_4(%arg0: i32) -> (i32, i32) {
    %c0_i32 = arith.constant 0 : i32
    %c0_i32_0 = arith.constant 0 : i32
    %c0_i32_1 = arith.constant 0 : i32
    return %c0_i32, %c0_i32_0 : i32, i32
  }
  func.func @transform_5(%arg0: i32) -> (i32, i32) {
    %c0_i32 = arith.constant 0 : i32
    %c0_i32_0 = arith.constant 0 : i32
    %c0_i32_1 = arith.constant 0 : i32
    return %c0_i32, %c0_i32_0 : i32, i32
  }
  func.func @transform_6(%arg0: i32) -> (i32, i32) {
    %c0_i32 = arith.constant 0 : i32
    %c0_i32_0 = arith.constant 0 : i32
    %c0_i32_1 = arith.constant 0 : i32
    return %c0_i32, %c0_i32_0 : i32, i32
  }
  func.func @transform_7(%arg0: i32) -> (i32, i32) {
    %c0_i32 = arith.constant 0 : i32
    %c0_i32_0 = arith.constant 0 : i32
    %c0_i32_1 = arith.constant 0 : i32
    return %c0_i32, %c0_i32_0 : i32, i32
  }
  func.func @transform_8(%arg0: i32) -> (i32, i32) {
    %c0_i32 = arith.constant 0 : i32
    %c0_i32_0 = arith.constant 0 : i32
    %c0_i32_1 = arith.constant 0 : i32
    return %c0_i32, %c0_i32_0 : i32, i32
  }
  func.func @transform_9(%arg0: i32) -> (i32, i32) {
    %c0_i32 = arith.constant 0 : i32
    %c0_i32_0 = arith.constant 0 : i32
    %c0_i32_1 = arith.constant 0 : i32
    return %c0_i32, %c0_i32_0 : i32, i32
  }
  func.func @transform_10(%arg0: i32) -> (i32, i32) {
    %c0_i32 = arith.constant 0 : i32
    %c0_i32_0 = arith.constant 0 : i32
    %c0_i32_1 = arith.constant 0 : i32
    return %c0_i32, %c0_i32_0 : i32, i32
  }
  func.func @transform_11(%arg0: i32) -> (i32, i32) {
    %c0_i32 = arith.constant 0 : i32
    %c0_i32_0 = arith.constant 0 : i32
    %c0_i32_1 = arith.constant 0 : i32
    return %c0_i32, %c0_i32_0 : i32, i32
  }
  func.func @transform_12(%arg0: i32) -> (i32, i32) {
    %c0_i32 = arith.constant 0 : i32
    %c0_i32_0 = arith.constant 0 : i32
    %c0_i32_1 = arith.constant 0 : i32
    return %c0_i32, %c0_i32_0 : i32, i32
  }
  func.func @transform_13(%arg0: i32) -> (i32, i32) {
    %c0_i32 = arith.constant 0 : i32
    %c0_i32_0 = arith.constant 0 : i32
    %c0_i32_1 = arith.constant 0 : i32
    return %c0_i32, %c0_i32_0 : i32, i32
  }
  func.func @transform_14(%arg0: i32) -> (i32, i32, i32) {
    %c0_i32 = arith.constant 0 : i32
    %c0_i32_0 = arith.constant 0 : i32
    %c0_i32_1 = arith.constant 0 : i32
    return %arg0, %c0_i32, %c0_i32_0 : i32, i32, i32
  }
}

</mosaic_0001>

<llo_original>
// kernel: tpu_custom_call.1
$region0: #{tpu_custom_call.1}
  #allocation0 [shape = 'u32[]', space=smem, size = 0x4, offset = 0x4, fixed_abs, tag = 'smem constant byte address 0x4 - core index']
  #allocation1 [shape = 'u32[144,128]{1,0:T(1,128)}', space=vmem, size = 0x12000, scoped, tag = 'internal scratch']
  %s0 = inlined_call_operand.hbm [shape: f32[16,16,128], index: 0, kind: input, shape index: {}]
  %s1 = inlined_call_operand.hbm [shape: f32[16,1,16], index: 1, kind: input, shape index: {}]
  %s2 = inlined_call_operand.hbm [shape: bf16[128,128], index: 2, kind: input, shape index: {}]
  %s3 = inlined_call_operand.hbm [shape: bf16[128,128], index: 3, kind: input, shape index: {}]
  %s4 = inlined_call_operand.hbm [shape: bf16[128,128], index: 4, kind: input, shape index: {}]
  %s5 = inlined_call_operand.hbm [shape: bf16[128,128], index: 5, kind: input, shape index: {}]
  %s6 = inlined_call_operand.vmem [shape: f32[1,128], index: 6, kind: input, shape index: {}]
  %s7 = inlined_call_operand.vmem [shape: f32[1,128], index: 7, kind: input, shape index: {}]
  %s8 = inlined_call_operand.hbm [shape: bf16[128,256], index: 8, kind: input, shape index: {}]
  %s9 = inlined_call_operand.vmem [shape: f32[1,256], index: 9, kind: input, shape index: {}]
  %s10 = inlined_call_operand.hbm [shape: bf16[256,128], index: 10, kind: input, shape index: {}]
  %s11 = inlined_call_operand.vmem [shape: f32[1,128], index: 11, kind: input, shape index: {}]
  %s12 = inlined_call_operand.vmem [shape: f32[1,128], index: 12, kind: input, shape index: {}]
  %s13 = inlined_call_operand.vmem [shape: f32[1,128], index: 13, kind: input, shape index: {}]
  %s14 = inlined_call_operand.hbm [shape: f32[16,16,128], index: 14, kind: output, shape index: {}]
  %s15 = sld [smem:[#allocation0]]
  $region121: #{tpu_custom_call.1} parent=0
    _
  %s17 = ssub.s32 1, %s15
  %s18 = scalar_select 0, %s17, %s15
  $region1: #{tpu_custom_call.1} parent=0
    #allocation2 [shape = 'u8[131072]{0}', space=vmem, size = 0x20000, scoped, tag = 'input window, operand 0']
    #allocation3 [shape = 's32[2]{0}', space=sflag, size = 0x8, scoped, tag = 'scoped memory for tpu_custom_call.1']
    #allocation4 [shape = 's32[2]{0}', space=sflag, size = 0x8, scoped, tag = 'scoped memory for tpu_custom_call.1']
    #allocation5 [shape = 'u8[8192]{0}', space=vmem, size = 0x2000, scoped, tag = 'input window, operand 1']
    #allocation6 [shape = 's32[2]{0}', space=sflag, size = 0x8, scoped, tag = 'scoped memory for tpu_custom_call.1']
    #allocation7 [shape = 'u8[32768]{0}', space=vmem, size = 0x8000, scoped, tag = 'input window, operand 2, single buffered']
    #allocation8 [shape = 'u8[32768]{0}', space=vmem, size = 0x8000, scoped, tag = 'input window, operand 3, single buffered']
    #allocation9 [shape = 's32[1]{0}', space=sflag, size = 0x4, scoped, tag = 'scoped memory for tpu_custom_call.1']
    #allocation10 [shape = 'u8[32768]{0}', space=vmem, size = 0x8000, scoped, tag = 'input window, operand 4, single buffered']
    #allocation11 [shape = 'u8[32768]{0}', space=vmem, size = 0x8000, scoped, tag = 'input window, operand 5, single buffered']
    #allocation12 [shape = 's32[1]{0}', space=sflag, size = 0x4, scoped, tag = 'scoped memory for tpu_custom_call.1']
    #allocation13 [shape = 'u8[65536]{0}', space=vmem, size = 0x10000, scoped, tag = 'input window, operand 8, single buffered']
    #allocation14 [shape = 'u8[65536]{0}', space=vmem, size = 0x10000, scoped, tag = 'input window, operand 10, single buffered']
    #allocation15 [shape = 's32[1]{0}', space=sflag, size = 0x4, scoped, tag = 'scoped memory for tpu_custom_call.1']
    #allocation16 [shape = 'u8[131072]{0}', space=vmem, size = 0x20000, scoped, tag = 'output window, operand 0']
    %19 = vsyncpa [#allocation3], 0
    %s20 = scalar_lea.sflag [#allocation3], 1
    %21 = vsyncpa %s20, 0
    %22 = vsyncpa [#allocation6], 0
    %s23 = scalar_lea.sflag [#allocation6], 1
    %24 = vsyncpa %s23, 0
    %25 = vsyncpa [#allocation9], 0
    %26 = vsyncpa [#allocation12], 0
    %27 = vsyncpa [#allocation15], 0
    %28 = vsyncpa [#allocation4], 0
    %s29 = scalar_lea.sflag [#allocation4], 1
    %30 = vsyncpa %s29, 0
    loop: start=0, step=1, limit=4
    $region2: #{tpu_custom_call.1} parent=1 // loop_pre_header
      _
    $region3: #{tpu_custom_call.1} parent=1 // loop_header
      %s32 = sphi 0, %s36
      %p33 = scmp.ge.s32.totalorder %s32, 4
      %s42 = sphi 0, %s44
      %s45 = sphi 0, %s42
      %s46 = sphi 0, %s45
      %s62 = sphi 0, %s46
      %s68 = sphi 0, %s70
      %s71 = sphi 0, %s68
      %s72 = sphi 0, %s71
      %s88 = sphi 0, %s72
      %s92 = sphi 0, %s92
      %s94 = sphi 0, %s92
      %s95 = sphi 0, %s94
      %s109 = sphi 0, %s95
      %s113 = sphi 0, %s113
      %s115 = sphi 0, %s113
      %s116 = sphi 0, %s115
      %s130 = sphi 0, %s116
      %s134 = sphi 0, %s134
      %s136 = sphi 0, %s134
      %s137 = sphi 0, %s136
      %s151 = sphi 0, %s137
      %s155 = sphi 0, %s155
      %s157 = sphi 0, %s155
      %s158 = sphi 0, %s157
      %s172 = sphi 0, %s158
      %s176 = sphi 0, %s176
      %s178 = sphi 0, %s176
      %s179 = sphi 0, %s178
      %s193 = sphi 0, %s179
      %s197 = sphi 0, %s197
      %s199 = sphi 0, %s197
      %s200 = sphi 0, %s199
      %s214 = sphi 0, %s200
      %s218 = sphi 0, %s218
      %s220 = sphi 0, %s218
      %s221 = sphi 0, %s220
      %s235 = sphi 0, %s221
      %s239 = sphi 0, %s239
      %s241 = sphi 0, %s239
      %s242 = sphi 0, %s241
      %s256 = sphi 0, %s242
      %s260 = sphi 0, %s260
      %s262 = sphi 0, %s260
      %s263 = sphi 0, %s262
      %s277 = sphi 0, %s263
      %s281 = sphi 0, %s281
      %s283 = sphi 0, %s281
      %s284 = sphi 0, %s283
      %s298 = sphi 0, %s284
      %s302 = sphi 0, %s302
      %s304 = sphi 0, %s302
      %s305 = sphi 0, %s304
      %s319 = sphi 0, %s305
      %s323 = sphi 0, %s323
      %s325 = sphi 0, %s323
      %s326 = sphi 0, %s325
      %s340 = sphi 0, %s326
      %s346 = sphi 0, %s348
      %s349 = sphi 0, %s346
      %s350 = sphi 0, %s349
      %s366 = sphi 0, %s350
    $region4: #{tpu_custom_call.1} parent=1 // loop_header_branch
      %35 = sbr.rel (%p33) target = $region8
    $region5: #{tpu_custom_call.1} parent=1 // loop_body
      %s37 = ssub.s32 %s32, 1
      %s38 = ssub.s32 %s32, 2
      %s39 = sadd.s32 %s32, 1
      %s40 = ssub.s32 %s32, %s39
      %p41 = scmp.eq.s32.totalorder %s40, 0
      %s43 = sadd.s32 %s42, 1
      %s44 = scalar_select %p41, %s42, %s43
      %p47 = pneg %p41
      %p48 = scmp.eq.s32.totalorder %s32, 1
      %p49 = por %p47, %p48
      %p50 = scmp.ne.s32.totalorder %s42, %s45
      %p51 = scmp.eq.s32.totalorder %s32, 0
      %p52 = por %p50, %p51
      %p53 = scmp.ne.s32.totalorder %s42, %s45
      %p54 = scmp.eq.s32.totalorder %s37, 1
      %p55 = por %p53, %p54
      %p56 = scmp.ne.s32.totalorder %s45, %s46
      %p57 = scmp.eq.s32.totalorder %s37, 0
      %p58 = por %p56, %p57
      %p59 = scmp.ne.s32.totalorder %s45, %s46
      %p60 = scmp.eq.s32.totalorder %s38, 1
      %p61 = por %p59, %p60
      %p63 = scmp.ne.s32.totalorder %s46, %s62
      %p64 = scmp.eq.s32.totalorder %s38, 0
      %p65 = por %p63, %p64
      %s66 = ssub.s32 %s32, %s39
      %p67 = scmp.eq.s32.totalorder %s66, 0
      %s69 = sadd.s32 %s68, 1
      %s70 = scalar_select %p67, %s68, %s69
      %p73 = pneg %p67
      %p74 = scmp.eq.s32.totalorder %s32, 1
      %p75 = por %p73, %p74
      %p76 = scmp.ne.s32.totalorder %s68, %s71
      %p77 = scmp.eq.s32.totalorder %s32, 0
      %p78 = por %p76, %p77
      %p79 = scmp.ne.s32.totalorder %s68, %s71
      %p80 = scmp.eq.s32.totalorder %s37, 1
      %p81 = por %p79, %p80
      %p82 = scmp.ne.s32.totalorder %s71, %s72
      %p83 = scmp.eq.s32.totalorder %s37, 0
      %p84 = por %p82, %p83
      %p85 = scmp.ne.s32.totalorder %s71, %s72
      %p86 = scmp.eq.s32.totalorder %s38, 1
      %p87 = por %p85, %p86
      %p89 = scmp.ne.s32.totalorder %s72, %s88
      %p90 = scmp.eq.s32.totalorder %s38, 0
      %p91 = por %p89, %p90
      %s93 = sadd.s32 %s92, 1
      %p96 = scmp.eq.s32.totalorder %s32, 1
      %p97 = scmp.ne.s32.totalorder %s92, %s94
      %p98 = scmp.eq.s32.totalorder %s32, 0
      %p99 = por %p97, %p98
      %p100 = scmp.ne.s32.totalorder %s92, %s94
      %p101 = scmp.eq.s32.totalorder %s37, 1
      %p102 = por %p100, %p101
      %p103 = scmp.ne.s32.totalorder %s94, %s95
      %p104 = scmp.eq.s32.totalorder %s37, 0
      %p105 = por %p103, %p104
      %p106 = scmp.ne.s32.totalorder %s94, %s95
      %p107 = scmp.eq.s32.totalorder %s38, 1
      %p108 = por %p106, %p107
      %p110 = scmp.ne.s32.totalorder %s95, %s109
      %p111 = scmp.eq.s32.totalorder %s38, 0
      %p112 = por %p110, %p111
      %s114 = sadd.s32 %s113, 1
      %p117 = scmp.eq.s32.totalorder %s32, 1
      %p118 = scmp.ne.s32.totalorder %s113, %s115
      %p119 = scmp.eq.s32.totalorder %s32, 0
      %p120 = por %p118, %p119
      %p121 = scmp.ne.s32.totalorder %s113, %s115
      %p122 = scmp.eq.s32.totalorder %s37, 1
      %p123 = por %p121, %p122
      %p124 = scmp.ne.s32.totalorder %s115, %s116
      %p125 = scmp.eq.s32.totalorder %s37, 0
      %p126 = por %p124, %p125
      %p127 = scmp.ne.s32.totalorder %s115, %s116
      %p128 = scmp.eq.s32.totalorder %s38, 1
      %p129 = por %p127, %p128
      %p131 = scmp.ne.s32.totalorder %s116, %s130
      %p132 = scmp.eq.s32.totalorder %s38, 0
      %p133 = por %p131, %p132
      %s135 = sadd.s32 %s134, 1
      %p138 = scmp.eq.s32.totalorder %s32, 1
      %p139 = scmp.ne.s32.totalorder %s134, %s136
      %p140 = scmp.eq.s32.totalorder %s32, 0
      %p141 = por %p139, %p140
      %p142 = scmp.ne.s32.totalorder %s134, %s136
      %p143 = scmp.eq.s32.totalorder %s37, 1
      %p144 = por %p142, %p143
      %p145 = scmp.ne.s32.totalorder %s136, %s137
      %p146 = scmp.eq.s32.totalorder %s37, 0
      %p147 = por %p145, %p146
      %p148 = scmp.ne.s32.totalorder %s136, %s137
      %p149 = scmp.eq.s32.totalorder %s38, 1
      %p150 = por %p148, %p149
      %p152 = scmp.ne.s32.totalorder %s137, %s151
      %p153 = scmp.eq.s32.totalorder %s38, 0
      %p154 = por %p152, %p153
      %s156 = sadd.s32 %s155, 1
      %p159 = scmp.eq.s32.totalorder %s32, 1
      %p160 = scmp.ne.s32.totalorder %s155, %s157
      %p161 = scmp.eq.s32.totalorder %s32, 0
      %p162 = por %p160, %p161
      %p163 = scmp.ne.s32.totalorder %s155, %s157
      %p164 = scmp.eq.s32.totalorder %s37, 1
      %p165 = por %p163, %p164
      %p166 = scmp.ne.s32.totalorder %s157, %s158
      %p167 = scmp.eq.s32.totalorder %s37, 0
      %p168 = por %p166, %p167
      %p169 = scmp.ne.s32.totalorder %s157, %s158
      %p170 = scmp.eq.s32.totalorder %s38, 1
      %p171 = por %p169, %p170
      %p173 = scmp.ne.s32.totalorder %s158, %s172
      %p174 = scmp.eq.s32.totalorder %s38, 0
      %p175 = por %p173, %p174
      %s177 = sadd.s32 %s176, 1
      %p180 = scmp.eq.s32.totalorder %s32, 1
      %p181 = scmp.ne.s32.totalorder %s176, %s178
      %p182 = scmp.eq.s32.totalorder %s32, 0
      %p183 = por %p181, %p182
      %p184 = scmp.ne.s32.totalorder %s176, %s178
      %p185 = scmp.eq.s32.totalorder %s37, 1
      %p186 = por %p184, %p185
      %p187 = scmp.ne.s32.totalorder %s178, %s179
      %p188 = scmp.eq.s32.totalorder %s37, 0
      %p189 = por %p187, %p188
      %p190 = scmp.ne.s32.totalorder %s178, %s179
      %p191 = scmp.eq.s32.totalorder %s38, 1
      %p192 = por %p190, %p191
      %p194 = scmp.ne.s32.totalorder %s179, %s193
      %p195 = scmp.eq.s32.totalorder %s38, 0
      %p196 = por %p194, %p195
      %s198 = sadd.s32 %s197, 1
      %p201 = scmp.eq.s32.totalorder %s32, 1
      %p202 = scmp.ne.s32.totalorder %s197, %s199
      %p203 = scmp.eq.s32.totalorder %s32, 0
      %p204 = por %p202, %p203
      %p205 = scmp.ne.s32.totalorder %s197, %s199
      %p206 = scmp.eq.s32.totalorder %s37, 1
      %p207 = por %p205, %p206
      %p208 = scmp.ne.s32.totalorder %s199, %s200
      %p209 = scmp.eq.s32.totalorder %s37, 0
      %p210 = por %p208, %p209
      %p211 = scmp.ne.s32.totalorder %s199, %s200
      %p212 = scmp.eq.s32.totalorder %s38, 1
      %p213 = por %p211, %p212
      %p215 = scmp.ne.s32.totalorder %s200, %s214
      %p216 = scmp.eq.s32.totalorder %s38, 0
      %p217 = por %p215, %p216
      %s219 = sadd.s32 %s218, 1
      %p222 = scmp.eq.s32.totalorder %s32, 1
      %p223 = scmp.ne.s32.totalorder %s218, %s220
      %p224 = scmp.eq.s32.totalorder %s32, 0
      %p225 = por %p223, %p224
      %p226 = scmp.ne.s32.totalorder %s218, %s220
      %p227 = scmp.eq.s32.totalorder %s37, 1
      %p228 = por %p226, %p227
      %p229 = scmp.ne.s32.totalorder %s220, %s221
      %p230 = scmp.eq.s32.totalorder %s37, 0
      %p231 = por %p229, %p230
      %p232 = scmp.ne.s32.totalorder %s220, %s221
      %p233 = scmp.eq.s32.totalorder %s38, 1
      %p234 = por %p232, %p233
      %p236 = scmp.ne.s32.totalorder %s221, %s235
      %p237 = scmp.eq.s32.totalorder %s38, 0
      %p238 = por %p236, %p237
      %s240 = sadd.s32 %s239, 1
      %p243 = scmp.eq.s32.totalorder %s32, 1
      %p244 = scmp.ne.s32.totalorder %s239, %s241
      %p245 = scmp.eq.s32.totalorder %s32, 0
      %p246 = por %p244, %p245
      %p247 = scmp.ne.s32.totalorder %s239, %s241
      %p248 = scmp.eq.s32.totalorder %s37, 1
      %p249 = por %p247, %p248
      %p250 = scmp.ne.s32.totalorder %s241, %s242
      %p251 = scmp.eq.s32.totalorder %s37, 0
      %p252 = por %p250, %p251
      %p253 = scmp.ne.s32.totalorder %s241, %s242
      %p254 = scmp.eq.s32.totalorder %s38, 1
      %p255 = por %p253, %p254
      %p257 = scmp.ne.s32.totalorder %s242, %s256
      %p258 = scmp.eq.s32.totalorder %s38, 0
      %p259 = por %p257, %p258
      %s261 = sadd.s32 %s260, 1
      %p264 = scmp.eq.s32.totalorder %s32, 1
      %p265 = scmp.ne.s32.totalorder %s260, %s262
      %p266 = scmp.eq.s32.totalorder %s32, 0
      %p267 = por %p265, %p266
      %p268 = scmp.ne.s32.totalorder %s260, %s262
      %p269 = scmp.eq.s32.totalorder %s37, 1
      %p270 = por %p268, %p269
      %p271 = scmp.ne.s32.totalorder %s262, %s263
      %p272 = scmp.eq.s32.totalorder %s37, 0
      %p273 = por %p271, %p272
      %p274 = scmp.ne.s32.totalorder %s262, %s263
      %p275 = scmp.eq.s32.totalorder %s38, 1
      %p276 = por %p274, %p275
      %p278 = scmp.ne.s32.totalorder %s263, %s277
      %p279 = scmp.eq.s32.totalorder %s38, 0
      %p280 = por %p278, %p279
      %s282 = sadd.s32 %s281, 1
      %p285 = scmp.eq.s32.totalorder %s32, 1
      %p286 = scmp.ne.s32.totalorder %s281, %s283
      %p287 = scmp.eq.s32.totalorder %s32, 0
      %p288 = por %p286, %p287
      %p289 = scmp.ne.s32.totalorder %s281, %s283
      %p290 = scmp.eq.s32.totalorder %s37, 1
      %p291 = por %p289, %p290
      %p292 = scmp.ne.s32.totalorder %s283, %s284
      %p293 = scmp.eq.s32.totalorder %s37, 0
      %p294 = por %p292, %p293
      %p295 = scmp.ne.s32.totalorder %s283, %s284
      %p296 = scmp.eq.s32.totalorder %s38, 1
      %p297 = por %p295, %p296
      %p299 = scmp.ne.s32.totalorder %s284, %s298
      %p300 = scmp.eq.s32.totalorder %s38, 0
      %p301 = por %p299, %p300
      %s303 = sadd.s32 %s302, 1
      %p306 = scmp.eq.s32.totalorder %s32, 1
      %p307 = scmp.ne.s32.totalorder %s302, %s304
      %p308 = scmp.eq.s32.totalorder %s32, 0
      %p309 = por %p307, %p308
      %p310 = scmp.ne.s32.totalorder %s302, %s304
      %p311 = scmp.eq.s32.totalorder %s37, 1
      %p312 = por %p310, %p311
      %p313 = scmp.ne.s32.totalorder %s304, %s305
      %p314 = scmp.eq.s32.totalorder %s37, 0
      %p315 = por %p313, %p314
      %p316 = scmp.ne.s32.totalorder %s304, %s305
      %p317 = scmp.eq.s32.totalorder %s38, 1
      %p318 = por %p316, %p317
      %p320 = scmp.ne.s32.totalorder %s305, %s319
      %p321 = scmp.eq.s32.totalorder %s38, 0
      %p322 = por %p320, %p321
      %s324 = sadd.s32 %s323, 1
      %p327 = scmp.eq.s32.totalorder %s32, 1
      %p328 = scmp.ne.s32.totalorder %s323, %s325
      %p329 = scmp.eq.s32.totalorder %s32, 0
      %p330 = por %p328, %p329
      %p331 = scmp.ne.s32.totalorder %s323, %s325
      %p332 = scmp.eq.s32.totalorder %s37, 1
      %p333 = por %p331, %p332
      %p334 = scmp.ne.s32.totalorder %s325, %s326
      %p335 = scmp.eq.s32.totalorder %s37, 0
      %p336 = por %p334, %p335
      %p337 = scmp.ne.s32.totalorder %s325, %s326
      %p338 = scmp.eq.s32.totalorder %s38, 1
      %p339 = por %p337, %p338
      %p341 = scmp.ne.s32.totalorder %s326, %s340
      %p342 = scmp.eq.s32.totalorder %s38, 0
      %p343 = por %p341, %p342
      %s344 = ssub.s32 %s32, %s39
      %p345 = scmp.eq.s32.totalorder %s344, 0
      %s347 = sadd.s32 %s346, 1
      %s348 = scalar_select %p345, %s346, %s347
      %p351 = pneg %p345
      %p352 = scmp.eq.s32.totalorder %s32, 1
      %p353 = por %p351, %p352
      %p354 = scmp.ne.s32.totalorder %s346, %s349
      %p355 = scmp.eq.s32.totalorder %s32, 0
      %p356 = por %p354, %p355
      %p357 = scmp.ne.s32.totalorder %s346, %s349
      %p358 = scmp.eq.s32.totalorder %s37, 1
      %p359 = por %p357, %p358
      %p360 = scmp.ne.s32.totalorder %s349, %s350
      %p361 = scmp.eq.s32.totalorder %s37, 0
      %p362 = por %p360, %p361
      %p363 = scmp.ne.s32.totalorder %s349, %s350
      %p364 = scmp.eq.s32.totalorder %s38, 1
      %p365 = por %p363, %p364
      %p367 = scmp.ne.s32.totalorder %s350, %s366
      %p368 = scmp.eq.s32.totalorder %s38, 0
      %p369 = por %p367, %p368
      %p370 = scmp.le.s32.totalorder 1, %s32
      %p371 = scmp.lt.s32.totalorder %s32, 3
      %p372 = pnand %p370, %p371
      %p373 = pneg %p372
      // Predicated region
      $region9: #{tpu_custom_call.1} parent=5 // pred_check
        _
      $region10: #{tpu_custom_call.1} parent=5 // pred_check_branch
        %375 = sbr.rel (%p372) target = $region12
      $region11: #{tpu_custom_call.1} parent=5 // pred_region
        %s376 = ssub.s32 %s32, 1
        // Predicated region
        $region13: #{tpu_custom_call.1} parent=11 // pred_check
          %p377 = pneg %p105
        $region14: #{tpu_custom_call.1} parent=11 // pred_check_branch
          %379 = sbr.rel (%p377) target = $region16
        $region15: #{tpu_custom_call.1} parent=11 // pred_region
          %s381 = ssub.s32 1024, 1024
          %382 = vsyncadd [#allocation6], %s381
          %s383 = sshll.u32 [#allocation7], 4
          %s384 = int_to_ptr.vmem [resolvable:$true] %s383
          %389 = dma.hbm_to_vmem [thread:$0]  %s2, 1024, %s384, [#allocation6], 64, 64, 4
        $region16: #{tpu_custom_call.1} parent=11 // pred_fallthru
          _
        // Predicated region
        $region17: #{tpu_custom_call.1} parent=11 // pred_check
          %p390 = pneg %p126
        $region18: #{tpu_custom_call.1} parent=11 // pred_check_branch
          %392 = sbr.rel (%p390) target = $region20
        $region19: #{tpu_custom_call.1} parent=11 // pred_region
          %s394 = ssub.s32 1024, 1024
          %395 = vsyncadd [#allocation9], %s394
          %s396 = sshll.u32 [#allocation8], 4
          %s397 = int_to_ptr.vmem [resolvable:$true] %s396
          %402 = dma.hbm_to_vmem [thread:$0]  %s3, 1024, %s397, [#allocation9], 64, 64, 4
        $region20: #{tpu_custom_call.1} parent=11 // pred_fallthru
          _
        // Predicated region
        $region21: #{tpu_custom_call.1} parent=11 // pred_check
          %p403 = pneg %p147
        $region22: #{tpu_custom_call.1} parent=11 // pred_check_branch
          %405 = sbr.rel (%p403) target = $region24
        $region23: #{tpu_custom_call.1} parent=11 // pred_region
          %s407 = ssub.s32 1024, 1024
          %408 = vsyncadd [#allocation9], %s407
          %s409 = sshll.u32 [#allocation10], 4
          %s410 = int_to_ptr.vmem [resolvable:$true] %s409
          %415 = dma.hbm_to_vmem [thread:$0]  %s4, 1024, %s410, [#allocation9], 64, 64, 4
        $region24: #{tpu_custom_call.1} parent=11 // pred_fallthru
          _
        // Predicated region
        $region25: #{tpu_custom_call.1} parent=11 // pred_check
          %p416 = pneg %p168
        $region26: #{tpu_custom_call.1} parent=11 // pred_check_branch
          %418 = sbr.rel (%p416) target = $region28
        $region27: #{tpu_custom_call.1} parent=11 // pred_region
          %s420 = ssub.s32 1024, 1024
          %421 = vsyncadd [#allocation12], %s420
          %s422 = sshll.u32 [#allocation11], 4
          %s423 = int_to_ptr.vmem [resolvable:$true] %s422
          %428 = dma.hbm_to_vmem [thread:$0]  %s5, 1024, %s423, [#allocation12], 64, 64, 4
        $region28: #{tpu_custom_call.1} parent=11 // pred_fallthru
          _
        // Predicated region
        $region29: #{tpu_custom_call.1} parent=11 // pred_check
          %p429 = pneg %p189
        $region30: #{tpu_custom_call.1} parent=11 // pred_check_branch
          %431 = sbr.rel (%p429) target = $region32
        $region31: #{tpu_custom_call.1} parent=11 // pred_region
          _
        $region32: #{tpu_custom_call.1} parent=11 // pred_fallthru
          _
        // Predicated region
        $region33: #{tpu_custom_call.1} parent=11 // pred_check
          %p432 = pneg %p210
        $region34: #{tpu_custom_call.1} parent=11 // pred_check_branch
          %434 = sbr.rel (%p432) target = $region36
        $region35: #{tpu_custom_call.1} parent=11 // pred_region
          _
        $region36: #{tpu_custom_call.1} parent=11 // pred_fallthru
          _
        // Predicated region
        $region37: #{tpu_custom_call.1} parent=11 // pred_check
          %p435 = pneg %p231
        $region38: #{tpu_custom_call.1} parent=11 // pred_check_branch
          %437 = sbr.rel (%p435) target = $region40
        $region39: #{tpu_custom_call.1} parent=11 // pred_region
          %s439 = ssub.s32 2048, 2048
          %440 = vsyncadd [#allocation12], %s439
          %s441 = sshll.u32 [#allocation13], 4
          %s442 = int_to_ptr.vmem [resolvable:$true] %s441
          %447 = dma.hbm_to_vmem [thread:$0]  %s8, 2048, %s442, [#allocation12], 128, 128, 8
        $region40: #{tpu_custom_call.1} parent=11 // pred_fallthru
          _
        // Predicated region
        $region41: #{tpu_custom_call.1} parent=11 // pred_check
          %p448 = pneg %p252
        $region42: #{tpu_custom_call.1} parent=11 // pred_check_branch
          %450 = sbr.rel (%p448) target = $region44
        $region43: #{tpu_custom_call.1} parent=11 // pred_region
          _
        $region44: #{tpu_custom_call.1} parent=11 // pred_fallthru
          _
        // Predicated region
        $region45: #{tpu_custom_call.1} parent=11 // pred_check
          %p451 = pneg %p273
        $region46: #{tpu_custom_call.1} parent=11 // pred_check_branch
          %453 = sbr.rel (%p451) target = $region48
        $region47: #{tpu_custom_call.1} parent=11 // pred_region
          %s455 = ssub.s32 2048, 2048
          %456 = vsyncadd [#allocation15], %s455
          %s457 = sshll.u32 [#allocation14], 4
          %s458 = int_to_ptr.vmem [resolvable:$true] %s457
          %463 = dma.hbm_to_vmem [thread:$0]  %s10, 2048, %s458, [#allocation15], 64, 64, 4
        $region48: #{tpu_custom_call.1} parent=11 // pred_fallthru
          _
        // Predicated region
        $region49: #{tpu_custom_call.1} parent=11 // pred_check
          %p464 = pneg %p294
        $region50: #{tpu_custom_call.1} parent=11 // pred_check_branch
          %466 = sbr.rel (%p464) target = $region52
        $region51: #{tpu_custom_call.1} parent=11 // pred_region
          _
        $region52: #{tpu_custom_call.1} parent=11 // pred_fallthru
          _
        // Predicated region
        $region53: #{tpu_custom_call.1} parent=11 // pred_check
          %p467 = pneg %p315
        $region54: #{tpu_custom_call.1} parent=11 // pred_check_branch
          %469 = sbr.rel (%p467) target = $region56
        $region55: #{tpu_custom_call.1} parent=11 // pred_region
          _
        $region56: #{tpu_custom_call.1} parent=11 // pred_fallthru
          _
        // Predicated region
        $region57: #{tpu_custom_call.1} parent=11 // pred_check
          %p470 = pneg %p336
        $region58: #{tpu_custom_call.1} parent=11 // pred_check_branch
          %472 = sbr.rel (%p470) target = $region60
        $region59: #{tpu_custom_call.1} parent=11 // pred_region
          _
        $region60: #{tpu_custom_call.1} parent=11 // pred_fallthru
          _
      $region12: #{tpu_custom_call.1} parent=5 // pred_fallthru
        _
      %p473 = scmp.lt.s32.totalorder %s32, 2
      // Predicated region
      $region61: #{tpu_custom_call.1} parent=5 // pred_check
        %p474 = pneg %p473
      $region62: #{tpu_custom_call.1} parent=5 // pred_check_branch
        %476 = sbr.rel (%p474) target = $region64
      $region63: #{tpu_custom_call.1} parent=5 // pred_region
        // Predicated region
        $region65: #{tpu_custom_call.1} parent=63 // pred_check
          %p477 = pneg %p52
        $region66: #{tpu_custom_call.1} parent=63 // pred_check_branch
          %479 = sbr.rel (%p477) target = $region68
        $region67: #{tpu_custom_call.1} parent=63 // pred_region
          %s480 = sand.u32 %s42, 1
          %s481 = scalar_lea.sflag [#allocation3], %s480
          %s482 = sand.u32 %s42, 1
          %s483 = smul.addr %s482, 128
          %s484 = scalar_lea.vmem [#allocation2], %s483
          %s485 = smul.u32 8, %s32
          %s487 = ssub.s32 2048, 2048
          %488 = vsyncadd %s481, %s487
          %s489 = smul.addr %s485, 2
          %s490 = smul.addr %s489, 128
          %s491 = scalar_lea.hbm %s0, %s490
          %s492 = sshll.u32 %s484, 4
          %s493 = int_to_ptr.vmem [resolvable:$true] %s492
          %498 = dma.hbm_to_vmem [thread:$0]  %s491, 2048, %s493, %s481, 128, 128, 8
        $region68: #{tpu_custom_call.1} parent=63 // pred_fallthru
          _
        // Predicated region
        $region69: #{tpu_custom_call.1} parent=63 // pred_check
          %p499 = pneg %p78
        $region70: #{tpu_custom_call.1} parent=63 // pred_check_branch
          %501 = sbr.rel (%p499) target = $region72
        $region71: #{tpu_custom_call.1} parent=63 // pred_region
          %s502 = sand.u32 %s32, 1
          %s503 = scalar_lea.sflag [#allocation6], %s502
          %s504 = sand.u32 %s68, 1
          %s505 = smul.addr %s504, 8
          %s506 = scalar_lea.vmem [#allocation5], %s505
          %s507 = smul.u32 8, %s32
          %s509 = ssub.s32 128, 128
          %510 = vsyncadd %s503, %s509
          %s511 = smul.addr %s507, 16
          %s512 = scalar_lea.hbm %s1, %s511
          %s513 = sshll.u32 %s506, 4
          %s514 = int_to_ptr.vmem [resolvable:$true] %s513
          %519 = dma.hbm_to_vmem [thread:$0]  %s512, 128, %s514, %s503, 16, 16, 1
        $region72: #{tpu_custom_call.1} parent=63 // pred_fallthru
          _
      $region64: #{tpu_custom_call.1} parent=5 // pred_fallthru
        _
      %p520 = scmp.le.s32.totalorder 1, %s32
      %p521 = scmp.lt.s32.totalorder %s32, 3
      %p522 = pnand %p520, %p521
      %p523 = pneg %p522
      // Predicated region
      $region73: #{tpu_custom_call.1} parent=5 // pred_check
        _
      $region74: #{tpu_custom_call.1} parent=5 // pred_check_branch
        %525 = sbr.rel (%p522) target = $region76
      $region75: #{tpu_custom_call.1} parent=5 // pred_region
        %s526 = ssub.s32 %s32, 1
        %s527 = sand.u32 %s45, 1
        %s528 = scalar_lea.sflag [#allocation3], %s527
        %s529 = sand.u32 %s45, 1
        %s530 = smul.addr %s529, 128
        %s531 = scalar_lea.vmem [#allocation2], %s530
        // Predicated region
        $region77: #{tpu_custom_call.1} parent=75 // pred_check
          %p532 = pneg %p58
        $region78: #{tpu_custom_call.1} parent=75 // pred_check_branch
          %534 = sbr.rel (%p532) target = $region80
        $region79: #{tpu_custom_call.1} parent=75 // pred_region
          %535 = dma.done %s528, 2048
        $region80: #{tpu_custom_call.1} parent=75 // pred_fallthru
          _
        %s536 = sand.u32 %s37, 1
        %s537 = scalar_lea.sflag [#allocation6], %s536
        %s538 = sand.u32 %s71, 1
        %s539 = smul.addr %s538, 8
        %s540 = scalar_lea.vmem [#allocation5], %s539
        // Predicated region
        $region81: #{tpu_custom_call.1} parent=75 // pred_check
          %p541 = pneg %p84
        $region82: #{tpu_custom_call.1} parent=75 // pred_check_branch
          %543 = sbr.rel (%p541) target = $region84
        $region83: #{tpu_custom_call.1} parent=75 // pred_region
          %544 = dma.done %s537, 128
        $region84: #{tpu_custom_call.1} parent=75 // pred_fallthru
          _
        // Predicated region
        $region85: #{tpu_custom_call.1} parent=75 // pred_check
          %p545 = pneg %p105
        $region86: #{tpu_custom_call.1} parent=75 // pred_check_branch
          %547 = sbr.rel (%p545) target = $region88
        $region87: #{tpu_custom_call.1} parent=75 // pred_region
          %548 = dma.done [#allocation6], 1024
        $region88: #{tpu_custom_call.1} parent=75 // pred_fallthru
          _
        // Predicated region
        $region89: #{tpu_custom_call.1} parent=75 // pred_check
          %p549 = pneg %p126
        $region90: #{tpu_custom_call.1} parent=75 // pred_check_branch
          %551 = sbr.rel (%p549) target = $region92
        $region91: #{tpu_custom_call.1} parent=75 // pred_region
          %552 = dma.done [#allocation9], 1024
        $region92: #{tpu_custom_call.1} parent=75 // pred_fallthru
          _
        // Predicated region
        $region93: #{tpu_custom_call.1} parent=75 // pred_check
          %p553 = pneg %p147
        $region94: #{tpu_custom_call.1} parent=75 // pred_check_branch
          %555 = sbr.rel (%p553) target = $region96
        $region95: #{tpu_custom_call.1} parent=75 // pred_region
          %556 = dma.done [#allocation9], 1024
        $region96: #{tpu_custom_call.1} parent=75 // pred_fallthru
          _
        // Predicated region
        $region97: #{tpu_custom_call.1} parent=75 // pred_check
          %p557 = pneg %p168
        $region98: #{tpu_custom_call.1} parent=75 // pred_check_branch
          %559 = sbr.rel (%p557) target = $region100
        $region99: #{tpu_custom_call.1} parent=75 // pred_region
          %560 = dma.done [#allocation12], 1024
        $region100: #{tpu_custom_call.1} parent=75 // pred_fallthru
          _
        // Predicated region
        $region101: #{tpu_custom_call.1} parent=75 // pred_check
          %p561 = pneg %p231
        $region102: #{tpu_custom_call.1} parent=75 // pred_check_branch
          %563 = sbr.rel (%p561) target = $region104
        $region103: #{tpu_custom_call.1} parent=75 // pred_region
          %564 = dma.done [#allocation12], 2048
        $region104: #{tpu_custom_call.1} parent=75 // pred_fallthru
          _
        // Predicated region
        $region105: #{tpu_custom_call.1} parent=75 // pred_check
          %p565 = pneg %p273
        $region106: #{tpu_custom_call.1} parent=75 // pred_check_branch
          %567 = sbr.rel (%p565) target = $region108
        $region107: #{tpu_custom_call.1} parent=75 // pred_region
          %568 = dma.done [#allocation15], 2048
        $region108: #{tpu_custom_call.1} parent=75 // pred_fallthru
          _
        %s569 = sand.u32 %s45, 1
        %s570 = scalar_lea.sflag [#allocation3], %s569
        %s571 = sand.u32 %s45, 1
        %s572 = smul.addr %s571, 128
        %s573 = scalar_lea.vmem [#allocation2], %s572
        %p574 = pneg %p58
        %p575 = pneg %p55
        %s576 = sand.u32 %s37, 1
        %s577 = scalar_lea.sflag [#allocation6], %s576
        %s578 = sand.u32 %s71, 1
        %s579 = smul.addr %s578, 8
        %s580 = scalar_lea.vmem [#allocation5], %s579
        %p581 = pneg %p84
        %p582 = pneg %p81
        %p583 = pneg %p105
        %p584 = pneg %p102
        %p585 = pneg %p126
        %p586 = pneg %p123
        %p587 = pneg %p147
        %p588 = pneg %p144
        %p589 = pneg %p168
        %p590 = pneg %p165
        %p591 = pneg %p189
        %p592 = pneg %p186
        %p593 = pneg %p210
        %p594 = pneg %p207
        %p595 = pneg %p231
        %p596 = pneg %p228
        %p597 = pneg %p252
        %p598 = pneg %p249
        %p599 = pneg %p273
        %p600 = pneg %p270
        %p601 = pneg %p294
        %p602 = pneg %p291
        %p603 = pneg %p315
        %p604 = pneg %p312
        %p605 = pneg %p336
        %p606 = pneg %p333
        %p607 = pneg %p362
        %p608 = pneg %p359
        %s609 = sand.u32 %s349, 1
        %s610 = scalar_lea.sflag [#allocation4], %s609
        %s611 = sand.u32 %s349, 1
        %s612 = smul.addr %s611, 128
        %s613 = scalar_lea.vmem [#allocation16], %s612
        %s614 = smul.u32 8, %s37
        %s615 = smul.u32 8, %s37
        %s616 = smul.u32 8, %s37
        %v618 = vld [vmem:[%s531] sm:$0xff]
        %v619 = vld [vmem:[%s531 + $0x8] sm:$0xff]
        %v620 = vld [vmem:[%s531 + $0x10] sm:$0xff]
        %v621 = vld [vmem:[%s531 + $0x18] sm:$0xff]
        %v622 = vld [vmem:[%s531 + $0x20] sm:$0xff]
        %v623 = vld [vmem:[%s531 + $0x28] sm:$0xff]
        %v624 = vld [vmem:[%s531 + $0x30] sm:$0xff]
        %v625 = vld [vmem:[%s531 + $0x38] sm:$0xff]
        %v626 = vld [vmem:[%s531 + $0x40] sm:$0xff]
        %v627 = vld [vmem:[%s531 + $0x48] sm:$0xff]
        %v628 = vld [vmem:[%s531 + $0x50] sm:$0xff]
        %v629 = vld [vmem:[%s531 + $0x58] sm:$0xff]
        %v630 = vld [vmem:[%s531 + $0x60] sm:$0xff]
        %v631 = vld [vmem:[%s531 + $0x68] sm:$0xff]
        %v632 = vld [vmem:[%s531 + $0x70] sm:$0xff]
        %v633 = vld [vmem:[%s531 + $0x78] sm:$0xff]
        %v634 = vld [vmem:[%s540] sm:$0x1]
        %v635 = vld [vmem:[%s540 + $0x1] sm:$0x1]
        %v636 = vld [vmem:[%s540 + $0x2] sm:$0x1]
        %v637 = vld [vmem:[%s540 + $0x3] sm:$0x1]
        %v638 = vld [vmem:[%s540 + $0x4] sm:$0x1]
        %v639 = vld [vmem:[%s540 + $0x5] sm:$0x1]
        %v640 = vld [vmem:[%s540 + $0x6] sm:$0x1]
        %v641 = vld [vmem:[%s540 + $0x7] sm:$0x1]
        %v642 = vpack.c.bf16 %v619, %v618
        %v643 = vpack.c.bf16 %v621, %v620
        %v644 = vpack.c.bf16 %v623, %v622
        %v645 = vpack.c.bf16 %v625, %v624
        %v646 = vpack.c.bf16 %v627, %v626
        %v647 = vpack.c.bf16 %v629, %v628
        %v648 = vpack.c.bf16 %v631, %v630
        %v649 = vpack.c.bf16 %v633, %v632
        %v650 = vld [vmem:[#allocation7] sm:$0xf]
        %v651 = vld [vmem:[#allocation7 + $0x4] sm:$0xf]
        %v652 = vld [vmem:[#allocation7 + $0x8] sm:$0xf]
        %v653 = vld [vmem:[#allocation7 + $0xc] sm:$0xf]
        %v654 = vld [vmem:[#allocation7 + $0x10] sm:$0xf]
        %v655 = vld [vmem:[#allocation7 + $0x14] sm:$0xf]
        %v656 = vld [vmem:[#allocation7 + $0x18] sm:$0xf]
        %v657 = vld [vmem:[#allocation7 + $0x1c] sm:$0xf]
        %v658 = vld [vmem:[#allocation7 + $0x20] sm:$0xf]
        %v659 = vld [vmem:[#allocation7 + $0x24] sm:$0xf]
        %v660 = vld [vmem:[#allocation7 + $0x28] sm:$0xf]
        %v661 = vld [vmem:[#allocation7 + $0x2c] sm:$0xf]
        %v662 = vld [vmem:[#allocation7 + $0x30] sm:$0xf]
        %v663 = vld [vmem:[#allocation7 + $0x34] sm:$0xf]
        %v664 = vld [vmem:[#allocation7 + $0x38] sm:$0xf]
        %v665 = vld [vmem:[#allocation7 + $0x3c] sm:$0xf]
        %v682 = vunpack.c.l.b16 %v650
        %v683 = vunpack.c.l.b16 %v651
        %v684 = vunpack.c.l.b16 %v652
        %v685 = vunpack.c.l.b16 %v653
        %v686 = vunpack.c.l.b16 %v654
        %v687 = vunpack.c.l.b16 %v655
        %v688 = vunpack.c.l.b16 %v656
        %v689 = vunpack.c.l.b16 %v657
        %v690 = vunpack.c.l.b16 %v658
        %v691 = vunpack.c.l.b16 %v659
        %v692 = vunpack.c.l.b16 %v660
        %v693 = vunpack.c.l.b16 %v661
        %v694 = vunpack.c.l.b16 %v662
        %v695 = vunpack.c.l.b16 %v663
        %v696 = vunpack.c.l.b16 %v664
        %v697 = vunpack.c.l.b16 %v665
        %v698 = vpack.c.b16 %v683, %v682
        %v699 = vpack.c.b16 %v685, %v684
        %v700 = vpack.c.b16 %v687, %v686
        %v701 = vpack.c.b16 %v689, %v688
        %v702 = vpack.c.b16 %v691, %v690
        %v703 = vpack.c.b16 %v693, %v692
        %v704 = vpack.c.b16 %v695, %v694
        %v705 = vpack.c.b16 %v697, %v696
        %714 = vmatprep.subr.bf16.mxu0 0
        %715 = vmatpush1.bf16.msra.mxu0 %v698
        %716 = vmatprep.subr.bf16.mxu0 0
        %717 = vmatpush1.bf16.msra.mxu0 %v699
        %718 = vmatprep.subr.bf16.mxu0 0
        %719 = vmatpush1.bf16.msra.mxu0 %v700
        %720 = vmatprep.subr.bf16.mxu0 0
        %721 = vmatpush1.bf16.msra.mxu0 %v701
        %722 = vmatprep.subr.bf16.mxu0 0
        %723 = vmatpush1.bf16.msra.mxu0 %v702
        %724 = vmatprep.subr.bf16.mxu0 0
        %725 = vmatpush1.bf16.msra.mxu0 %v703
        %726 = vmatprep.subr.bf16.mxu0 0
        %727 = vmatpush1.bf16.msra.mxu0 %v704
        %728 = vmatprep.subr.bf16.mxu0 0
        %729 = vmatpush1.bf16.msra.mxu0 %v705
        %730 = vmatprep.subr.bf16.mxu0 0
        %731 = vmatpush1.bf16.msra.mxu0 0
        %732 = vmatprep.subr.bf16.mxu0 0
        %733 = vmatpush1.bf16.msra.mxu0 0
        %734 = vmatprep.subr.bf16.mxu0 0
        %735 = vmatpush1.bf16.msra.mxu0 0
        %736 = vmatprep.subr.bf16.mxu0 0
        %737 = vmatpush1.bf16.msra.mxu0 0
        %738 = vmatprep.subr.bf16.mxu0 0
        %739 = vmatpush1.bf16.msra.mxu0 0
        %740 = vmatprep.subr.bf16.mxu0 0
        %741 = vmatpush1.bf16.msra.mxu0 0
        %742 = vmatprep.subr.bf16.mxu0 0
        %743 = vmatpush1.bf16.msra.mxu0 0
        %744 = vmatprep.subr.bf16.mxu0 0
        %745 = vmatpush1.bf16.msra.mxu0 0
        %746 = vmatprep.mubr.bf16.mxu0 0
        %747 = vmatmul.mubr.bf16.gmra.mrb[0].mxu0 %v642
        %v748 = vpop.f32.mrb[0].mxu0
        %v749 = vadd.f32 0.0, %v748
        %v750 = vpop.f32.mrb[0].mxu0
        %v751 = vpop.f32.mrb[0].mxu0
        %v752 = vadd.f32 0.0, %v751
        %v753 = vpop.f32.mrb[0].mxu0
        %754 = vmatprep.mubr.bf16.mxu0 0
        %755 = vmatmul.mubr.bf16.gmra.mrb[0].mxu0 %v643
        %v756 = vpop.f32.mrb[0].mxu0
        %v757 = vadd.f32 0.0, %v756
        %v758 = vpop.f32.mrb[0].mxu0
        %v759 = vpop.f32.mrb[0].mxu0
        %v760 = vadd.f32 0.0, %v759
        %v761 = vpop.f32.mrb[0].mxu0
        %762 = vmatprep.mubr.bf16.mxu0 0
        %763 = vmatmul.mubr.bf16.gmra.mrb[0].mxu0 %v644
        %v764 = vpop.f32.mrb[0].mxu0
        %v765 = vadd.f32 0.0, %v764
        %v766 = vpop.f32.mrb[0].mxu0
        %v767 = vpop.f32.mrb[0].mxu0
        %v768 = vadd.f32 0.0, %v767
        %v769 = vpop.f32.mrb[0].mxu0
        %770 = vmatprep.mubr.bf16.mxu0 0
        %771 = vmatmul.mubr.bf16.gmra.mrb[0].mxu0 %v645
        %v772 = vpop.f32.mrb[0].mxu0
        %v773 = vadd.f32 0.0, %v772
        %v774 = vpop.f32.mrb[0].mxu0
        %v775 = vpop.f32.mrb[0].mxu0
        %v776 = vadd.f32 0.0, %v775
        %v777 = vpop.f32.mrb[0].mxu0
        %778 = vmatprep.mubr.bf16.mxu0 0
        %779 = vmatmul.mubr.bf16.gmra.mrb[0].mxu0 %v646
        %v780 = vpop.f32.mrb[0].mxu0
        %v781 = vadd.f32 0.0, %v780
        %v782 = vpop.f32.mrb[0].mxu0
        %v783 = vpop.f32.mrb[0].mxu0
        %v784 = vadd.f32 0.0, %v783
        %v785 = vpop.f32.mrb[0].mxu0
        %786 = vmatprep.mubr.bf16.mxu0 0
        %787 = vmatmul.mubr.bf16.gmra.mrb[0].mxu0 %v647
        %v788 = vpop.f32.mrb[0].mxu0
        %v789 = vadd.f32 0.0, %v788
        %v790 = vpop.f32.mrb[0].mxu0
        %v791 = vpop.f32.mrb[0].mxu0
        %v792 = vadd.f32 0.0, %v791
        %v793 = vpop.f32.mrb[0].mxu0
        %794 = vmatprep.mubr.bf16.mxu0 0
        %795 = vmatmul.mubr.bf16.gmra.mrb[0].mxu0 %v648
        %v796 = vpop.f32.mrb[0].mxu0
        %v797 = vadd.f32 0.0, %v796
        %v798 = vpop.f32.mrb[0].mxu0
        %v799 = vpop.f32.mrb[0].mxu0
        %v800 = vadd.f32 0.0, %v799
        %v801 = vpop.f32.mrb[0].mxu0
        %802 = vmatprep.mubr.bf16.mxu0 0
        %803 = vmatmul.mubr.bf16.gmra.mrb[0].mxu0 %v649
        %v804 = vpop.f32.mrb[0].mxu0
        %v805 = vadd.f32 0.0, %v804
        %v806 = vpop.f32.mrb[0].mxu0
        %v807 = vpop.f32.mrb[0].mxu0
        %v808 = vadd.f32 0.0, %v807
        %v809 = vpop.f32.mrb[0].mxu0
        %810 = vdwg.mxu0
        %v811 = vld [vmem:[#allocation8] sm:$0xf]
        %v812 = vld [vmem:[#allocation8 + $0x4] sm:$0xf]
        %v813 = vld [vmem:[#allocation8 + $0x8] sm:$0xf]
        %v814 = vld [vmem:[#allocation8 + $0xc] sm:$0xf]
        %v815 = vld [vmem:[#allocation8 + $0x10] sm:$0xf]
        %v816 = vld [vmem:[#allocation8 + $0x14] sm:$0xf]
        %v817 = vld [vmem:[#allocation8 + $0x18] sm:$0xf]
        %v818 = vld [vmem:[#allocation8 + $0x1c] sm:$0xf]
        %v819 = vld [vmem:[#allocation8 + $0x20] sm:$0xf]
        %v820 = vld [vmem:[#allocation8 + $0x24] sm:$0xf]
        %v821 = vld [vmem:[#allocation8 + $0x28] sm:$0xf]
        %v822 = vld [vmem:[#allocation8 + $0x2c] sm:$0xf]
        %v823 = vld [vmem:[#allocation8 + $0x30] sm:$0xf]
        %v824 = vld [vmem:[#allocation8 + $0x34] sm:$0xf]
        %v825 = vld [vmem:[#allocation8 + $0x38] sm:$0xf]
        %v826 = vld [vmem:[#allocation8 + $0x3c] sm:$0xf]
        %v843 = vunpack.c.l.b16 %v811
        %v844 = vunpack.c.l.b16 %v812
        %v845 = vunpack.c.l.b16 %v813
        %v846 = vunpack.c.l.b16 %v814
        %v847 = vunpack.c.l.b16 %v815
        %v848 = vunpack.c.l.b16 %v816
        %v849 = vunpack.c.l.b16 %v817
        %v850 = vunpack.c.l.b16 %v818
        %v851 = vunpack.c.l.b16 %v819
        %v852 = vunpack.c.l.b16 %v820
        %v853 = vunpack.c.l.b16 %v821
        %v854 = vunpack.c.l.b16 %v822
        %v855 = vunpack.c.l.b16 %v823
        %v856 = vunpack.c.l.b16 %v824
        %v857 = vunpack.c.l.b16 %v825
        %v858 = vunpack.c.l.b16 %v826
        %v859 = vpack.c.b16 %v844, %v843
        %v860 = vpack.c.b16 %v846, %v845
        %v861 = vpack.c.b16 %v848, %v847
        %v862 = vpack.c.b16 %v850, %v849
        %v863 = vpack.c.b16 %v852, %v851
        %v864 = vpack.c.b16 %v854, %v853
        %v865 = vpack.c.b16 %v856, %v855
        %v866 = vpack.c.b16 %v858, %v857
        %875 = vmatprep.subr.bf16.mxu0 0
        %876 = vmatpush1.bf16.msra.mxu0 %v859
        %877 = vmatprep.subr.bf16.mxu0 0
        %878 = vmatpush1.bf16.msra.mxu0 %v860
        %879 = vmatprep.subr.bf16.mxu0 0
        %880 = vmatpush1.bf16.msra.mxu0 %v861
        %881 = vmatprep.subr.bf16.mxu0 0
        %882 = vmatpush1.bf16.msra.mxu0 %v862
        %883 = vmatprep.subr.bf16.mxu0 0
        %884 = vmatpush1.bf16.msra.mxu0 %v863
        %885 = vmatprep.subr.bf16.mxu0 0
        %886 = vmatpush1.bf16.msra.mxu0 %v864
        %887 = vmatprep.subr.bf16.mxu0 0
        %888 = vmatpush1.bf16.msra.mxu0 %v865
        %889 = vmatprep.subr.bf16.mxu0 0
        %890 = vmatpush1.bf16.msra.mxu0 %v866
        %891 = vmatprep.subr.bf16.mxu0 0
        %892 = vmatpush1.bf16.msra.mxu0 0
        %893 = vmatprep.subr.bf16.mxu0 0
        %894 = vmatpush1.bf16.msra.mxu0 0
        %895 = vmatprep.subr.bf16.mxu0 0
        %896 = vmatpush1.bf16.msra.mxu0 0
        %897 = vmatprep.subr.bf16.mxu0 0
        %898 = vmatpush1.bf16.msra.mxu0 0
        %899 = vmatprep.subr.bf16.mxu0 0
        %900 = vmatpush1.bf16.msra.mxu0 0
        %901 = vmatprep.subr.bf16.mxu0 0
        %902 = vmatpush1.bf16.msra.mxu0 0
        %903 = vmatprep.subr.bf16.mxu0 0
        %904 = vmatpush1.bf16.msra.mxu0 0
        %905 = vmatprep.subr.bf16.mxu0 0
        %906 = vmatpush1.bf16.msra.mxu0 0
        %907 = vmatprep.mubr.bf16.mxu0 0
        %908 = vmatmul.mubr.bf16.gmra.mrb[0].mxu0 %v642
        %v909 = vpop.f32.mrb[0].mxu0
        %v910 = vadd.f32 0.0, %v909
        %v911 = vpop.f32.mrb[0].mxu0
        %v912 = vpop.f32.mrb[0].mxu0
        %v913 = vadd.f32 0.0, %v912
        %v914 = vpop.f32.mrb[0].mxu0
        %915 = vmatprep.mubr.bf16.mxu0 0
        %916 = vmatmul.mubr.bf16.gmra.mrb[0].mxu0 %v643
        %v917 = vpop.f32.mrb[0].mxu0
        %v918 = vadd.f32 0.0, %v917
        %v919 = vpop.f32.mrb[0].mxu0
        %v920 = vpop.f32.mrb[0].mxu0
        %v921 = vadd.f32 0.0, %v920
        %v922 = vpop.f32.mrb[0].mxu0
        %923 = vmatprep.mubr.bf16.mxu0 0
        %924 = vmatmul.mubr.bf16.gmra.mrb[0].mxu0 %v644
        %v925 = vpop.f32.mrb[0].mxu0
        %v926 = vadd.f32 0.0, %v925
        %v927 = vpop.f32.mrb[0].mxu0
        %v928 = vpop.f32.mrb[0].mxu0
        %v929 = vadd.f32 0.0, %v928
        %v930 = vpop.f32.mrb[0].mxu0
        %931 = vmatprep.mubr.bf16.mxu0 0
        %932 = vmatmul.mubr.bf16.gmra.mrb[0].mxu0 %v645
        %v933 = vpop.f32.mrb[0].mxu0
        %v934 = vadd.f32 0.0, %v933
        %v935 = vpop.f32.mrb[0].mxu0
        %v936 = vpop.f32.mrb[0].mxu0
        %v937 = vadd.f32 0.0, %v936
        %v938 = vpop.f32.mrb[0].mxu0
        %939 = vmatprep.mubr.bf16.mxu0 0
        %940 = vmatmul.mubr.bf16.gmra.mrb[0].mxu0 %v646
        %v941 = vpop.f32.mrb[0].mxu0
        %v942 = vadd.f32 0.0, %v941
        %v943 = vpop.f32.mrb[0].mxu0
        %v944 = vpop.f32.mrb[0].mxu0
        %v945 = vadd.f32 0.0, %v944
        %v946 = vpop.f32.mrb[0].mxu0
        %947 = vmatprep.mubr.bf16.mxu0 0
        %948 = vmatmul.mubr.bf16.gmra.mrb[0].mxu0 %v647
        %v949 = vpop.f32.mrb[0].mxu0
        %v950 = vadd.f32 0.0, %v949
        %v951 = vpop.f32.mrb[0].mxu0
        %v952 = vpop.f32.mrb[0].mxu0
        %v953 = vadd.f32 0.0, %v952
        %v954 = vpop.f32.mrb[0].mxu0
        %955 = vmatprep.mubr.bf16.mxu0 0
        %956 = vmatmul.mubr.bf16.gmra.mrb[0].mxu0 %v648
        %v957 = vpop.f32.mrb[0].mxu0
        %v958 = vadd.f32 0.0, %v957
        %v959 = vpop.f32.mrb[0].mxu0
        %v960 = vpop.f32.mrb[0].mxu0
        %v961 = vadd.f32 0.0, %v960
        %v962 = vpop.f32.mrb[0].mxu0
        %963 = vmatprep.mubr.bf16.mxu0 0
        %964 = vmatmul.mubr.bf16.gmra.mrb[0].mxu0 %v649
        %v965 = vpop.f32.mrb[0].mxu0
        %v966 = vadd.f32 0.0, %v965
        %v967 = vpop.f32.mrb[0].mxu0
        %v968 = vpop.f32.mrb[0].mxu0
        %v969 = vadd.f32 0.0, %v968
        %v970 = vpop.f32.mrb[0].mxu0
        %971 = vdwg.mxu0
        %v972 = vld [vmem:[#allocation10] sm:$0xf]
        %v973 = vld [vmem:[#allocation10 + $0x4] sm:$0xf]
        %v974 = vld [vmem:[#allocation10 + $0x8] sm:$0xf]
        %v975 = vld [vmem:[#allocation10 + $0xc] sm:$0xf]
        %v976 = vld [vmem:[#allocation10 + $0x10] sm:$0xf]
        %v977 = vld [vmem:[#allocation10 + $0x14] sm:$0xf]
        %v978 = vld [vmem:[#allocation10 + $0x18] sm:$0xf]
        %v979 = vld [vmem:[#allocation10 + $0x1c] sm:$0xf]
        %v980 = vld [vmem:[#allocation10 + $0x20] sm:$0xf]
        %v981 = vld [vmem:[#allocation10 + $0x24] sm:$0xf]
        %v982 = vld [vmem:[#allocation10 + $0x28] sm:$0xf]
        %v983 = vld [vmem:[#allocation10 + $0x2c] sm:$0xf]
        %v984 = vld [vmem:[#allocation10 + $0x30] sm:$0xf]
        %v985 = vld [vmem:[#allocation10 + $0x34] sm:$0xf]
        %v986 = vld [vmem:[#allocation10 + $0x38] sm:$0xf]
        %v987 = vld [vmem:[#allocation10 + $0x3c] sm:$0xf]
        %v1004 = vunpack.c.l.b16 %v972
        %v1005 = vunpack.c.l.b16 %v973
        %v1006 = vunpack.c.l.b16 %v974
        %v1007 = vunpack.c.l.b16 %v975
        %v1008 = vunpack.c.l.b16 %v976
        %v1009 = vunpack.c.l.b16 %v977
        %v1010 = vunpack.c.l.b16 %v978
        %v1011 = vunpack.c.l.b16 %v979
        %v1012 = vunpack.c.l.b16 %v980
        %v1013 = vunpack.c.l.b16 %v981
        %v1014 = vunpack.c.l.b16 %v982
        %v1015 = vunpack.c.l.b16 %v983
        %v1016 = vunpack.c.l.b16 %v984
        %v1017 = vunpack.c.l.b16 %v985
        %v1018 = vunpack.c.l.b16 %v986
        %v1019 = vunpack.c.l.b16 %v987
        %v1020 = vpack.c.b16 %v1005, %v1004
        %v1021 = vpack.c.b16 %v1007, %v1006
        %v1022 = vpack.c.b16 %v1009, %v1008
        %v1023 = vpack.c.b16 %v1011, %v1010
        %v1024 = vpack.c.b16 %v1013, %v1012
        %v1025 = vpack.c.b16 %v1015, %v1014
        %v1026 = vpack.c.b16 %v1017, %v1016
        %v1027 = vpack.c.b16 %v1019, %v1018
        %1036 = vmatprep.subr.bf16.mxu0 0
        %1037 = vmatpush1.bf16.msra.mxu0 %v1020
        %1038 = vmatprep.subr.bf16.mxu0 0
        %1039 = vmatpush1.bf16.msra.mxu0 %v1021
        %1040 = vmatprep.subr.bf16.mxu0 0
        %1041 = vmatpush1.bf16.msra.mxu0 %v1022
        %1042 = vmatprep.subr.bf16.mxu0 0
        %1043 = vmatpush1.bf16.msra.mxu0 %v1023
        %1044 = vmatprep.subr.bf16.mxu0 0
        %1045 = vmatpush1.bf16.msra.mxu0 %v1024
        %1046 = vmatprep.subr.bf16.mxu0 0
        %1047 = vmatpush1.bf16.msra.mxu0 %v1025
        %1048 = vmatprep.subr.bf16.mxu0 0
        %1049 = vmatpush1.bf16.msra.mxu0 %v1026
        %1050 = vmatprep.subr.bf16.mxu0 0
        %1051 = vmatpush1.bf16.msra.mxu0 %v1027
        %1052 = vmatprep.subr.bf16.mxu0 0
        %1053 = vmatpush1.bf16.msra.mxu0 0
        %1054 = vmatprep.subr.bf16.mxu0 0
        %1055 = vmatpush1.bf16.msra.mxu0 0
        %1056 = vmatprep.subr.bf16.mxu0 0
        %1057 = vmatpush1.bf16.msra.mxu0 0
        %1058 = vmatprep.subr.bf16.mxu0 0
        %1059 = vmatpush1.bf16.msra.mxu0 0
        %1060 = vmatprep.subr.bf16.mxu0 0
        %1061 = vmatpush1.bf16.msra.mxu0 0
        %1062 = vmatprep.subr.bf16.mxu0 0
        %1063 = vmatpush1.bf16.msra.mxu0 0
        %1064 = vmatprep.subr.bf16.mxu0 0
        %1065 = vmatpush1.bf16.msra.mxu0 0
        %1066 = vmatprep.subr.bf16.mxu0 0
        %1067 = vmatpush1.bf16.msra.mxu0 0
        %1068 = vmatprep.mubr.bf16.mxu0 0
        %1069 = vmatmul.mubr.bf16.gmra.mrb[0].mxu0 %v642
        %v1070 = vpop.f32.mrb[0].mxu0
        %v1071 = vadd.f32 0.0, %v1070
        %v1072 = vpop.f32.mrb[0].mxu0
        %v1073 = vpop.f32.mrb[0].mxu0
        %v1074 = vadd.f32 0.0, %v1073
        %v1075 = vpop.f32.mrb[0].mxu0
        %1076 = vmatprep.mubr.bf16.mxu0 0
        %1077 = vmatmul.mubr.bf16.gmra.mrb[0].mxu0 %v643
        %v1078 = vpop.f32.mrb[0].mxu0
        %v1079 = vadd.f32 0.0, %v1078
        %v1080 = vpop.f32.mrb[0].mxu0
        %v1081 = vpop.f32.mrb[0].mxu0
        %v1082 = vadd.f32 0.0, %v1081
        %v1083 = vpop.f32.mrb[0].mxu0
        %1084 = vmatprep.mubr.bf16.mxu0 0
        %1085 = vmatmul.mubr.bf16.gmra.mrb[0].mxu0 %v644
        %v1086 = vpop.f32.mrb[0].mxu0
        %v1087 = vadd.f32 0.0, %v1086
        %v1088 = vpop.f32.mrb[0].mxu0
        %v1089 = vpop.f32.mrb[0].mxu0
        %v1090 = vadd.f32 0.0, %v1089
        %v1091 = vpop.f32.mrb[0].mxu0
        %1092 = vmatprep.mubr.bf16.mxu0 0
        %1093 = vmatmul.mubr.bf16.gmra.mrb[0].mxu0 %v645
        %v1094 = vpop.f32.mrb[0].mxu0
        %v1095 = vadd.f32 0.0, %v1094
        %v1096 = vpop.f32.mrb[0].mxu0
        %v1097 = vpop.f32.mrb[0].mxu0
        %v1098 = vadd.f32 0.0, %v1097
        %v1099 = vpop.f32.mrb[0].mxu0
        %1100 = vmatprep.mubr.bf16.mxu0 0
        %1101 = vmatmul.mubr.bf16.gmra.mrb[0].mxu0 %v646
        %v1102 = vpop.f32.mrb[0].mxu0
        %v1103 = vadd.f32 0.0, %v1102
        %v1104 = vpop.f32.mrb[0].mxu0
        %v1105 = vpop.f32.mrb[0].mxu0
        %v1106 = vadd.f32 0.0, %v1105
        %v1107 = vpop.f32.mrb[0].mxu0
        %1108 = vmatprep.mubr.bf16.mxu0 0
        %1109 = vmatmul.mubr.bf16.gmra.mrb[0].mxu0 %v647
        %v1110 = vpop.f32.mrb[0].mxu0
        %v1111 = vadd.f32 0.0, %v1110
        %v1112 = vpop.f32.mrb[0].mxu0
        %v1113 = vpop.f32.mrb[0].mxu0
        %v1114 = vadd.f32 0.0, %v1113
        %v1115 = vpop.f32.mrb[0].mxu0
        %1116 = vmatprep.mubr.bf16.mxu0 0
        %1117 = vmatmul.mubr.bf16.gmra.mrb[0].mxu0 %v648
        %v1118 = vpop.f32.mrb[0].mxu0
        %v1119 = vadd.f32 0.0, %v1118
        %v1120 = vpop.f32.mrb[0].mxu0
        %v1121 = vpop.f32.mrb[0].mxu0
        %v1122 = vadd.f32 0.0, %v1121
        %v1123 = vpop.f32.mrb[0].mxu0
        %1124 = vmatprep.mubr.bf16.mxu0 0
        %1125 = vmatmul.mubr.bf16.gmra.mrb[0].mxu0 %v649
        %v1126 = vpop.f32.mrb[0].mxu0
        %v1127 = vadd.f32 0.0, %v1126
        %v1128 = vpop.f32.mrb[0].mxu0
        %v1129 = vpop.f32.mrb[0].mxu0
        %v1130 = vadd.f32 0.0, %v1129
        %v1131 = vpop.f32.mrb[0].mxu0
        %1132 = vdwg.mxu0
        %v1133 = vpack.c.bf16 %v752, %v749
        %v1134 = vpack.c.bf16 %v760, %v757
        %v1135 = vpack.c.bf16 %v768, %v765
        %v1136 = vpack.c.bf16 %v776, %v773
        %v1137 = vpack.c.bf16 %v784, %v781
        %v1138 = vpack.c.bf16 %v792, %v789
        %v1139 = vpack.c.bf16 %v800, %v797
        %v1140 = vpack.c.bf16 %v808, %v805
        %v1141 = vpack.c.bf16 %v913, %v910
        %v1142 = vpack.c.bf16 %v921, %v918
        %v1143 = vpack.c.bf16 %v929, %v926
        %v1144 = vpack.c.bf16 %v937, %v934
        %v1145 = vpack.c.bf16 %v945, %v942
        %v1146 = vpack.c.bf16 %v953, %v950
        %v1147 = vpack.c.bf16 %v961, %v958
        %v1148 = vpack.c.bf16 %v969, %v966
        %v1149 = vpack.c.bf16 %v1074, %v1071
        %v1150 = vpack.c.bf16 %v1082, %v1079
        %v1151 = vpack.c.bf16 %v1090, %v1087
        %v1152 = vpack.c.bf16 %v1098, %v1095
        %v1153 = vpack.c.bf16 %v1106, %v1103
        %v1154 = vpack.c.bf16 %v1114, %v1111
        %v1155 = vpack.c.bf16 %v1122, %v1119
        %v1156 = vpack.c.bf16 %v1130, %v1127
        %1157 = vmatprep.subr.bf16.mxu0 0
        %1158 = vmatpush1.bf16.xpose.msra.mxu0 %v1141
        %1159 = vmatprep.subr.bf16.mxu0 0
        %1160 = vmatpush1.bf16.xpose.msra.mxu0 0
        %1161 = vmatprep.subr.bf16.mxu0 0
        %1162 = vmatpush1.bf16.xpose.msra.mxu0 0
        %1163 = vmatprep.subr.bf16.mxu0 0
        %1164 = vmatpush1.bf16.xpose.msra.mxu0 0
        %1165 = vmatprep.subr.bf16.mxu0 0
        %1166 = vmatpush1.bf16.xpose.msra.mxu0 0
        %1167 = vmatprep.subr.bf16.mxu0 0
        %1168 = vmatpush1.bf16.xpose.msra.mxu0 0
        %1169 = vmatprep.subr.bf16.mxu0 0
        %1170 = vmatpush1.bf16.xpose.msra.mxu0 0
        %1171 = vmatprep.subr.bf16.mxu0 0
        %1172 = vmatpush1.bf16.xpose.msra.mxu0 0
        %1173 = vmatprep.subr.bf16.mxu0 0
        %1174 = vmatpush1.bf16.xpose.msra.mxu0 0
        %1175 = vmatprep.subr.bf16.mxu0 0
        %1176 = vmatpush1.bf16.xpose.msra.mxu0 0
        %1177 = vmatprep.subr.bf16.mxu0 0
        %1178 = vmatpush1.bf16.xpose.msra.mxu0 0
        %1179 = vmatprep.subr.bf16.mxu0 0
        %1180 = vmatpush1.bf16.xpose.msra.mxu0 0
        %1181 = vmatprep.subr.bf16.mxu0 0
        %1182 = vmatpush1.bf16.xpose.msra.mxu0 0
        %1183 = vmatprep.subr.bf16.mxu0 0
        %1184 = vmatpush1.bf16.xpose.msra.mxu0 0
        %1185 = vmatprep.subr.bf16.mxu0 0
        %1186 = vmatpush1.bf16.xpose.msra.mxu0 0
        %1187 = vmatprep.subr.bf16.mxu0 0
        %1188 = vmatpush1.bf16.xpose.msra.mxu0 0
        %1189 = vmatprep.mubr.bf16.mxu0 0
        %1190 = vmatmul.mubr.bf16.gmra.mrb[0].mxu0 %v1133
        %v1191 = vpop.f32.mrb[0].mxu0
        %v1192 = vadd.f32 0.0, %v1191
        %v1193 = vpop.f32.mrb[0].mxu0
        %v1194 = vpop.f32.mrb[0].mxu0
        %v1195 = vadd.f32 0.0, %v1194
        %v1196 = vpop.f32.mrb[0].mxu0
        %1197 = vdwg.mxu0
        %1198 = vmatprep.subr.bf16.mxu0 0
        %1199 = vmatpush1.bf16.xpose.msra.mxu0 %v1142
        %1200 = vmatprep.subr.bf16.mxu0 0
        %1201 = vmatpush1.bf16.xpose.msra.mxu0 0
        %1202 = vmatprep.subr.bf16.mxu0 0
        %1203 = vmatpush1.bf16.xpose.msra.mxu0 0
        %1204 = vmatprep.subr.bf16.mxu0 0
        %1205 = vmatpush1.bf16.xpose.msra.mxu0 0
        %1206 = vmatprep.subr.bf16.mxu0 0
        %1207 = vmatpush1.bf16.xpose.msra.mxu0 0
        %1208 = vmatprep.subr.bf16.mxu0 0
        %1209 = vmatpush1.bf16.xpose.msra.mxu0 0
        %1210 = vmatprep.subr.bf16.mxu0 0
        %1211 = vmatpush1.bf16.xpose.msra.mxu0 0
        %1212 = vmatprep.subr.bf16.mxu0 0
        %1213 = vmatpush1.bf16.xpose.msra.mxu0 0
        %1214 = vmatprep.subr.bf16.mxu0 0
        %1215 = vmatpush1.bf16.xpose.msra.mxu0 0
        %1216 = vmatprep.subr.bf16.mxu0 0
        %1217 = vmatpush1.bf16.xpose.msra.mxu0 0
        %1218 = vmatprep.subr.bf16.mxu0 0
        %1219 = vmatpush1.bf16.xpose.msra.mxu0 0
        %1220 = vmatprep.subr.bf16.mxu0 0
        %1221 = vmatpush1.bf16.xpose.msra.mxu0 0
        %1222 = vmatprep.subr.bf16.mxu0 0
        %1223 = vmatpush1.bf16.xpose.msra.mxu0 0
        %1224 = vmatprep.subr.bf16.mxu0 0
        %1225 = vmatpush1.bf16.xpose.msra.mxu0 0
        %1226 = vmatprep.subr.bf16.mxu0 0
        %1227 = vmatpush1.bf16.xpose.msra.mxu0 0
        %1228 = vmatprep.subr.bf16.mxu0 0
        %1229 = vmatpush1.bf16.xpose.msra.mxu0 0
        %1230 = vmatprep.mubr.bf16.mxu0 0
        %1231 = vmatmul.mubr.bf16.gmra.mrb[0].mxu0 %v1134
        %v1232 = vpop.f32.mrb[0].mxu0
        %v1233 = vadd.f32 0.0, %v1232
        %v1234 = vpop.f32.mrb[0].mxu0
        %v1235 = vpop.f32.mrb[0].mxu0
        %v1236 = vadd.f32 0.0, %v1235
        %v1237 = vpop.f32.mrb[0].mxu0
        %1238 = vdwg.mxu0
        %1239 = vmatprep.subr.bf16.mxu0 0
        %1240 = vmatpush1.bf16.xpose.msra.mxu0 %v1143
        %1241 = vmatprep.subr.bf16.mxu0 0
        %1242 = vmatpush1.bf16.xpose.msra.mxu0 0
        %1243 = vmatprep.subr.bf16.mxu0 0
        %1244 = vmatpush1.bf16.xpose.msra.mxu0 0
        %1245 = vmatprep.subr.bf16.mxu0 0
        %1246 = vmatpush1.bf16.xpose.msra.mxu0 0
        %1247 = vmatprep.subr.bf16.mxu0 0
        %1248 = vmatpush1.bf16.xpose.msra.mxu0 0
        %1249 = vmatprep.subr.bf16.mxu0 0
        %1250 = vmatpush1.bf16.xpose.msra.mxu0 0
        %1251 = vmatprep.subr.bf16.mxu0 0
        %1252 = vmatpush1.bf16.xpose.msra.mxu0 0
        %1253 = vmatprep.subr.bf16.mxu0 0
        %1254 = vmatpush1.bf16.xpose.msra.mxu0 0
        %1255 = vmatprep.subr.bf16.mxu0 0
        %1256 = vmatpush1.bf16.xpose.msra.mxu0 0
        %1257 = vmatprep.subr.bf16.mxu0 0
        %1258 = vmatpush1.bf16.xpose.msra.mxu0 0
        %1259 = vmatprep.subr.bf16.mxu0 0
        %1260 = vmatpush1.bf16.xpose.msra.mxu0 0
        %1261 = vmatprep.subr.bf16.mxu0 0
        %1262 = vmatpush1.bf16.xpose.msra.mxu0 0
        %1263 = vmatprep.subr.bf16.mxu0 0
        %1264 = vmatpush1.bf16.xpose.msra.mxu0 0
        %1265 = vmatprep.subr.bf16.mxu0 0
        %1266 = vmatpush1.bf16.xpose.msra.mxu0 0
        %1267 = vmatprep.subr.bf16.mxu0 0
        %1268 = vmatpush1.bf16.xpose.msra.mxu0 0
        %1269 = vmatprep.subr.bf16.mxu0 0
        %1270 = vmatpush1.bf16.xpose.msra.mxu0 0
        %1271 = vmatprep.mubr.bf16.mxu0 0
        %1272 = vmatmul.mubr.bf16.gmra.mrb[0].mxu0 %v1135
        %v1273 = vpop.f32.mrb[0].mxu0
        %v1274 = vadd.f32 0.0, %v1273
        %v1275 = vpop.f32.mrb[0].mxu0
        %v1276 = vpop.f32.mrb[0].mxu0
        %v1277 = vadd.f32 0.0, %v1276
        %v1278 = vpop.f32.mrb[0].mxu0
        %1279 = vdwg.mxu0
        %1280 = vmatprep.subr.bf16.mxu0 0
        %1281 = vmatpush1.bf16.xpose.msra.mxu0 %v1144
        %1282 = vmatprep.subr.bf16.mxu0 0
        %1283 = vmatpush1.bf16.xpose.msra.mxu0 0
        %1284 = vmatprep.subr.bf16.mxu0 0
        %1285 = vmatpush1.bf16.xpose.msra.mxu0 0
        %1286 = vmatprep.subr.bf16.mxu0 0
        %1287 = vmatpush1.bf16.xpose.msra.mxu0 0
        %1288 = vmatprep.subr.bf16.mxu0 0
        %1289 = vmatpush1.bf16.xpose.msra.mxu0 0
        %1290 = vmatprep.subr.bf16.mxu0 0
        %1291 = vmatpush1.bf16.xpose.msra.mxu0 0
        %1292 = vmatprep.subr.bf16.mxu0 0
        %1293 = vmatpush1.bf16.xpose.msra.mxu0 0
        %1294 = vmatprep.subr.bf16.mxu0 0
        %1295 = vmatpush1.bf16.xpose.msra.mxu0 0
        %1296 = vmatprep.subr.bf16.mxu0 0
        %1297 = vmatpush1.bf16.xpose.msra.mxu0 0
        %1298 = vmatprep.subr.bf16.mxu0 0
        %1299 = vmatpush1.bf16.xpose.msra.mxu0 0
        %1300 = vmatprep.subr.bf16.mxu0 0
        %1301 = vmatpush1.bf16.xpose.msra.mxu0 0
        %1302 = vmatprep.subr.bf16.mxu0 0
        %1303 = vmatpush1.bf16.xpose.msra.mxu0 0
        %1304 = vmatprep.subr.bf16.mxu0 0
        %1305 = vmatpush1.bf16.xpose.msra.mxu0 0
        %1306 = vmatprep.subr.bf16.mxu0 0
        %1307 = vmatpush1.bf16.xpose.msra.mxu0 0
        %1308 = vmatprep.subr.bf16.mxu0 0
        %1309 = vmatpush1.bf16.xpose.msra.mxu0 0
        %1310 = vmatprep.subr.bf16.mxu0 0
        %1311 = vmatpush1.bf16.xpose.msra.mxu0 0
        %1312 = vmatprep.mubr.bf16.mxu0 0
        %1313 = vmatmul.mubr.bf16.gmra.mrb[0].mxu0 %v1136
        %v1314 = vpop.f32.mrb[0].mxu0
        %v1315 = vadd.f32 0.0, %v1314
        %v1316 = vpop.f32.mrb[0].mxu0
        %v1317 = vpop.f32.mrb[0].mxu0
        %v1318 = vadd.f32 0.0, %v1317
        %v1319 = vpop.f32.mrb[0].mxu0
        %1320 = vdwg.mxu0
        %1321 = vmatprep.subr.bf16.mxu0 0
        %1322 = vmatpush1.bf16.xpose.msra.mxu0 %v1145
        %1323 = vmatprep.subr.bf16.mxu0 0
        %1324 = vmatpush1.bf16.xpose.msra.mxu0 0
        %1325 = vmatprep.subr.bf16.mxu0 0
        %1326 = vmatpush1.bf16.xpose.msra.mxu0 0
        %1327 = vmatprep.subr.bf16.mxu0 0
        %1328 = vmatpush1.bf16.xpose.msra.mxu0 0
        %1329 = vmatprep.subr.bf16.mxu0 0
        %1330 = vmatpush1.bf16.xpose.msra.mxu0 0
        %1331 = vmatprep.subr.bf16.mxu0 0
        %1332 = vmatpush1.bf16.xpose.msra.mxu0 0
        %1333 = vmatprep.subr.bf16.mxu0 0
        %1334 = vmatpush1.bf16.xpose.msra.mxu0 0
        %1335 = vmatprep.subr.bf16.mxu0 0
        %1336 = vmatpush1.bf16.xpose.msra.mxu0 0
        %1337 = vmatprep.subr.bf16.mxu0 0
        %1338 = vmatpush1.bf16.xpose.msra.mxu0 0
        %1339 = vmatprep.subr.bf16.mxu0 0
        %1340 = vmatpush1.bf16.xpose.msra.mxu0 0
        %1341 = vmatprep.subr.bf16.mxu0 0
        %1342 = vmatpush1.bf16.xpose.msra.mxu0 0
        %1343 = vmatprep.subr.bf16.mxu0 0
        %1344 = vmatpush1.bf16.xpose.msra.mxu0 0
        %1345 = vmatprep.subr.bf16.mxu0 0
        %1346 = vmatpush1.bf16.xpose.msra.mxu0 0
        %1347 = vmatprep.subr.bf16.mxu0 0
        %1348 = vmatpush1.bf16.xpose.msra.mxu0 0
        %1349 = vmatprep.subr.bf16.mxu0 0
        %1350 = vmatpush1.bf16.xpose.msra.mxu0 0
        %1351 = vmatprep.subr.bf16.mxu0 0
        %1352 = vmatpush1.bf16.xpose.msra.mxu0 0
        %1353 = vmatprep.mubr.bf16.mxu0 0
        %1354 = vmatmul.mubr.bf16.gmra.mrb[0].mxu0 %v1137
        %v1355 = vpop.f32.mrb[0].mxu0
        %v1356 = vadd.f32 0.0, %v1355
        %v1357 = vpop.f32.mrb[0].mxu0
        %v1358 = vpop.f32.mrb[0].mxu0
        %v1359 = vadd.f32 0.0, %v1358
        %v1360 = vpop.f32.mrb[0].mxu0
        %1361 = vdwg.mxu0
        %1362 = vmatprep.subr.bf16.mxu0 0
        %1363 = vmatpush1.bf16.xpose.msra.mxu0 %v1146
        %1364 = vmatprep.subr.bf16.mxu0 0
        %1365 = vmatpush1.bf16.xpose.msra.mxu0 0
        %1366 = vmatprep.subr.bf16.mxu0 0
        %1367 = vmatpush1.bf16.xpose.msra.mxu0 0
        %1368 = vmatprep.subr.bf16.mxu0 0
        %1369 = vmatpush1.bf16.xpose.msra.mxu0 0
        %1370 = vmatprep.subr.bf16.mxu0 0
        %1371 = vmatpush1.bf16.xpose.msra.mxu0 0
        %1372 = vmatprep.subr.bf16.mxu0 0
        %1373 = vmatpush1.bf16.xpose.msra.mxu0 0
        %1374 = vmatprep.subr.bf16.mxu0 0
        %1375 = vmatpush1.bf16.xpose.msra.mxu0 0
        %1376 = vmatprep.subr.bf16.mxu0 0
        %1377 = vmatpush1.bf16.xpose.msra.mxu0 0
        %1378 = vmatprep.subr.bf16.mxu0 0
        %1379 = vmatpush1.bf16.xpose.msra.mxu0 0
        %1380 = vmatprep.subr.bf16.mxu0 0
        %1381 = vmatpush1.bf16.xpose.msra.mxu0 0
        %1382 = vmatprep.subr.bf16.mxu0 0
        %1383 = vmatpush1.bf16.xpose.msra.mxu0 0
        %1384 = vmatprep.subr.bf16.mxu0 0
        %1385 = vmatpush1.bf16.xpose.msra.mxu0 0
        %1386 = vmatprep.subr.bf16.mxu0 0
        %1387 = vmatpush1.bf16.xpose.msra.mxu0 0
        %1388 = vmatprep.subr.bf16.mxu0 0
        %1389 = vmatpush1.bf16.xpose.msra.mxu0 0
        %1390 = vmatprep.subr.bf16.mxu0 0
        %1391 = vmatpush1.bf16.xpose.msra.mxu0 0
        %1392 = vmatprep.subr.bf16.mxu0 0
        %1393 = vmatpush1.bf16.xpose.msra.mxu0 0
        %1394 = vmatprep.mubr.bf16.mxu0 0
        %1395 = vmatmul.mubr.bf16.gmra.mrb[0].mxu0 %v1138
        %v1396 = vpop.f32.mrb[0].mxu0
        %v1397 = vadd.f32 0.0, %v1396
        %v1398 = vpop.f32.mrb[0].mxu0
        %v1399 = vpop.f32.mrb[0].mxu0
        %v1400 = vadd.f32 0.0, %v1399
        %v1401 = vpop.f32.mrb[0].mxu0
        %1402 = vdwg.mxu0
        %1403 = vmatprep.subr.bf16.mxu0 0
        %1404 = vmatpush1.bf16.xpose.msra.mxu0 %v1147
        %1405 = vmatprep.subr.bf16.mxu0 0
        %1406 = vmatpush1.bf16.xpose.msra.mxu0 0
        %1407 = vmatprep.subr.bf16.mxu0 0
        %1408 = vmatpush1.bf16.xpose.msra.mxu0 0
        %1409 = vmatprep.subr.bf16.mxu0 0
        %1410 = vmatpush1.bf16.xpose.msra.mxu0 0
        %1411 = vmatprep.subr.bf16.mxu0 0
        %1412 = vmatpush1.bf16.xpose.msra.mxu0 0
        %1413 = vmatprep.subr.bf16.mxu0 0
        %1414 = vmatpush1.bf16.xpose.msra.mxu0 0
        %1415 = vmatprep.subr.bf16.mxu0 0
        %1416 = vmatpush1.bf16.xpose.msra.mxu0 0
        %1417 = vmatprep.subr.bf16.mxu0 0
        %1418 = vmatpush1.bf16.xpose.msra.mxu0 0
        %1419 = vmatprep.subr.bf16.mxu0 0
        %1420 = vmatpush1.bf16.xpose.msra.mxu0 0
        %1421 = vmatprep.subr.bf16.mxu0 0
        %1422 = vmatpush1.bf16.xpose.msra.mxu0 0
        %1423 = vmatprep.subr.bf16.mxu0 0
        %1424 = vmatpush1.bf16.xpose.msra.mxu0 0
        %1425 = vmatprep.subr.bf16.mxu0 0
        %1426 = vmatpush1.bf16.xpose.msra.mxu0 0
        %1427 = vmatprep.subr.bf16.mxu0 0
        %1428 = vmatpush1.bf16.xpose.msra.mxu0 0
        %1429 = vmatprep.subr.bf16.mxu0 0
        %1430 = vmatpush1.bf16.xpose.msra.mxu0 0
        %1431 = vmatprep.subr.bf16.mxu0 0
        %1432 = vmatpush1.bf16.xpose.msra.mxu0 0
        %1433 = vmatprep.subr.bf16.mxu0 0
        %1434 = vmatpush1.bf16.xpose.msra.mxu0 0
        %1435 = vmatprep.mubr.bf16.mxu0 0
        %1436 = vmatmul.mubr.bf16.gmra.mrb[0].mxu0 %v1139
        %v1437 = vpop.f32.mrb[0].mxu0
        %v1438 = vadd.f32 0.0, %v1437
        %v1439 = vpop.f32.mrb[0].mxu0
        %v1440 = vpop.f32.mrb[0].mxu0
        %v1441 = vadd.f32 0.0, %v1440
        %v1442 = vpop.f32.mrb[0].mxu0
        %1443 = vdwg.mxu0
        %1444 = vmatprep.subr.bf16.mxu0 0
        %1445 = vmatpush1.bf16.xpose.msra.mxu0 %v1148
        %1446 = vmatprep.subr.bf16.mxu0 0
        %1447 = vmatpush1.bf16.xpose.msra.mxu0 0
        %1448 = vmatprep.subr.bf16.mxu0 0
        %1449 = vmatpush1.bf16.xpose.msra.mxu0 0
        %1450 = vmatprep.subr.bf16.mxu0 0
        %1451 = vmatpush1.bf16.xpose.msra.mxu0 0
        %1452 = vmatprep.subr.bf16.mxu0 0
        %1453 = vmatpush1.bf16.xpose.msra.mxu0 0
        %1454 = vmatprep.subr.bf16.mxu0 0
        %1455 = vmatpush1.bf16.xpose.msra.mxu0 0
        %1456 = vmatprep.subr.bf16.mxu0 0
        %1457 = vmatpush1.bf16.xpose.msra.mxu0 0
        %1458 = vmatprep.subr.bf16.mxu0 0
        %1459 = vmatpush1.bf16.xpose.msra.mxu0 0
        %1460 = vmatprep.subr.bf16.mxu0 0
        %1461 = vmatpush1.bf16.xpose.msra.mxu0 0
        %1462 = vmatprep.subr.bf16.mxu0 0
        %1463 = vmatpush1.bf16.xpose.msra.mxu0 0
        %1464 = vmatprep.subr.bf16.mxu0 0
        %1465 = vmatpush1.bf16.xpose.msra.mxu0 0
        %1466 = vmatprep.subr.bf16.mxu0 0
        %1467 = vmatpush1.bf16.xpose.msra.mxu0 0
        %1468 = vmatprep.subr.bf16.mxu0 0
        %1469 = vmatpush1.bf16.xpose.msra.mxu0 0
        %1470 = vmatprep.subr.bf16.mxu0 0
        %1471 = vmatpush1.bf16.xpose.msra.mxu0 0
        %1472 = vmatprep.subr.bf16.mxu0 0
        %1473 = vmatpush1.bf16.xpose.msra.mxu0 0
        %1474 = vmatprep.subr.bf16.mxu0 0
        %1475 = vmatpush1.bf16.xpose.msra.mxu0 0
        %1476 = vmatprep.mubr.bf16.mxu0 0
        %1477 = vmatmul.mubr.bf16.gmra.mrb[0].mxu0 %v1140
        %v1478 = vpop.f32.mrb[0].mxu0
        %v1479 = vadd.f32 0.0, %v1478
        %v1480 = vpop.f32.mrb[0].mxu0
        %v1481 = vpop.f32.mrb[0].mxu0
        %v1482 = vadd.f32 0.0, %v1481
        %v1483 = vpop.f32.mrb[0].mxu0
        %1484 = vdwg.mxu0
        %v1485 = vmul.f32 %v1192, 0.088388346
        %v1486 = vmul.f32 %v1195, 0.088388346
        %v1487 = vmul.f32 %v1233, 0.088388346
        %v1488 = vmul.f32 %v1236, 0.088388346
        %v1489 = vmul.f32 %v1274, 0.088388346
        %v1490 = vmul.f32 %v1277, 0.088388346
        %v1491 = vmul.f32 %v1315, 0.088388346
        %v1492 = vmul.f32 %v1318, 0.088388346
        %v1493 = vmul.f32 %v1356, 0.088388346
        %v1494 = vmul.f32 %v1359, 0.088388346
        %v1495 = vmul.f32 %v1397, 0.088388346
        %v1496 = vmul.f32 %v1400, 0.088388346
        %v1497 = vmul.f32 %v1438, 0.088388346
        %v1498 = vmul.f32 %v1441, 0.088388346
        %v1499 = vmul.f32 %v1479, 0.088388346
        %v1500 = vmul.f32 %v1482, 0.088388346
        %v1501 = vsub.f32 %v634, 1.0
        %v1502 = vsub.f32 %v635, 1.0
        %v1503 = vsub.f32 %v636, 1.0
        %v1504 = vsub.f32 %v637, 1.0
        %v1505 = vsub.f32 %v638, 1.0
        %v1506 = vsub.f32 %v639, 1.0
        %v1507 = vsub.f32 %v640, 1.0
        %v1508 = vsub.f32 %v641, 1.0
        %v1509 = vmul.f32 %v1501, 1e+09
        %v1510 = vmul.f32 %v1502, 1e+09
        %v1511 = vmul.f32 %v1503, 1e+09
        %v1512 = vmul.f32 %v1504, 1e+09
        %v1513 = vmul.f32 %v1505, 1e+09
        %v1514 = vmul.f32 %v1506, 1e+09
        %v1515 = vmul.f32 %v1507, 1e+09
        %v1516 = vmul.f32 %v1508, 1e+09
        %v1525 = vlaneseq
        %v1526 = vshrl.u32 %v1525, 7
        %v1527 = vsub.s32 0, %v1526
        %v1528 = vrot.slane %v1509, %v1527
        %v1529 = vlaneseq
        %v1530 = vshrl.u32 %v1529, 7
        %v1531 = vsub.s32 0, %v1530
        %v1532 = vrot.slane %v1510, %v1531
        %v1533 = vlaneseq
        %v1534 = vshrl.u32 %v1533, 7
        %v1535 = vsub.s32 0, %v1534
        %v1536 = vrot.slane %v1511, %v1535
        %v1537 = vlaneseq
        %v1538 = vshrl.u32 %v1537, 7
        %v1539 = vsub.s32 0, %v1538
        %v1540 = vrot.slane %v1512, %v1539
        %v1541 = vlaneseq
        %v1542 = vshrl.u32 %v1541, 7
        %v1543 = vsub.s32 0, %v1542
        %v1544 = vrot.slane %v1513, %v1543
        %v1545 = vlaneseq
        %v1546 = vshrl.u32 %v1545, 7
        %v1547 = vsub.s32 0, %v1546
        %v1548 = vrot.slane %v1514, %v1547
        %v1549 = vlaneseq
        %v1550 = vshrl.u32 %v1549, 7
        %v1551 = vsub.s32 0, %v1550
        %v1552 = vrot.slane %v1515, %v1551
        %v1553 = vlaneseq
        %v1554 = vshrl.u32 %v1553, 7
        %v1555 = vsub.s32 0, %v1554
        %v1556 = vrot.slane %v1516, %v1555
        %v1565 = vadd.f32 %v1485, %v1528
        %v1566 = vadd.f32 %v1486, %v1528
        %v1567 = vadd.f32 %v1487, %v1532
        %v1568 = vadd.f32 %v1488, %v1532
        %v1569 = vadd.f32 %v1489, %v1536
        %v1570 = vadd.f32 %v1490, %v1536
        %v1571 = vadd.f32 %v1491, %v1540
        %v1572 = vadd.f32 %v1492, %v1540
        %v1573 = vadd.f32 %v1493, %v1544
        %v1574 = vadd.f32 %v1494, %v1544
        %v1575 = vadd.f32 %v1495, %v1548
        %v1576 = vadd.f32 %v1496, %v1548
        %v1577 = vadd.f32 %v1497, %v1552
        %v1578 = vadd.f32 %v1498, %v1552
        %v1579 = vadd.f32 %v1499, %v1556
        %v1580 = vadd.f32 %v1500, %v1556
        %vm1581 = vcmask 130048
        %v1582 = vsel %vm1581, %v1565, -inf
        %1583 = vmax.xlane.f32.xlu0 %v1582
        %v1584 = vpop.xlane.xlu0 %1583
        %v1585 = vsel %vm1581, %v1566, -inf
        %1586 = vmax.xlane.f32.xlu0 %v1585
        %v1587 = vpop.xlane.xlu0 %1586
        %v1588 = vsel %vm1581, %v1567, -inf
        %1589 = vmax.xlane.f32.xlu0 %v1588
        %v1590 = vpop.xlane.xlu0 %1589
        %v1591 = vsel %vm1581, %v1568, -inf
        %1592 = vmax.xlane.f32.xlu0 %v1591
        %v1593 = vpop.xlane.xlu0 %1592
        %v1594 = vsel %vm1581, %v1569, -inf
        %1595 = vmax.xlane.f32.xlu0 %v1594
        %v1596 = vpop.xlane.xlu0 %1595
        %v1597 = vsel %vm1581, %v1570, -inf
        %1598 = vmax.xlane.f32.xlu0 %v1597
        %v1599 = vpop.xlane.xlu0 %1598
        %v1600 = vsel %vm1581, %v1571, -inf
        %1601 = vmax.xlane.f32.xlu0 %v1600
        %v1602 = vpop.xlane.xlu0 %1601
        %v1603 = vsel %vm1581, %v1572, -inf
        %1604 = vmax.xlane.f32.xlu0 %v1603
        %v1605 = vpop.xlane.xlu0 %1604
        %v1606 = vsel %vm1581, %v1573, -inf
        %1607 = vmax.xlane.f32.xlu0 %v1606
        %v1608 = vpop.xlane.xlu0 %1607
        %v1609 = vsel %vm1581, %v1574, -inf
        %1610 = vmax.xlane.f32.xlu0 %v1609
        %v1611 = vpop.xlane.xlu0 %1610
        %v1612 = vsel %vm1581, %v1575, -inf
        %1613 = vmax.xlane.f32.xlu0 %v1612
        %v1614 = vpop.xlane.xlu0 %1613
        %v1615 = vsel %vm1581, %v1576, -inf
        %1616 = vmax.xlane.f32.xlu0 %v1615
        %v1617 = vpop.xlane.xlu0 %1616
        %v1618 = vsel %vm1581, %v1577, -inf
        %1619 = vmax.xlane.f32.xlu0 %v1618
        %v1620 = vpop.xlane.xlu0 %1619
        %v1621 = vsel %vm1581, %v1578, -inf
        %1622 = vmax.xlane.f32.xlu0 %v1621
        %v1623 = vpop.xlane.xlu0 %1622
        %v1624 = vsel %vm1581, %v1579, -inf
        %1625 = vmax.xlane.f32.xlu0 %v1624
        %v1626 = vpop.xlane.xlu0 %1625
        %v1627 = vsel %vm1581, %v1580, -inf
        %1628 = vmax.xlane.f32.xlu0 %v1627
        %v1629 = vpop.xlane.xlu0 %1628
        %v1630 = vsub.f32 %v1565, %v1584
        %v1631 = vsub.f32 %v1566, %v1587
        %v1632 = vsub.f32 %v1567, %v1590
        %v1633 = vsub.f32 %v1568, %v1593
        %v1634 = vsub.f32 %v1569, %v1596
        %v1635 = vsub.f32 %v1570, %v1599
        %v1636 = vsub.f32 %v1571, %v1602
        %v1637 = vsub.f32 %v1572, %v1605
        %v1638 = vsub.f32 %v1573, %v1608
        %v1639 = vsub.f32 %v1574, %v1611
        %v1640 = vsub.f32 %v1575, %v1614
        %v1641 = vsub.f32 %v1576, %v1617
        %v1642 = vsub.f32 %v1577, %v1620
        %v1643 = vsub.f32 %v1578, %v1623
        %v1644 = vsub.f32 %v1579, %v1626
        %v1645 = vsub.f32 %v1580, %v1629
        %v1646 = vmul.f32 %v1630, 1.442695
        %v1647 = vpow.pop %v1646
        %v1648 = vmul.f32 %v1631, 1.442695
        %v1649 = vpow.pop %v1648
        %v1650 = vmul.f32 %v1632, 1.442695
        %v1651 = vpow.pop %v1650
        %v1652 = vmul.f32 %v1633, 1.442695
        %v1653 = vpow.pop %v1652
        %v1654 = vmul.f32 %v1634, 1.442695
        %v1655 = vpow.pop %v1654
        %v1656 = vmul.f32 %v1635, 1.442695
        %v1657 = vpow.pop %v1656
        %v1658 = vmul.f32 %v1636, 1.442695
        %v1659 = vpow.pop %v1658
        %v1660 = vmul.f32 %v1637, 1.442695
        %v1661 = vpow.pop %v1660
        %v1662 = vmul.f32 %v1638, 1.442695
        %v1663 = vpow.pop %v1662
        %v1664 = vmul.f32 %v1639, 1.442695
        %v1665 = vpow.pop %v1664
        %v1666 = vmul.f32 %v1640, 1.442695
        %v1667 = vpow.pop %v1666
        %v1668 = vmul.f32 %v1641, 1.442695
        %v1669 = vpow.pop %v1668
        %v1670 = vmul.f32 %v1642, 1.442695
        %v1671 = vpow.pop %v1670
        %v1672 = vmul.f32 %v1643, 1.442695
        %v1673 = vpow.pop %v1672
        %v1674 = vmul.f32 %v1644, 1.442695
        %v1675 = vpow.pop %v1674
        %v1676 = vmul.f32 %v1645, 1.442695
        %v1677 = vpow.pop %v1676
        %v1678 = vsel %vm1581, %v1647, 0.0
        %1679 = vadd.xlane.f32.xlu0 %v1678
        %v1680 = vpop.xlane.xlu0 %1679
        %v1681 = vsel %vm1581, %v1649, 0.0
        %1682 = vadd.xlane.f32.xlu0 %v1681
        %v1683 = vpop.xlane.xlu0 %1682
        %v1684 = vsel %vm1581, %v1651, 0.0
        %1685 = vadd.xlane.f32.xlu0 %v1684
        %v1686 = vpop.xlane.xlu0 %1685
        %v1687 = vsel %vm1581, %v1653, 0.0
        %1688 = vadd.xlane.f32.xlu0 %v1687
        %v1689 = vpop.xlane.xlu0 %1688
        %v1690 = vsel %vm1581, %v1655, 0.0
        %1691 = vadd.xlane.f32.xlu0 %v1690
        %v1692 = vpop.xlane.xlu0 %1691
        %v1693 = vsel %vm1581, %v1657, 0.0
        %1694 = vadd.xlane.f32.xlu0 %v1693
        %v1695 = vpop.xlane.xlu0 %1694
        %v1696 = vsel %vm1581, %v1659, 0.0
        %1697 = vadd.xlane.f32.xlu0 %v1696
        %v1698 = vpop.xlane.xlu0 %1697
        %v1699 = vsel %vm1581, %v1661, 0.0
        %1700 = vadd.xlane.f32.xlu0 %v1699
        %v1701 = vpop.xlane.xlu0 %1700
        %v1702 = vsel %vm1581, %v1663, 0.0
        %1703 = vadd.xlane.f32.xlu0 %v1702
        %v1704 = vpop.xlane.xlu0 %1703
        %v1705 = vsel %vm1581, %v1665, 0.0
        %1706 = vadd.xlane.f32.xlu0 %v1705
        %v1707 = vpop.xlane.xlu0 %1706
        %v1708 = vsel %vm1581, %v1667, 0.0
        %1709 = vadd.xlane.f32.xlu0 %v1708
        %v1710 = vpop.xlane.xlu0 %1709
        %v1711 = vsel %vm1581, %v1669, 0.0
        %1712 = vadd.xlane.f32.xlu0 %v1711
        %v1713 = vpop.xlane.xlu0 %1712
        %v1714 = vsel %vm1581, %v1671, 0.0
        %1715 = vadd.xlane.f32.xlu0 %v1714
        %v1716 = vpop.xlane.xlu0 %1715
        %v1717 = vsel %vm1581, %v1673, 0.0
        %1718 = vadd.xlane.f32.xlu0 %v1717
        %v1719 = vpop.xlane.xlu0 %1718
        %v1720 = vsel %vm1581, %v1675, 0.0
        %1721 = vadd.xlane.f32.xlu0 %v1720
        %v1722 = vpop.xlane.xlu0 %1721
        %v1723 = vsel %vm1581, %v1677, 0.0
        %1724 = vadd.xlane.f32.xlu0 %v1723
        %v1725 = vpop.xlane.xlu0 %1724
        %v1726 = vrcp.pop %v1680
        %v1727 = vrcp.pop %v1683
        %v1728 = vrcp.pop %v1686
        %v1729 = vrcp.pop %v1689
        %v1730 = vrcp.pop %v1692
        %v1731 = vrcp.pop %v1695
        %v1732 = vrcp.pop %v1698
        %v1733 = vrcp.pop %v1701
        %v1734 = vrcp.pop %v1704
        %v1735 = vrcp.pop %v1707
        %v1736 = vrcp.pop %v1710
        %v1737 = vrcp.pop %v1713
        %v1738 = vrcp.pop %v1716
        %v1739 = vrcp.pop %v1719
        %v1740 = vrcp.pop %v1722
        %v1741 = vrcp.pop %v1725
        %v1742 = vmul.f32 %v1647, %v1726
        %v1743 = vmul.f32 %v1649, %v1727
        %v1744 = vmul.f32 %v1651, %v1728
        %v1745 = vmul.f32 %v1653, %v1729
        %v1746 = vmul.f32 %v1655, %v1730
        %v1747 = vmul.f32 %v1657, %v1731
        %v1748 = vmul.f32 %v1659, %v1732
        %v1749 = vmul.f32 %v1661, %v1733
        %v1750 = vmul.f32 %v1663, %v1734
        %v1751 = vmul.f32 %v1665, %v1735
        %v1752 = vmul.f32 %v1667, %v1736
        %v1753 = vmul.f32 %v1669, %v1737
        %v1754 = vmul.f32 %v1671, %v1738
        %v1755 = vmul.f32 %v1673, %v1739
        %v1756 = vmul.f32 %v1675, %v1740
        %v1757 = vmul.f32 %v1677, %v1741
        %v1758 = vpack.c.bf16 %v1743, %v1742
        %v1759 = vpack.c.bf16 %v1745, %v1744
        %v1760 = vpack.c.bf16 %v1747, %v1746
        %v1761 = vpack.c.bf16 %v1749, %v1748
        %v1762 = vpack.c.bf16 %v1751, %v1750
        %v1763 = vpack.c.bf16 %v1753, %v1752
        %v1764 = vpack.c.bf16 %v1755, %v1754
        %v1765 = vpack.c.bf16 %v1757, %v1756
        %v1767 = vsel %vm1581, %v1758, 0
        %1769 = vmatprep.subr.bf16.mxu0 0
        %1770 = vmatpush1.bf16.msra.mxu0 %v1149
        %1771 = vmatprep.subr.bf16.mxu0 0
        %1772 = vmatpush1.bf16.msra.mxu0 0
        %1773 = vmatprep.subr.bf16.mxu0 0
        %1774 = vmatpush1.bf16.msra.mxu0 0
        %1775 = vmatprep.subr.bf16.mxu0 0
        %1776 = vmatpush1.bf16.msra.mxu0 0
        %1777 = vmatprep.subr.bf16.mxu0 0
        %1778 = vmatpush1.bf16.msra.mxu0 0
        %1779 = vmatprep.subr.bf16.mxu0 0
        %1780 = vmatpush1.bf16.msra.mxu0 0
        %1781 = vmatprep.subr.bf16.mxu0 0
        %1782 = vmatpush1.bf16.msra.mxu0 0
        %1783 = vmatprep.subr.bf16.mxu0 0
        %1784 = vmatpush1.bf16.msra.mxu0 0
        %1785 = vmatprep.subr.bf16.mxu0 0
        %1786 = vmatpush1.bf16.msra.mxu0 0
        %1787 = vmatprep.subr.bf16.mxu0 0
        %1788 = vmatpush1.bf16.msra.mxu0 0
        %1789 = vmatprep.subr.bf16.mxu0 0
        %1790 = vmatpush1.bf16.msra.mxu0 0
        %1791 = vmatprep.subr.bf16.mxu0 0
        %1792 = vmatpush1.bf16.msra.mxu0 0
        %1793 = vmatprep.subr.bf16.mxu0 0
        %1794 = vmatpush1.bf16.msra.mxu0 0
        %1795 = vmatprep.subr.bf16.mxu0 0
        %1796 = vmatpush1.bf16.msra.mxu0 0
        %1797 = vmatprep.subr.bf16.mxu0 0
        %1798 = vmatpush1.bf16.msra.mxu0 0
        %1799 = vmatprep.subr.bf16.mxu0 0
        %1800 = vmatpush1.bf16.msra.mxu0 0
        %1801 = vmatprep.mubr.bf16.mxu0 0
        %1802 = vmatmul.mubr.bf16.gmra.mrb[0].mxu0 %v1767
        %v1803 = vpop.f32.mrb[0].mxu0
        %v1804 = vadd.f32 0.0, %v1803
        %v1805 = vpop.f32.mrb[0].mxu0
        %v1806 = vpop.f32.mrb[0].mxu0
        %v1807 = vadd.f32 0.0, %v1806
        %v1808 = vpop.f32.mrb[0].mxu0
        %1809 = vdwg.mxu0
        %v1811 = vsel %vm1581, %v1759, 0
        %1813 = vmatprep.subr.bf16.mxu0 0
        %1814 = vmatpush1.bf16.msra.mxu0 %v1150
        %1815 = vmatprep.subr.bf16.mxu0 0
        %1816 = vmatpush1.bf16.msra.mxu0 0
        %1817 = vmatprep.subr.bf16.mxu0 0
        %1818 = vmatpush1.bf16.msra.mxu0 0
        %1819 = vmatprep.subr.bf16.mxu0 0
        %1820 = vmatpush1.bf16.msra.mxu0 0
        %1821 = vmatprep.subr.bf16.mxu0 0
        %1822 = vmatpush1.bf16.msra.mxu0 0
        %1823 = vmatprep.subr.bf16.mxu0 0
        %1824 = vmatpush1.bf16.msra.mxu0 0
        %1825 = vmatprep.subr.bf16.mxu0 0
        %1826 = vmatpush1.bf16.msra.mxu0 0
        %1827 = vmatprep.subr.bf16.mxu0 0
        %1828 = vmatpush1.bf16.msra.mxu0 0
        %1829 = vmatprep.subr.bf16.mxu0 0
        %1830 = vmatpush1.bf16.msra.mxu0 0
        %1831 = vmatprep.subr.bf16.mxu0 0
        %1832 = vmatpush1.bf16.msra.mxu0 0
        %1833 = vmatprep.subr.bf16.mxu0 0
        %1834 = vmatpush1.bf16.msra.mxu0 0
        %1835 = vmatprep.subr.bf16.mxu0 0
        %1836 = vmatpush1.bf16.msra.mxu0 0
        %1837 = vmatprep.subr.bf16.mxu0 0
        %1838 = vmatpush1.bf16.msra.mxu0 0
        %1839 = vmatprep.subr.bf16.mxu0 0
        %1840 = vmatpush1.bf16.msra.mxu0 0
        %1841 = vmatprep.subr.bf16.mxu0 0
        %1842 = vmatpush1.bf16.msra.mxu0 0
        %1843 = vmatprep.subr.bf16.mxu0 0
        %1844 = vmatpush1.bf16.msra.mxu0 0
        %1845 = vmatprep.mubr.bf16.mxu0 0
        %1846 = vmatmul.mubr.bf16.gmra.mrb[0].mxu0 %v1811
        %v1847 = vpop.f32.mrb[0].mxu0
        %v1848 = vadd.f32 0.0, %v1847
        %v1849 = vpop.f32.mrb[0].mxu0
        %v1850 = vpop.f32.mrb[0].mxu0
        %v1851 = vadd.f32 0.0, %v1850
        %v1852 = vpop.f32.mrb[0].mxu0
        %1853 = vdwg.mxu0
        %v1855 = vsel %vm1581, %v1760, 0
        %1857 = vmatprep.subr.bf16.mxu0 0
        %1858 = vmatpush1.bf16.msra.mxu0 %v1151
        %1859 = vmatprep.subr.bf16.mxu0 0
        %1860 = vmatpush1.bf16.msra.mxu0 0
        %1861 = vmatprep.subr.bf16.mxu0 0
        %1862 = vmatpush1.bf16.msra.mxu0 0
        %1863 = vmatprep.subr.bf16.mxu0 0
        %1864 = vmatpush1.bf16.msra.mxu0 0
        %1865 = vmatprep.subr.bf16.mxu0 0
        %1866 = vmatpush1.bf16.msra.mxu0 0
        %1867 = vmatprep.subr.bf16.mxu0 0
        %1868 = vmatpush1.bf16.msra.mxu0 0
        %1869 = vmatprep.subr.bf16.mxu0 0
        %1870 = vmatpush1.bf16.msra.mxu0 0
        %1871 = vmatprep.subr.bf16.mxu0 0
        %1872 = vmatpush1.bf16.msra.mxu0 0
        %1873 = vmatprep.subr.bf16.mxu0 0
        %1874 = vmatpush1.bf16.msra.mxu0 0
        %1875 = vmatprep.subr.bf16.mxu0 0
        %1876 = vmatpush1.bf16.msra.mxu0 0
        %1877 = vmatprep.subr.bf16.mxu0 0
        %1878 = vmatpush1.bf16.msra.mxu0 0
        %1879 = vmatprep.subr.bf16.mxu0 0
        %1880 = vmatpush1.bf16.msra.mxu0 0
        %1881 = vmatprep.subr.bf16.mxu0 0
        %1882 = vmatpush1.bf16.msra.mxu0 0
        %1883 = vmatprep.subr.bf16.mxu0 0
        %1884 = vmatpush1.bf16.msra.mxu0 0
        %1885 = vmatprep.subr.bf16.mxu0 0
        %1886 = vmatpush1.bf16.msra.mxu0 0
        %1887 = vmatprep.subr.bf16.mxu0 0
        %1888 = vmatpush1.bf16.msra.mxu0 0
        %1889 = vmatprep.mubr.bf16.mxu0 0
        %1890 = vmatmul.mubr.bf16.gmra.mrb[0].mxu0 %v1855
        %v1891 = vpop.f32.mrb[0].mxu0
        %v1892 = vadd.f32 0.0, %v1891
        %v1893 = vpop.f32.mrb[0].mxu0
        %v1894 = vpop.f32.mrb[0].mxu0
        %v1895 = vadd.f32 0.0, %v1894
        %v1896 = vpop.f32.mrb[0].mxu0
        %1897 = vdwg.mxu0
        %v1899 = vsel %vm1581, %v1761, 0
        %1901 = vmatprep.subr.bf16.mxu0 0
        %1902 = vmatpush1.bf16.msra.mxu0 %v1152
        %1903 = vmatprep.subr.bf16.mxu0 0
        %1904 = vmatpush1.bf16.msra.mxu0 0
        %1905 = vmatprep.subr.bf16.mxu0 0
        %1906 = vmatpush1.bf16.msra.mxu0 0
        %1907 = vmatprep.subr.bf16.mxu0 0
        %1908 = vmatpush1.bf16.msra.mxu0 0
        %1909 = vmatprep.subr.bf16.mxu0 0
        %1910 = vmatpush1.bf16.msra.mxu0 0
        %1911 = vmatprep.subr.bf16.mxu0 0
        %1912 = vmatpush1.bf16.msra.mxu0 0
        %1913 = vmatprep.subr.bf16.mxu0 0
        %1914 = vmatpush1.bf16.msra.mxu0 0
        %1915 = vmatprep.subr.bf16.mxu0 0
        %1916 = vmatpush1.bf16.msra.mxu0 0
        %1917 = vmatprep.subr.bf16.mxu0 0
        %1918 = vmatpush1.bf16.msra.mxu0 0
        %1919 = vmatprep.subr.bf16.mxu0 0
        %1920 = vmatpush1.bf16.msra.mxu0 0
        %1921 = vmatprep.subr.bf16.mxu0 0
        %1922 = vmatpush1.bf16.msra.mxu0 0
        %1923 = vmatprep.subr.bf16.mxu0 0
        %1924 = vmatpush1.bf16.msra.mxu0 0
        %1925 = vmatprep.subr.bf16.mxu0 0
        %1926 = vmatpush1.bf16.msra.mxu0 0
        %1927 = vmatprep.subr.bf16.mxu0 0
        %1928 = vmatpush1.bf16.msra.mxu0 0
        %1929 = vmatprep.subr.bf16.mxu0 0
        %1930 = vmatpush1.bf16.msra.mxu0 0
        %1931 = vmatprep.subr.bf16.mxu0 0
        %1932 = vmatpush1.bf16.msra.mxu0 0
        %1933 = vmatprep.mubr.bf16.mxu0 0
        %1934 = vmatmul.mubr.bf16.gmra.mrb[0].mxu0 %v1899
        %v1935 = vpop.f32.mrb[0].mxu0
        %v1936 = vadd.f32 0.0, %v1935
        %v1937 = vpop.f32.mrb[0].mxu0
        %v1938 = vpop.f32.mrb[0].mxu0
        %v1939 = vadd.f32 0.0, %v1938
        %v1940 = vpop.f32.mrb[0].mxu0
        %1941 = vdwg.mxu0
        %v1943 = vsel %vm1581, %v1762, 0
        %1945 = vmatprep.subr.bf16.mxu0 0
        %1946 = vmatpush1.bf16.msra.mxu0 %v1153
        %1947 = vmatprep.subr.bf16.mxu0 0
        %1948 = vmatpush1.bf16.msra.mxu0 0
        %1949 = vmatprep.subr.bf16.mxu0 0
        %1950 = vmatpush1.bf16.msra.mxu0 0
        %1951 = vmatprep.subr.bf16.mxu0 0
        %1952 = vmatpush1.bf16.msra.mxu0 0
        %1953 = vmatprep.subr.bf16.mxu0 0
        %1954 = vmatpush1.bf16.msra.mxu0 0
        %1955 = vmatprep.subr.bf16.mxu0 0
        %1956 = vmatpush1.bf16.msra.mxu0 0
        %1957 = vmatprep.subr.bf16.mxu0 0
        %1958 = vmatpush1.bf16.msra.mxu0 0
        %1959 = vmatprep.subr.bf16.mxu0 0
        %1960 = vmatpush1.bf16.msra.mxu0 0
        %1961 = vmatprep.subr.bf16.mxu0 0
        %1962 = vmatpush1.bf16.msra.mxu0 0
        %1963 = vmatprep.subr.bf16.mxu0 0
        %1964 = vmatpush1.bf16.msra.mxu0 0
        %1965 = vmatprep.subr.bf16.mxu0 0
        %1966 = vmatpush1.bf16.msra.mxu0 0
        %1967 = vmatprep.subr.bf16.mxu0 0
        %1968 = vmatpush1.bf16.msra.mxu0 0
        %1969 = vmatprep.subr.bf16.mxu0 0
        %1970 = vmatpush1.bf16.msra.mxu0 0
        %1971 = vmatprep.subr.bf16.mxu0 0
        %1972 = vmatpush1.bf16.msra.mxu0 0
        %1973 = vmatprep.subr.bf16.mxu0 0
        %1974 = vmatpush1.bf16.msra.mxu0 0
        %1975 = vmatprep.subr.bf16.mxu0 0
        %1976 = vmatpush1.bf16.msra.mxu0 0
        %1977 = vmatprep.mubr.bf16.mxu0 0
        %1978 = vmatmul.mubr.bf16.gmra.mrb[0].mxu0 %v1943
        %v1979 = vpop.f32.mrb[0].mxu0
        %v1980 = vadd.f32 0.0, %v1979
        %v1981 = vpop.f32.mrb[0].mxu0
        %v1982 = vpop.f32.mrb[0].mxu0
        %v1983 = vadd.f32 0.0, %v1982
        %v1984 = vpop.f32.mrb[0].mxu0
        %1985 = vdwg.mxu0
        %v1987 = vsel %vm1581, %v1763, 0
        %1989 = vmatprep.subr.bf16.mxu0 0
        %1990 = vmatpush1.bf16.msra.mxu0 %v1154
        %1991 = vmatprep.subr.bf16.mxu0 0
        %1992 = vmatpush1.bf16.msra.mxu0 0
        %1993 = vmatprep.subr.bf16.mxu0 0
        %1994 = vmatpush1.bf16.msra.mxu0 0
        %1995 = vmatprep.subr.bf16.mxu0 0
        %1996 = vmatpush1.bf16.msra.mxu0 0
        %1997 = vmatprep.subr.bf16.mxu0 0
        %1998 = vmatpush1.bf16.msra.mxu0 0
        %1999 = vmatprep.subr.bf16.mxu0 0
        %2000 = vmatpush1.bf16.msra.mxu0 0
        %2001 = vmatprep.subr.bf16.mxu0 0
        %2002 = vmatpush1.bf16.msra.mxu0 0
        %2003 = vmatprep.subr.bf16.mxu0 0
        %2004 = vmatpush1.bf16.msra.mxu0 0
        %2005 = vmatprep.subr.bf16.mxu0 0
        %2006 = vmatpush1.bf16.msra.mxu0 0
        %2007 = vmatprep.subr.bf16.mxu0 0
        %2008 = vmatpush1.bf16.msra.mxu0 0
        %2009 = vmatprep.subr.bf16.mxu0 0
        %2010 = vmatpush1.bf16.msra.mxu0 0
        %2011 = vmatprep.subr.bf16.mxu0 0
        %2012 = vmatpush1.bf16.msra.mxu0 0
        %2013 = vmatprep.subr.bf16.mxu0 0
        %2014 = vmatpush1.bf16.msra.mxu0 0
        %2015 = vmatprep.subr.bf16.mxu0 0
        %2016 = vmatpush1.bf16.msra.mxu0 0
        %2017 = vmatprep.subr.bf16.mxu0 0
        %2018 = vmatpush1.bf16.msra.mxu0 0
        %2019 = vmatprep.subr.bf16.mxu0 0
        %2020 = vmatpush1.bf16.msra.mxu0 0
        %2021 = vmatprep.mubr.bf16.mxu0 0
        %2022 = vmatmul.mubr.bf16.gmra.mrb[0].mxu0 %v1987
        %v2023 = vpop.f32.mrb[0].mxu0
        %v2024 = vadd.f32 0.0, %v2023
        %v2025 = vpop.f32.mrb[0].mxu0
        %v2026 = vpop.f32.mrb[0].mxu0
        %v2027 = vadd.f32 0.0, %v2026
        %v2028 = vpop.f32.mrb[0].mxu0
        %2029 = vdwg.mxu0
        %v2031 = vsel %vm1581, %v1764, 0
        %2033 = vmatprep.subr.bf16.mxu0 0
        %2034 = vmatpush1.bf16.msra.mxu0 %v1155
        %2035 = vmatprep.subr.bf16.mxu0 0
        %2036 = vmatpush1.bf16.msra.mxu0 0
        %2037 = vmatprep.subr.bf16.mxu0 0
        %2038 = vmatpush1.bf16.msra.mxu0 0
        %2039 = vmatprep.subr.bf16.mxu0 0
        %2040 = vmatpush1.bf16.msra.mxu0 0
        %2041 = vmatprep.subr.bf16.mxu0 0
        %2042 = vmatpush1.bf16.msra.mxu0 0
        %2043 = vmatprep.subr.bf16.mxu0 0
        %2044 = vmatpush1.bf16.msra.mxu0 0
        %2045 = vmatprep.subr.bf16.mxu0 0
        %2046 = vmatpush1.bf16.msra.mxu0 0
        %2047 = vmatprep.subr.bf16.mxu0 0
        %2048 = vmatpush1.bf16.msra.mxu0 0
        %2049 = vmatprep.subr.bf16.mxu0 0
        %2050 = vmatpush1.bf16.msra.mxu0 0
        %2051 = vmatprep.subr.bf16.mxu0 0
        %2052 = vmatpush1.bf16.msra.mxu0 0
        %2053 = vmatprep.subr.bf16.mxu0 0
        %2054 = vmatpush1.bf16.msra.mxu0 0
        %2055 = vmatprep.subr.bf16.mxu0 0
        %2056 = vmatpush1.bf16.msra.mxu0 0
        %2057 = vmatprep.subr.bf16.mxu0 0
        %2058 = vmatpush1.bf16.msra.mxu0 0
        %2059 = vmatprep.subr.bf16.mxu0 0
        %2060 = vmatpush1.bf16.msra.mxu0 0
        %2061 = vmatprep.subr.bf16.mxu0 0
        %2062 = vmatpush1.bf16.msra.mxu0 0
        %2063 = vmatprep.subr.bf16.mxu0 0
        %2064 = vmatpush1.bf16.msra.mxu0 0
        %2065 = vmatprep.mubr.bf16.mxu0 0
        %2066 = vmatmul.mubr.bf16.gmra.mrb[0].mxu0 %v2031
        %v2067 = vpop.f32.mrb[0].mxu0
        %v2068 = vadd.f32 0.0, %v2067
        %v2069 = vpop.f32.mrb[0].mxu0
        %v2070 = vpop.f32.mrb[0].mxu0
        %v2071 = vadd.f32 0.0, %v2070
        %v2072 = vpop.f32.mrb[0].mxu0
        %2073 = vdwg.mxu0
        %v2075 = vsel %vm1581, %v1765, 0
        %2077 = vmatprep.subr.bf16.mxu0 0
        %2078 = vmatpush1.bf16.msra.mxu0 %v1156
        %2079 = vmatprep.subr.bf16.mxu0 0
        %2080 = vmatpush1.bf16.msra.mxu0 0
        %2081 = vmatprep.subr.bf16.mxu0 0
        %2082 = vmatpush1.bf16.msra.mxu0 0
        %2083 = vmatprep.subr.bf16.mxu0 0
        %2084 = vmatpush1.bf16.msra.mxu0 0
        %2085 = vmatprep.subr.bf16.mxu0 0
        %2086 = vmatpush1.bf16.msra.mxu0 0
        %2087 = vmatprep.subr.bf16.mxu0 0
        %2088 = vmatpush1.bf16.msra.mxu0 0
        %2089 = vmatprep.subr.bf16.mxu0 0
        %2090 = vmatpush1.bf16.msra.mxu0 0
        %2091 = vmatprep.subr.bf16.mxu0 0
        %2092 = vmatpush1.bf16.msra.mxu0 0
        %2093 = vmatprep.subr.bf16.mxu0 0
        %2094 = vmatpush1.bf16.msra.mxu0 0
        %2095 = vmatprep.subr.bf16.mxu0 0
        %2096 = vmatpush1.bf16.msra.mxu0 0
        %2097 = vmatprep.subr.bf16.mxu0 0
        %2098 = vmatpush1.bf16.msra.mxu0 0
        %2099 = vmatprep.subr.bf16.mxu0 0
        %2100 = vmatpush1.bf16.msra.mxu0 0
        %2101 = vmatprep.subr.bf16.mxu0 0
        %2102 = vmatpush1.bf16.msra.mxu0 0
        %2103 = vmatprep.subr.bf16.mxu0 0
        %2104 = vmatpush1.bf16.msra.mxu0 0
        %2105 = vmatprep.subr.bf16.mxu0 0
        %2106 = vmatpush1.bf16.msra.mxu0 0
        %2107 = vmatprep.subr.bf16.mxu0 0
        %2108 = vmatpush1.bf16.msra.mxu0 0
        %2109 = vmatprep.mubr.bf16.mxu0 0
        %2110 = vmatmul.mubr.bf16.gmra.mrb[0].mxu0 %v2075
        %v2111 = vpop.f32.mrb[0].mxu0
        %v2112 = vadd.f32 0.0, %v2111
        %v2113 = vpop.f32.mrb[0].mxu0
        %v2114 = vpop.f32.mrb[0].mxu0
        %v2115 = vadd.f32 0.0, %v2114
        %v2116 = vpop.f32.mrb[0].mxu0
        %2117 = vdwg.mxu0
        %v2118 = vpack.c.bf16 %v1807, %v1804
        %v2119 = vpack.c.bf16 %v1851, %v1848
        %v2120 = vpack.c.bf16 %v1895, %v1892
        %v2121 = vpack.c.bf16 %v1939, %v1936
        %v2122 = vpack.c.bf16 %v1983, %v1980
        %v2123 = vpack.c.bf16 %v2027, %v2024
        %v2124 = vpack.c.bf16 %v2071, %v2068
        %v2125 = vpack.c.bf16 %v2115, %v2112
        %v2126 = vld [vmem:[#allocation11] sm:$0xf]
        %v2127 = vld [vmem:[#allocation11 + $0x4] sm:$0xf]
        %v2128 = vld [vmem:[#allocation11 + $0x8] sm:$0xf]
        %v2129 = vld [vmem:[#allocation11 + $0xc] sm:$0xf]
        %v2130 = vld [vmem:[#allocation11 + $0x10] sm:$0xf]
        %v2131 = vld [vmem:[#allocation11 + $0x14] sm:$0xf]
        %v2132 = vld [vmem:[#allocation11 + $0x18] sm:$0xf]
        %v2133 = vld [vmem:[#allocation11 + $0x1c] sm:$0xf]
        %v2134 = vld [vmem:[#allocation11 + $0x20] sm:$0xf]
        %v2135 = vld [vmem:[#allocation11 + $0x24] sm:$0xf]
        %v2136 = vld [vmem:[#allocation11 + $0x28] sm:$0xf]
        %v2137 = vld [vmem:[#allocation11 + $0x2c] sm:$0xf]
        %v2138 = vld [vmem:[#allocation11 + $0x30] sm:$0xf]
        %v2139 = vld [vmem:[#allocation11 + $0x34] sm:$0xf]
        %v2140 = vld [vmem:[#allocation11 + $0x38] sm:$0xf]
        %v2141 = vld [vmem:[#allocation11 + $0x3c] sm:$0xf]
        %v2158 = vunpack.c.l.b16 %v2126
        %v2159 = vunpack.c.l.b16 %v2127
        %v2160 = vunpack.c.l.b16 %v2128
        %v2161 = vunpack.c.l.b16 %v2129
        %v2162 = vunpack.c.l.b16 %v2130
        %v2163 = vunpack.c.l.b16 %v2131
        %v2164 = vunpack.c.l.b16 %v2132
        %v2165 = vunpack.c.l.b16 %v2133
        %v2166 = vunpack.c.l.b16 %v2134
        %v2167 = vunpack.c.l.b16 %v2135
        %v2168 = vunpack.c.l.b16 %v2136
        %v2169 = vunpack.c.l.b16 %v2137
        %v2170 = vunpack.c.l.b16 %v2138
        %v2171 = vunpack.c.l.b16 %v2139
        %v2172 = vunpack.c.l.b16 %v2140
        %v2173 = vunpack.c.l.b16 %v2141
        %v2174 = vpack.c.b16 %v2159, %v2158
        %v2175 = vpack.c.b16 %v2161, %v2160
        %v2176 = vpack.c.b16 %v2163, %v2162
        %v2177 = vpack.c.b16 %v2165, %v2164
        %v2178 = vpack.c.b16 %v2167, %v2166
        %v2179 = vpack.c.b16 %v2169, %v2168
        %v2180 = vpack.c.b16 %v2171, %v2170
        %v2181 = vpack.c.b16 %v2173, %v2172
        %2190 = vmatprep.subr.bf16.mxu0 0
        %2191 = vmatpush1.bf16.msra.mxu0 %v2174
        %2192 = vmatprep.subr.bf16.mxu0 0
        %2193 = vmatpush1.bf16.msra.mxu0 %v2175
        %2194 = vmatprep.subr.bf16.mxu0 0
        %2195 = vmatpush1.bf16.msra.mxu0 %v2176
        %2196 = vmatprep.subr.bf16.mxu0 0
        %2197 = vmatpush1.bf16.msra.mxu0 %v2177
        %2198 = vmatprep.subr.bf16.mxu0 0
        %2199 = vmatpush1.bf16.msra.mxu0 %v2178
        %2200 = vmatprep.subr.bf16.mxu0 0
        %2201 = vmatpush1.bf16.msra.mxu0 %v2179
        %2202 = vmatprep.subr.bf16.mxu0 0
        %2203 = vmatpush1.bf16.msra.mxu0 %v2180
        %2204 = vmatprep.subr.bf16.mxu0 0
        %2205 = vmatpush1.bf16.msra.mxu0 %v2181
        %2206 = vmatprep.subr.bf16.mxu0 0
        %2207 = vmatpush1.bf16.msra.mxu0 0
        %2208 = vmatprep.subr.bf16.mxu0 0
        %2209 = vmatpush1.bf16.msra.mxu0 0
        %2210 = vmatprep.subr.bf16.mxu0 0
        %2211 = vmatpush1.bf16.msra.mxu0 0
        %2212 = vmatprep.subr.bf16.mxu0 0
        %2213 = vmatpush1.bf16.msra.mxu0 0
        %2214 = vmatprep.subr.bf16.mxu0 0
        %2215 = vmatpush1.bf16.msra.mxu0 0
        %2216 = vmatprep.subr.bf16.mxu0 0
        %2217 = vmatpush1.bf16.msra.mxu0 0
        %2218 = vmatprep.subr.bf16.mxu0 0
        %2219 = vmatpush1.bf16.msra.mxu0 0
        %2220 = vmatprep.subr.bf16.mxu0 0
        %2221 = vmatpush1.bf16.msra.mxu0 0
        %2222 = vmatprep.mubr.bf16.mxu0 0
        %2223 = vmatmul.mubr.bf16.gmra.mrb[0].mxu0 %v2118
        %v2224 = vpop.f32.mrb[0].mxu0
        %v2225 = vadd.f32 0.0, %v2224
        %v2226 = vpop.f32.mrb[0].mxu0
        %v2227 = vpop.f32.mrb[0].mxu0
        %v2228 = vadd.f32 0.0, %v2227
        %v2229 = vpop.f32.mrb[0].mxu0
        %2230 = vmatprep.mubr.bf16.mxu0 0
        %2231 = vmatmul.mubr.bf16.gmra.mrb[0].mxu0 %v2119
        %v2232 = vpop.f32.mrb[0].mxu0
        %v2233 = vadd.f32 0.0, %v2232
        %v2234 = vpop.f32.mrb[0].mxu0
        %v2235 = vpop.f32.mrb[0].mxu0
        %v2236 = vadd.f32 0.0, %v2235
        %v2237 = vpop.f32.mrb[0].mxu0
        %2238 = vmatprep.mubr.bf16.mxu0 0
        %2239 = vmatmul.mubr.bf16.gmra.mrb[0].mxu0 %v2120
        %v2240 = vpop.f32.mrb[0].mxu0
        %v2241 = vadd.f32 0.0, %v2240
        %v2242 = vpop.f32.mrb[0].mxu0
        %v2243 = vpop.f32.mrb[0].mxu0
        %v2244 = vadd.f32 0.0, %v2243
        %v2245 = vpop.f32.mrb[0].mxu0
        %2246 = vmatprep.mubr.bf16.mxu0 0
        %2247 = vmatmul.mubr.bf16.gmra.mrb[0].mxu0 %v2121
        %v2248 = vpop.f32.mrb[0].mxu0
        %v2249 = vadd.f32 0.0, %v2248
        %v2250 = vpop.f32.mrb[0].mxu0
        %v2251 = vpop.f32.mrb[0].mxu0
        %v2252 = vadd.f32 0.0, %v2251
        %v2253 = vpop.f32.mrb[0].mxu0
        %2254 = vmatprep.mubr.bf16.mxu0 0
        %2255 = vmatmul.mubr.bf16.gmra.mrb[0].mxu0 %v2122
        %v2256 = vpop.f32.mrb[0].mxu0
        %v2257 = vadd.f32 0.0, %v2256
        %v2258 = vpop.f32.mrb[0].mxu0
        %v2259 = vpop.f32.mrb[0].mxu0
        %v2260 = vadd.f32 0.0, %v2259
        %v2261 = vpop.f32.mrb[0].mxu0
        %2262 = vmatprep.mubr.bf16.mxu0 0
        %2263 = vmatmul.mubr.bf16.gmra.mrb[0].mxu0 %v2123
        %v2264 = vpop.f32.mrb[0].mxu0
        %v2265 = vadd.f32 0.0, %v2264
        %v2266 = vpop.f32.mrb[0].mxu0
        %v2267 = vpop.f32.mrb[0].mxu0
        %v2268 = vadd.f32 0.0, %v2267
        %v2269 = vpop.f32.mrb[0].mxu0
        %2270 = vmatprep.mubr.bf16.mxu0 0
        %2271 = vmatmul.mubr.bf16.gmra.mrb[0].mxu0 %v2124
        %v2272 = vpop.f32.mrb[0].mxu0
        %v2273 = vadd.f32 0.0, %v2272
        %v2274 = vpop.f32.mrb[0].mxu0
        %v2275 = vpop.f32.mrb[0].mxu0
        %v2276 = vadd.f32 0.0, %v2275
        %v2277 = vpop.f32.mrb[0].mxu0
        %2278 = vmatprep.mubr.bf16.mxu0 0
        %2279 = vmatmul.mubr.bf16.gmra.mrb[0].mxu0 %v2125
        %v2280 = vpop.f32.mrb[0].mxu0
        %v2281 = vadd.f32 0.0, %v2280
        %v2282 = vpop.f32.mrb[0].mxu0
        %v2283 = vpop.f32.mrb[0].mxu0
        %v2284 = vadd.f32 0.0, %v2283
        %v2285 = vpop.f32.mrb[0].mxu0
        %2286 = vdwg.mxu0
        %v2287 = vadd.f32 %v618, %v2225
        %v2288 = vadd.f32 %v619, %v2228
        %v2289 = vadd.f32 %v620, %v2233
        %v2290 = vadd.f32 %v621, %v2236
        %v2291 = vadd.f32 %v622, %v2241
        %v2292 = vadd.f32 %v623, %v2244
        %v2293 = vadd.f32 %v624, %v2249
        %v2294 = vadd.f32 %v625, %v2252
        %v2295 = vadd.f32 %v626, %v2257
        %v2296 = vadd.f32 %v627, %v2260
        %v2297 = vadd.f32 %v628, %v2265
        %v2298 = vadd.f32 %v629, %v2268
        %v2299 = vadd.f32 %v630, %v2273
        %v2300 = vadd.f32 %v631, %v2276
        %v2301 = vadd.f32 %v632, %v2281
        %v2302 = vadd.f32 %v633, %v2284
        %v2303 = vld [vmem:[%s6] sm:$0x1]
        %v2304 = vld [vmem:[%s7] sm:$0x1]
        %2305 = vadd.xlane.f32.xlu0 %v2287
        %v2306 = vpop.xlane.xlu0 %2305
        %2307 = vadd.xlane.f32.xlu0 %v2288
        %v2308 = vpop.xlane.xlu0 %2307
        %2309 = vadd.xlane.f32.xlu0 %v2289
        %v2310 = vpop.xlane.xlu0 %2309
        %2311 = vadd.xlane.f32.xlu0 %v2290
        %v2312 = vpop.xlane.xlu0 %2311
        %2313 = vadd.xlane.f32.xlu0 %v2291
        %v2314 = vpop.xlane.xlu0 %2313
        %2315 = vadd.xlane.f32.xlu0 %v2292
        %v2316 = vpop.xlane.xlu0 %2315
        %2317 = vadd.xlane.f32.xlu0 %v2293
        %v2318 = vpop.xlane.xlu0 %2317
        %2319 = vadd.xlane.f32.xlu0 %v2294
        %v2320 = vpop.xlane.xlu0 %2319
        %2321 = vadd.xlane.f32.xlu0 %v2295
        %v2322 = vpop.xlane.xlu0 %2321
        %2323 = vadd.xlane.f32.xlu0 %v2296
        %v2324 = vpop.xlane.xlu0 %2323
        %2325 = vadd.xlane.f32.xlu0 %v2297
        %v2326 = vpop.xlane.xlu0 %2325
        %2327 = vadd.xlane.f32.xlu0 %v2298
        %v2328 = vpop.xlane.xlu0 %2327
        %2329 = vadd.xlane.f32.xlu0 %v2299
        %v2330 = vpop.xlane.xlu0 %2329
        %2331 = vadd.xlane.f32.xlu0 %v2300
        %v2332 = vpop.xlane.xlu0 %2331
        %2333 = vadd.xlane.f32.xlu0 %v2301
        %v2334 = vpop.xlane.xlu0 %2333
        %2335 = vadd.xlane.f32.xlu0 %v2302
        %v2336 = vpop.xlane.xlu0 %2335
        %v2337 = vrcp.pop 128.0
        %v2338 = vmul.f32 %v2306, %v2337
        %v2339 = vmul.f32 %v2308, %v2337
        %v2340 = vmul.f32 %v2310, %v2337
        %v2341 = vmul.f32 %v2312, %v2337
        %v2342 = vmul.f32 %v2314, %v2337
        %v2343 = vmul.f32 %v2316, %v2337
        %v2344 = vmul.f32 %v2318, %v2337
        %v2345 = vmul.f32 %v2320, %v2337
        %v2346 = vmul.f32 %v2322, %v2337
        %v2347 = vmul.f32 %v2324, %v2337
        %v2348 = vmul.f32 %v2326, %v2337
        %v2349 = vmul.f32 %v2328, %v2337
        %v2350 = vmul.f32 %v2330, %v2337
        %v2351 = vmul.f32 %v2332, %v2337
        %v2352 = vmul.f32 %v2334, %v2337
        %v2353 = vmul.f32 %v2336, %v2337
        %v2354 = vsub.f32 %v2287, %v2338
        %v2355 = vsub.f32 %v2288, %v2339
        %v2356 = vsub.f32 %v2289, %v2340
        %v2357 = vsub.f32 %v2290, %v2341
        %v2358 = vsub.f32 %v2291, %v2342
        %v2359 = vsub.f32 %v2292, %v2343
        %v2360 = vsub.f32 %v2293, %v2344
        %v2361 = vsub.f32 %v2294, %v2345
        %v2362 = vsub.f32 %v2295, %v2346
        %v2363 = vsub.f32 %v2296, %v2347
        %v2364 = vsub.f32 %v2297, %v2348
        %v2365 = vsub.f32 %v2298, %v2349
        %v2366 = vsub.f32 %v2299, %v2350
        %v2367 = vsub.f32 %v2300, %v2351
        %v2368 = vsub.f32 %v2301, %v2352
        %v2369 = vsub.f32 %v2302, %v2353
        %v2370 = vmul.f32 %v2354, %v2354
        %v2371 = vmul.f32 %v2355, %v2355
        %v2372 = vmul.f32 %v2356, %v2356
        %v2373 = vmul.f32 %v2357, %v2357
        %v2374 = vmul.f32 %v2358, %v2358
        %v2375 = vmul.f32 %v2359, %v2359
        %v2376 = vmul.f32 %v2360, %v2360
        %v2377 = vmul.f32 %v2361, %v2361
        %v2378 = vmul.f32 %v2362, %v2362
        %v2379 = vmul.f32 %v2363, %v2363
        %v2380 = vmul.f32 %v2364, %v2364
        %v2381 = vmul.f32 %v2365, %v2365
        %v2382 = vmul.f32 %v2366, %v2366
        %v2383 = vmul.f32 %v2367, %v2367
        %v2384 = vmul.f32 %v2368, %v2368
        %v2385 = vmul.f32 %v2369, %v2369
        %2386 = vadd.xlane.f32.xlu0 %v2370
        %v2387 = vpop.xlane.xlu0 %2386
        %2388 = vadd.xlane.f32.xlu0 %v2371
        %v2389 = vpop.xlane.xlu0 %2388
        %2390 = vadd.xlane.f32.xlu0 %v2372
        %v2391 = vpop.xlane.xlu0 %2390
        %2392 = vadd.xlane.f32.xlu0 %v2373
        %v2393 = vpop.xlane.xlu0 %2392
        %2394 = vadd.xlane.f32.xlu0 %v2374
        %v2395 = vpop.xlane.xlu0 %2394
        %2396 = vadd.xlane.f32.xlu0 %v2375
        %v2397 = vpop.xlane.xlu0 %2396
        %2398 = vadd.xlane.f32.xlu0 %v2376
        %v2399 = vpop.xlane.xlu0 %2398
        %2400 = vadd.xlane.f32.xlu0 %v2377
        %v2401 = vpop.xlane.xlu0 %2400
        %2402 = vadd.xlane.f32.xlu0 %v2378
        %v2403 = vpop.xlane.xlu0 %2402
        %2404 = vadd.xlane.f32.xlu0 %v2379
        %v2405 = vpop.xlane.xlu0 %2404
        %2406 = vadd.xlane.f32.xlu0 %v2380
        %v2407 = vpop.xlane.xlu0 %2406
        %2408 = vadd.xlane.f32.xlu0 %v2381
        %v2409 = vpop.xlane.xlu0 %2408
        %2410 = vadd.xlane.f32.xlu0 %v2382
        %v2411 = vpop.xlane.xlu0 %2410
        %2412 = vadd.xlane.f32.xlu0 %v2383
        %v2413 = vpop.xlane.xlu0 %2412
        %2414 = vadd.xlane.f32.xlu0 %v2384
        %v2415 = vpop.xlane.xlu0 %2414
        %2416 = vadd.xlane.f32.xlu0 %v2385
        %v2417 = vpop.xlane.xlu0 %2416
        %v2418 = vmul.f32 %v2387, %v2337
        %v2419 = vmul.f32 %v2389, %v2337
        %v2420 = vmul.f32 %v2391, %v2337
        %v2421 = vmul.f32 %v2393, %v2337
        %v2422 = vmul.f32 %v2395, %v2337
        %v2423 = vmul.f32 %v2397, %v2337
        %v2424 = vmul.f32 %v2399, %v2337
        %v2425 = vmul.f32 %v2401, %v2337
        %v2426 = vmul.f32 %v2403, %v2337
        %v2427 = vmul.f32 %v2405, %v2337
        %v2428 = vmul.f32 %v2407, %v2337
        %v2429 = vmul.f32 %v2409, %v2337
        %v2430 = vmul.f32 %v2411, %v2337
        %v2431 = vmul.f32 %v2413, %v2337
        %v2432 = vmul.f32 %v2415, %v2337
        %v2433 = vmul.f32 %v2417, %v2337
        %v2434 = vadd.f32 %v2418, 1e-12
        %v2435 = vadd.f32 %v2419, 1e-12
        %v2436 = vadd.f32 %v2420, 1e-12
        %v2437 = vadd.f32 %v2421, 1e-12
        %v2438 = vadd.f32 %v2422, 1e-12
        %v2439 = vadd.f32 %v2423, 1e-12
        %v2440 = vadd.f32 %v2424, 1e-12
        %v2441 = vadd.f32 %v2425, 1e-12
        %v2442 = vadd.f32 %v2426, 1e-12
        %v2443 = vadd.f32 %v2427, 1e-12
        %v2444 = vadd.f32 %v2428, 1e-12
        %v2445 = vadd.f32 %v2429, 1e-12
        %v2446 = vadd.f32 %v2430, 1e-12
        %v2447 = vadd.f32 %v2431, 1e-12
        %v2448 = vadd.f32 %v2432, 1e-12
        %v2449 = vadd.f32 %v2433, 1e-12
        %v2450 = vrsqrt.pop %v2434
        %v2451 = vrsqrt.pop %v2435
        %v2452 = vrsqrt.pop %v2436
        %v2453 = vrsqrt.pop %v2437
        %v2454 = vrsqrt.pop %v2438
        %v2455 = vrsqrt.pop %v2439
        %v2456 = vrsqrt.pop %v2440
        %v2457 = vrsqrt.pop %v2441
        %v2458 = vrsqrt.pop %v2442
        %v2459 = vrsqrt.pop %v2443
        %v2460 = vrsqrt.pop %v2444
        %v2461 = vrsqrt.pop %v2445
        %v2462 = vrsqrt.pop %v2446
        %v2463 = vrsqrt.pop %v2447
        %v2464 = vrsqrt.pop %v2448
        %v2465 = vrsqrt.pop %v2449
        %v2466 = vmul.f32 %v2354, %v2450
        %v2467 = vmul.f32 %v2355, %v2451
        %v2468 = vmul.f32 %v2356, %v2452
        %v2469 = vmul.f32 %v2357, %v2453
        %v2470 = vmul.f32 %v2358, %v2454
        %v2471 = vmul.f32 %v2359, %v2455
        %v2472 = vmul.f32 %v2360, %v2456
        %v2473 = vmul.f32 %v2361, %v2457
        %v2474 = vmul.f32 %v2362, %v2458
        %v2475 = vmul.f32 %v2363, %v2459
        %v2476 = vmul.f32 %v2364, %v2460
        %v2477 = vmul.f32 %v2365, %v2461
        %v2478 = vmul.f32 %v2366, %v2462
        %v2479 = vmul.f32 %v2367, %v2463
        %v2480 = vmul.f32 %v2368, %v2464
        %v2481 = vmul.f32 %v2369, %v2465
        %v2483 = vlaneseq
        %v2484 = vshrl.u32 %v2483, 7
        %v2485 = vsub.s32 0, %v2484
        %v2486 = vrot.slane %v2303, %v2485
        %v2488 = vmul.f32 %v2466, %v2486
        %v2489 = vmul.f32 %v2467, %v2486
        %v2490 = vmul.f32 %v2468, %v2486
        %v2491 = vmul.f32 %v2469, %v2486
        %v2492 = vmul.f32 %v2470, %v2486
        %v2493 = vmul.f32 %v2471, %v2486
        %v2494 = vmul.f32 %v2472, %v2486
        %v2495 = vmul.f32 %v2473, %v2486
        %v2496 = vmul.f32 %v2474, %v2486
        %v2497 = vmul.f32 %v2475, %v2486
        %v2498 = vmul.f32 %v2476, %v2486
        %v2499 = vmul.f32 %v2477, %v2486
        %v2500 = vmul.f32 %v2478, %v2486
        %v2501 = vmul.f32 %v2479, %v2486
        %v2502 = vmul.f32 %v2480, %v2486
        %v2503 = vmul.f32 %v2481, %v2486
        %v2505 = vlaneseq
        %v2506 = vshrl.u32 %v2505, 7
        %v2507 = vsub.s32 0, %v2506
        %v2508 = vrot.slane %v2304, %v2507
        %v2510 = vadd.f32 %v2488, %v2508
        %v2511 = vadd.f32 %v2489, %v2508
        %v2512 = vadd.f32 %v2490, %v2508
        %v2513 = vadd.f32 %v2491, %v2508
        %v2514 = vadd.f32 %v2492, %v2508
        %v2515 = vadd.f32 %v2493, %v2508
        %v2516 = vadd.f32 %v2494, %v2508
        %v2517 = vadd.f32 %v2495, %v2508
        %v2518 = vadd.f32 %v2496, %v2508
        %v2519 = vadd.f32 %v2497, %v2508
        %v2520 = vadd.f32 %v2498, %v2508
        %v2521 = vadd.f32 %v2499, %v2508
        %v2522 = vadd.f32 %v2500, %v2508
        %v2523 = vadd.f32 %v2501, %v2508
        %v2524 = vadd.f32 %v2502, %v2508
        %v2525 = vadd.f32 %v2503, %v2508
        %v2526 = vpack.c.bf16 %v2511, %v2510
        %v2527 = vpack.c.bf16 %v2513, %v2512
        %v2528 = vpack.c.bf16 %v2515, %v2514
        %v2529 = vpack.c.bf16 %v2517, %v2516
        %v2530 = vpack.c.bf16 %v2519, %v2518
        %v2531 = vpack.c.bf16 %v2521, %v2520
        %v2532 = vpack.c.bf16 %v2523, %v2522
        %v2533 = vpack.c.bf16 %v2525, %v2524
        %v2534 = vld [vmem:[#allocation13] sm:$0xff]
        %v2535 = vld [vmem:[#allocation13 + $0x8] sm:$0xff]
        %v2536 = vld [vmem:[#allocation13 + $0x10] sm:$0xff]
        %v2537 = vld [vmem:[#allocation13 + $0x18] sm:$0xff]
        %v2538 = vld [vmem:[#allocation13 + $0x20] sm:$0xff]
        %v2539 = vld [vmem:[#allocation13 + $0x28] sm:$0xff]
        %v2540 = vld [vmem:[#allocation13 + $0x30] sm:$0xff]
        %v2541 = vld [vmem:[#allocation13 + $0x38] sm:$0xff]
        %v2542 = vld [vmem:[#allocation13 + $0x40] sm:$0xff]
        %v2543 = vld [vmem:[#allocation13 + $0x48] sm:$0xff]
        %v2544 = vld [vmem:[#allocation13 + $0x50] sm:$0xff]
        %v2545 = vld [vmem:[#allocation13 + $0x58] sm:$0xff]
        %v2546 = vld [vmem:[#allocation13 + $0x60] sm:$0xff]
        %v2547 = vld [vmem:[#allocation13 + $0x68] sm:$0xff]
        %v2548 = vld [vmem:[#allocation13 + $0x70] sm:$0xff]
        %v2549 = vld [vmem:[#allocation13 + $0x78] sm:$0xff]
        %v2550 = vld [vmem:[%s9] sm:$0x3]
        %v2552 = vlaneseq
        %v2553 = vshrl.u32 %v2552, 7
        %v2554 = vsub.s32 0, %v2553
        %v2555 = vrot.slane %v2550, %v2554
        %v2556 = vlaneseq
        %v2557 = vshrl.u32 %v2556, 7
        %v2558 = vsub.s32 1, %v2557
        %v2559 = vrot.slane %v2550, %v2558
        %v2578 = vunpack.c.l.b16 %v2534
        %v2579 = vunpack.c.h.b16 %v2534
        %v2580 = vunpack.c.l.b16 %v2535
        %v2581 = vunpack.c.h.b16 %v2535
        %v2582 = vunpack.c.l.b16 %v2536
        %v2583 = vunpack.c.h.b16 %v2536
        %v2584 = vunpack.c.l.b16 %v2537
        %v2585 = vunpack.c.h.b16 %v2537
        %v2586 = vunpack.c.l.b16 %v2538
        %v2587 = vunpack.c.h.b16 %v2538
        %v2588 = vunpack.c.l.b16 %v2539
        %v2589 = vunpack.c.h.b16 %v2539
        %v2590 = vunpack.c.l.b16 %v2540
        %v2591 = vunpack.c.h.b16 %v2540
        %v2592 = vunpack.c.l.b16 %v2541
        %v2593 = vunpack.c.h.b16 %v2541
        %v2594 = vunpack.c.l.b16 %v2542
        %v2595 = vunpack.c.h.b16 %v2542
        %v2596 = vunpack.c.l.b16 %v2543
        %v2597 = vunpack.c.h.b16 %v2543
        %v2598 = vunpack.c.l.b16 %v2544
        %v2599 = vunpack.c.h.b16 %v2544
        %v2600 = vunpack.c.l.b16 %v2545
        %v2601 = vunpack.c.h.b16 %v2545
        %v2602 = vunpack.c.l.b16 %v2546
        %v2603 = vunpack.c.h.b16 %v2546
        %v2604 = vunpack.c.l.b16 %v2547
        %v2605 = vunpack.c.h.b16 %v2547
        %v2606 = vunpack.c.l.b16 %v2548
        %v2607 = vunpack.c.h.b16 %v2548
        %v2608 = vunpack.c.l.b16 %v2549
        %v2609 = vunpack.c.h.b16 %v2549
        %v2610 = vpack.c.b16 %v2580, %v2578
        %v2611 = vpack.c.b16 %v2581, %v2579
        %v2612 = vpack.c.b16 %v2584, %v2582
        %v2613 = vpack.c.b16 %v2585, %v2583
        %v2614 = vpack.c.b16 %v2588, %v2586
        %v2615 = vpack.c.b16 %v2589, %v2587
        %v2616 = vpack.c.b16 %v2592, %v2590
        %v2617 = vpack.c.b16 %v2593, %v2591
        %v2618 = vpack.c.b16 %v2596, %v2594
        %v2619 = vpack.c.b16 %v2597, %v2595
        %v2620 = vpack.c.b16 %v2600, %v2598
        %v2621 = vpack.c.b16 %v2601, %v2599
        %v2622 = vpack.c.b16 %v2604, %v2602
        %v2623 = vpack.c.b16 %v2605, %v2603
        %v2624 = vpack.c.b16 %v2608, %v2606
        %v2625 = vpack.c.b16 %v2609, %v2607
        %2642 = vmatprep.subr.bf16.mxu0 %v2611
        %2643 = vmatpush1.bf16.msra.mxu0 %v2610
        %2644 = vmatprep.subr.bf16.mxu0 %v2613
        %2645 = vmatpush1.bf16.msra.mxu0 %v2612
        %2646 = vmatprep.subr.bf16.mxu0 %v2615
        %2647 = vmatpush1.bf16.msra.mxu0 %v2614
        %2648 = vmatprep.subr.bf16.mxu0 %v2617
        %2649 = vmatpush1.bf16.msra.mxu0 %v2616
        %2650 = vmatprep.subr.bf16.mxu0 %v2619
        %2651 = vmatpush1.bf16.msra.mxu0 %v2618
        %2652 = vmatprep.subr.bf16.mxu0 %v2621
        %2653 = vmatpush1.bf16.msra.mxu0 %v2620
        %2654 = vmatprep.subr.bf16.mxu0 %v2623
        %2655 = vmatpush1.bf16.msra.mxu0 %v2622
        %2656 = vmatprep.subr.bf16.mxu0 %v2625
        %2657 = vmatpush1.bf16.msra.mxu0 %v2624
        %2658 = vmatprep.subr.bf16.mxu0 0
        %2659 = vmatpush1.bf16.msra.mxu0 0
        %2660 = vmatprep.subr.bf16.mxu0 0
        %2661 = vmatpush1.bf16.msra.mxu0 0
        %2662 = vmatprep.subr.bf16.mxu0 0
        %2663 = vmatpush1.bf16.msra.mxu0 0
        %2664 = vmatprep.subr.bf16.mxu0 0
        %2665 = vmatpush1.bf16.msra.mxu0 0
        %2666 = vmatprep.subr.bf16.mxu0 0
        %2667 = vmatpush1.bf16.msra.mxu0 0
        %2668 = vmatprep.subr.bf16.mxu0 0
        %2669 = vmatpush1.bf16.msra.mxu0 0
        %2670 = vmatprep.subr.bf16.mxu0 0
        %2671 = vmatpush1.bf16.msra.mxu0 0
        %2672 = vmatprep.subr.bf16.mxu0 0
        %2673 = vmatpush1.bf16.msra.mxu0 0
        %2674 = vmatprep.mubr.bf16.mxu0 0
        %2675 = vmatmul.mubr.bf16.gmra.mrb[0].mxu0 %v2526
        %v2676 = vpop.f32.mrb[0].mxu0
        %v2677 = vadd.f32 %v2555, %v2676
        %v2678 = vpop.f32.mrb[0].mxu0
        %v2679 = vadd.f32 %v2559, %v2678
        %v2680 = vpop.f32.mrb[0].mxu0
        %v2681 = vadd.f32 %v2555, %v2680
        %v2682 = vpop.f32.mrb[0].mxu0
        %v2683 = vadd.f32 %v2559, %v2682
        %2684 = vmatprep.mubr.bf16.mxu0 0
        %2685 = vmatmul.mubr.bf16.gmra.mrb[0].mxu0 %v2527
        %v2686 = vpop.f32.mrb[0].mxu0
        %v2687 = vadd.f32 %v2555, %v2686
        %v2688 = vpop.f32.mrb[0].mxu0
        %v2689 = vadd.f32 %v2559, %v2688
        %v2690 = vpop.f32.mrb[0].mxu0
        %v2691 = vadd.f32 %v2555, %v2690
        %v2692 = vpop.f32.mrb[0].mxu0
        %v2693 = vadd.f32 %v2559, %v2692
        %2694 = vmatprep.mubr.bf16.mxu0 0
        %2695 = vmatmul.mubr.bf16.gmra.mrb[0].mxu0 %v2528
        %v2696 = vpop.f32.mrb[0].mxu0
        %v2697 = vadd.f32 %v2555, %v2696
        %v2698 = vpop.f32.mrb[0].mxu0
        %v2699 = vadd.f32 %v2559, %v2698
        %v2700 = vpop.f32.mrb[0].mxu0
        %v2701 = vadd.f32 %v2555, %v2700
        %v2702 = vpop.f32.mrb[0].mxu0
        %v2703 = vadd.f32 %v2559, %v2702
        %2704 = vmatprep.mubr.bf16.mxu0 0
        %2705 = vmatmul.mubr.bf16.gmra.mrb[0].mxu0 %v2529
        %v2706 = vpop.f32.mrb[0].mxu0
        %v2707 = vadd.f32 %v2555, %v2706
        %v2708 = vpop.f32.mrb[0].mxu0
        %v2709 = vadd.f32 %v2559, %v2708
        %v2710 = vpop.f32.mrb[0].mxu0
        %v2711 = vadd.f32 %v2555, %v2710
        %v2712 = vpop.f32.mrb[0].mxu0
        %v2713 = vadd.f32 %v2559, %v2712
        %2714 = vmatprep.mubr.bf16.mxu0 0
        %2715 = vmatmul.mubr.bf16.gmra.mrb[0].mxu0 %v2530
        %v2716 = vpop.f32.mrb[0].mxu0
        %v2717 = vadd.f32 %v2555, %v2716
        %v2718 = vpop.f32.mrb[0].mxu0
        %v2719 = vadd.f32 %v2559, %v2718
        %v2720 = vpop.f32.mrb[0].mxu0
        %v2721 = vadd.f32 %v2555, %v2720
        %v2722 = vpop.f32.mrb[0].mxu0
        %v2723 = vadd.f32 %v2559, %v2722
        %2724 = vmatprep.mubr.bf16.mxu0 0
        %2725 = vmatmul.mubr.bf16.gmra.mrb[0].mxu0 %v2531
        %v2726 = vpop.f32.mrb[0].mxu0
        %v2727 = vadd.f32 %v2555, %v2726
        %v2728 = vpop.f32.mrb[0].mxu0
        %v2729 = vadd.f32 %v2559, %v2728
        %v2730 = vpop.f32.mrb[0].mxu0
        %v2731 = vadd.f32 %v2555, %v2730
        %v2732 = vpop.f32.mrb[0].mxu0
        %v2733 = vadd.f32 %v2559, %v2732
        %2734 = vmatprep.mubr.bf16.mxu0 0
        %2735 = vmatmul.mubr.bf16.gmra.mrb[0].mxu0 %v2532
        %v2736 = vpop.f32.mrb[0].mxu0
        %v2737 = vadd.f32 %v2555, %v2736
        %v2738 = vpop.f32.mrb[0].mxu0
        %v2739 = vadd.f32 %v2559, %v2738
        %v2740 = vpop.f32.mrb[0].mxu0
        %v2741 = vadd.f32 %v2555, %v2740
        %v2742 = vpop.f32.mrb[0].mxu0
        %v2743 = vadd.f32 %v2559, %v2742
        %2744 = vmatprep.mubr.bf16.mxu0 0
        %2745 = vmatmul.mubr.bf16.gmra.mrb[0].mxu0 %v2533
        %v2746 = vpop.f32.mrb[0].mxu0
        %v2747 = vadd.f32 %v2555, %v2746
        %v2748 = vpop.f32.mrb[0].mxu0
        %v2749 = vadd.f32 %v2559, %v2748
        %v2750 = vpop.f32.mrb[0].mxu0
        %v2751 = vadd.f32 %v2555, %v2750
        %v2752 = vpop.f32.mrb[0].mxu0
        %v2753 = vadd.f32 %v2559, %v2752
        %2754 = vdwg.mxu0
        %v2755 = vmul.f32 %v2677, 0.5
        %v2756 = vmul.f32 %v2679, 0.5
        %v2757 = vmul.f32 %v2681, 0.5
        %v2758 = vmul.f32 %v2683, 0.5
        %v2759 = vmul.f32 %v2687, 0.5
        %v2760 = vmul.f32 %v2689, 0.5
        %v2761 = vmul.f32 %v2691, 0.5
        %v2762 = vmul.f32 %v2693, 0.5
        %v2763 = vmul.f32 %v2697, 0.5
        %v2764 = vmul.f32 %v2699, 0.5
        %v2765 = vmul.f32 %v2701, 0.5
        %v2766 = vmul.f32 %v2703, 0.5
        %v2767 = vmul.f32 %v2707, 0.5
        %v2768 = vmul.f32 %v2709, 0.5
        %v2769 = vmul.f32 %v2711, 0.5
        %v2770 = vmul.f32 %v2713, 0.5
        %v2771 = vmul.f32 %v2717, 0.5
        %v2772 = vmul.f32 %v2719, 0.5
        %v2773 = vmul.f32 %v2721, 0.5
        %v2774 = vmul.f32 %v2723, 0.5
        %v2775 = vmul.f32 %v2727, 0.5
        %v2776 = vmul.f32 %v2729, 0.5
        %v2777 = vmul.f32 %v2731, 0.5
        %v2778 = vmul.f32 %v2733, 0.5
        %v2779 = vmul.f32 %v2737, 0.5
        %v2780 = vmul.f32 %v2739, 0.5
        %v2781 = vmul.f32 %v2741, 0.5
        %v2782 = vmul.f32 %v2743, 0.5
        %v2783 = vmul.f32 %v2747, 0.5
        %v2784 = vmul.f32 %v2749, 0.5
        %v2785 = vmul.f32 %v2751, 0.5
        %v2786 = vmul.f32 %v2753, 0.5
        %v2787 = vmul.f32 %v2677, 0.044715
        %v2788 = vmul.f32 %v2679, 0.044715
        %v2789 = vmul.f32 %v2681, 0.044715
        %v2790 = vmul.f32 %v2683, 0.044715
        %v2791 = vmul.f32 %v2687, 0.044715
        %v2792 = vmul.f32 %v2689, 0.044715
        %v2793 = vmul.f32 %v2691, 0.044715
        %v2794 = vmul.f32 %v2693, 0.044715
        %v2795 = vmul.f32 %v2697, 0.044715
        %v2796 = vmul.f32 %v2699, 0.044715
        %v2797 = vmul.f32 %v2701, 0.044715
        %v2798 = vmul.f32 %v2703, 0.044715
        %v2799 = vmul.f32 %v2707, 0.044715
        %v2800 = vmul.f32 %v2709, 0.044715
        %v2801 = vmul.f32 %v2711, 0.044715
        %v2802 = vmul.f32 %v2713, 0.044715
        %v2803 = vmul.f32 %v2717, 0.044715
        %v2804 = vmul.f32 %v2719, 0.044715
        %v2805 = vmul.f32 %v2721, 0.044715
        %v2806 = vmul.f32 %v2723, 0.044715
        %v2807 = vmul.f32 %v2727, 0.044715
        %v2808 = vmul.f32 %v2729, 0.044715
        %v2809 = vmul.f32 %v2731, 0.044715
        %v2810 = vmul.f32 %v2733, 0.044715
        %v2811 = vmul.f32 %v2737, 0.044715
        %v2812 = vmul.f32 %v2739, 0.044715
        %v2813 = vmul.f32 %v2741, 0.044715
        %v2814 = vmul.f32 %v2743, 0.044715
        %v2815 = vmul.f32 %v2747, 0.044715
        %v2816 = vmul.f32 %v2749, 0.044715
        %v2817 = vmul.f32 %v2751, 0.044715
        %v2818 = vmul.f32 %v2753, 0.044715
        %v2819 = vmul.f32 %v2787, %v2677
        %v2820 = vmul.f32 %v2788, %v2679
        %v2821 = vmul.f32 %v2789, %v2681
        %v2822 = vmul.f32 %v2790, %v2683
        %v2823 = vmul.f32 %v2791, %v2687
        %v2824 = vmul.f32 %v2792, %v2689
        %v2825 = vmul.f32 %v2793, %v2691
        %v2826 = vmul.f32 %v2794, %v2693
        %v2827 = vmul.f32 %v2795, %v2697
        %v2828 = vmul.f32 %v2796, %v2699
        %v2829 = vmul.f32 %v2797, %v2701
        %v2830 = vmul.f32 %v2798, %v2703
        %v2831 = vmul.f32 %v2799, %v2707
        %v2832 = vmul.f32 %v2800, %v2709
        %v2833 = vmul.f32 %v2801, %v2711
        %v2834 = vmul.f32 %v2802, %v2713
        %v2835 = vmul.f32 %v2803, %v2717
        %v2836 = vmul.f32 %v2804, %v2719
        %v2837 = vmul.f32 %v2805, %v2721
        %v2838 = vmul.f32 %v2806, %v2723
        %v2839 = vmul.f32 %v2807, %v2727
        %v2840 = vmul.f32 %v2808, %v2729
        %v2841 = vmul.f32 %v2809, %v2731
        %v2842 = vmul.f32 %v2810, %v2733
        %v2843 = vmul.f32 %v2811, %v2737
        %v2844 = vmul.f32 %v2812, %v2739
        %v2845 = vmul.f32 %v2813, %v2741
        %v2846 = vmul.f32 %v2814, %v2743
        %v2847 = vmul.f32 %v2815, %v2747
        %v2848 = vmul.f32 %v2816, %v2749
        %v2849 = vmul.f32 %v2817, %v2751
        %v2850 = vmul.f32 %v2818, %v2753
        %v2851 = vmul.f32 %v2819, %v2677
        %v2852 = vmul.f32 %v2820, %v2679
        %v2853 = vmul.f32 %v2821, %v2681
        %v2854 = vmul.f32 %v2822, %v2683
        %v2855 = vmul.f32 %v2823, %v2687
        %v2856 = vmul.f32 %v2824, %v2689
        %v2857 = vmul.f32 %v2825, %v2691
        %v2858 = vmul.f32 %v2826, %v2693
        %v2859 = vmul.f32 %v2827, %v2697
        %v2860 = vmul.f32 %v2828, %v2699
        %v2861 = vmul.f32 %v2829, %v2701
        %v2862 = vmul.f32 %v2830, %v2703
        %v2863 = vmul.f32 %v2831, %v2707
        %v2864 = vmul.f32 %v2832, %v2709
        %v2865 = vmul.f32 %v2833, %v2711
        %v2866 = vmul.f32 %v2834, %v2713
        %v2867 = vmul.f32 %v2835, %v2717
        %v2868 = vmul.f32 %v2836, %v2719
        %v2869 = vmul.f32 %v2837, %v2721
        %v2870 = vmul.f32 %v2838, %v2723
        %v2871 = vmul.f32 %v2839, %v2727
        %v2872 = vmul.f32 %v2840, %v2729
        %v2873 = vmul.f32 %v2841, %v2731
        %v2874 = vmul.f32 %v2842, %v2733
        %v2875 = vmul.f32 %v2843, %v2737
        %v2876 = vmul.f32 %v2844, %v2739
        %v2877 = vmul.f32 %v2845, %v2741
        %v2878 = vmul.f32 %v2846, %v2743
        %v2879 = vmul.f32 %v2847, %v2747
        %v2880 = vmul.f32 %v2848, %v2749
        %v2881 = vmul.f32 %v2849, %v2751
        %v2882 = vmul.f32 %v2850, %v2753
        %v2883 = vadd.f32 %v2677, %v2851
        %v2884 = vadd.f32 %v2679, %v2852
        %v2885 = vadd.f32 %v2681, %v2853
        %v2886 = vadd.f32 %v2683, %v2854
        %v2887 = vadd.f32 %v2687, %v2855
        %v2888 = vadd.f32 %v2689, %v2856
        %v2889 = vadd.f32 %v2691, %v2857
        %v2890 = vadd.f32 %v2693, %v2858
        %v2891 = vadd.f32 %v2697, %v2859
        %v2892 = vadd.f32 %v2699, %v2860
        %v2893 = vadd.f32 %v2701, %v2861
        %v2894 = vadd.f32 %v2703, %v2862
        %v2895 = vadd.f32 %v2707, %v2863
        %v2896 = vadd.f32 %v2709, %v2864
        %v2897 = vadd.f32 %v2711, %v2865
        %v2898 = vadd.f32 %v2713, %v2866
        %v2899 = vadd.f32 %v2717, %v2867
        %v2900 = vadd.f32 %v2719, %v2868
        %v2901 = vadd.f32 %v2721, %v2869
        %v2902 = vadd.f32 %v2723, %v2870
        %v2903 = vadd.f32 %v2727, %v2871
        %v2904 = vadd.f32 %v2729, %v2872
        %v2905 = vadd.f32 %v2731, %v2873
        %v2906 = vadd.f32 %v2733, %v2874
        %v2907 = vadd.f32 %v2737, %v2875
        %v2908 = vadd.f32 %v2739, %v2876
        %v2909 = vadd.f32 %v2741, %v2877
        %v2910 = vadd.f32 %v2743, %v2878
        %v2911 = vadd.f32 %v2747, %v2879
        %v2912 = vadd.f32 %v2749, %v2880
        %v2913 = vadd.f32 %v2751, %v2881
        %v2914 = vadd.f32 %v2753, %v2882
        %v2915 = vmul.f32 %v2883, 0.7978846
        %v2916 = vmul.f32 %v2884, 0.7978846
        %v2917 = vmul.f32 %v2885, 0.7978846
        %v2918 = vmul.f32 %v2886, 0.7978846
        %v2919 = vmul.f32 %v2887, 0.7978846
        %v2920 = vmul.f32 %v2888, 0.7978846
        %v2921 = vmul.f32 %v2889, 0.7978846
        %v2922 = vmul.f32 %v2890, 0.7978846
        %v2923 = vmul.f32 %v2891, 0.7978846
        %v2924 = vmul.f32 %v2892, 0.7978846
        %v2925 = vmul.f32 %v2893, 0.7978846
        %v2926 = vmul.f32 %v2894, 0.7978846
        %v2927 = vmul.f32 %v2895, 0.7978846
        %v2928 = vmul.f32 %v2896, 0.7978846
        %v2929 = vmul.f32 %v2897, 0.7978846
        %v2930 = vmul.f32 %v2898, 0.7978846
        %v2931 = vmul.f32 %v2899, 0.7978846
        %v2932 = vmul.f32 %v2900, 0.7978846
        %v2933 = vmul.f32 %v2901, 0.7978846
        %v2934 = vmul.f32 %v2902, 0.7978846
        %v2935 = vmul.f32 %v2903, 0.7978846
        %v2936 = vmul.f32 %v2904, 0.7978846
        %v2937 = vmul.f32 %v2905, 0.7978846
        %v2938 = vmul.f32 %v2906, 0.7978846
        %v2939 = vmul.f32 %v2907, 0.7978846
        %v2940 = vmul.f32 %v2908, 0.7978846
        %v2941 = vmul.f32 %v2909, 0.7978846
        %v2942 = vmul.f32 %v2910, 0.7978846
        %v2943 = vmul.f32 %v2911, 0.7978846
        %v2944 = vmul.f32 %v2912, 0.7978846
        %v2945 = vmul.f32 %v2913, 0.7978846
        %v2946 = vmul.f32 %v2914, 0.7978846
        %v2947 = vtanh.pop %v2915
        %v2948 = vtanh.pop %v2916
        %v2949 = vtanh.pop %v2917
        %v2950 = vtanh.pop %v2918
        %v2951 = vtanh.pop %v2919
        %v2952 = vtanh.pop %v2920
        %v2953 = vtanh.pop %v2921
        %v2954 = vtanh.pop %v2922
        %v2955 = vtanh.pop %v2923
        %v2956 = vtanh.pop %v2924
        %v2957 = vtanh.pop %v2925
        %v2958 = vtanh.pop %v2926
        %v2959 = vtanh.pop %v2927
        %v2960 = vtanh.pop %v2928
        %v2961 = vtanh.pop %v2929
        %v2962 = vtanh.pop %v2930
        %v2963 = vtanh.pop %v2931
        %v2964 = vtanh.pop %v2932
        %v2965 = vtanh.pop %v2933
        %v2966 = vtanh.pop %v2934
        %v2967 = vtanh.pop %v2935
        %v2968 = vtanh.pop %v2936
        %v2969 = vtanh.pop %v2937
        %v2970 = vtanh.pop %v2938
        %v2971 = vtanh.pop %v2939
        %v2972 = vtanh.pop %v2940
        %v2973 = vtanh.pop %v2941
        %v2974 = vtanh.pop %v2942
        %v2975 = vtanh.pop %v2943
        %v2976 = vtanh.pop %v2944
        %v2977 = vtanh.pop %v2945
        %v2978 = vtanh.pop %v2946
        %v2979 = vadd.f32 %v2947, 1.0
        %v2980 = vadd.f32 %v2948, 1.0
        %v2981 = vadd.f32 %v2949, 1.0
        %v2982 = vadd.f32 %v2950, 1.0
        %v2983 = vadd.f32 %v2951, 1.0
        %v2984 = vadd.f32 %v2952, 1.0
        %v2985 = vadd.f32 %v2953, 1.0
        %v2986 = vadd.f32 %v2954, 1.0
        %v2987 = vadd.f32 %v2955, 1.0
        %v2988 = vadd.f32 %v2956, 1.0
        %v2989 = vadd.f32 %v2957, 1.0
        %v2990 = vadd.f32 %v2958, 1.0
        %v2991 = vadd.f32 %v2959, 1.0
        %v2992 = vadd.f32 %v2960, 1.0
        %v2993 = vadd.f32 %v2961, 1.0
        %v2994 = vadd.f32 %v2962, 1.0
        %v2995 = vadd.f32 %v2963, 1.0
        %v2996 = vadd.f32 %v2964, 1.0
        %v2997 = vadd.f32 %v2965, 1.0
        %v2998 = vadd.f32 %v2966, 1.0
        %v2999 = vadd.f32 %v2967, 1.0
        %v3000 = vadd.f32 %v2968, 1.0
        %v3001 = vadd.f32 %v2969, 1.0
        %v3002 = vadd.f32 %v2970, 1.0
        %v3003 = vadd.f32 %v2971, 1.0
        %v3004 = vadd.f32 %v2972, 1.0
        %v3005 = vadd.f32 %v2973, 1.0
        %v3006 = vadd.f32 %v2974, 1.0
        %v3007 = vadd.f32 %v2975, 1.0
        %v3008 = vadd.f32 %v2976, 1.0
        %v3009 = vadd.f32 %v2977, 1.0
        %v3010 = vadd.f32 %v2978, 1.0
        %v3011 = vmul.f32 %v2755, %v2979
        %v3012 = vmul.f32 %v2756, %v2980
        %v3013 = vmul.f32 %v2757, %v2981
        %v3014 = vmul.f32 %v2758, %v2982
        %v3015 = vmul.f32 %v2759, %v2983
        %v3016 = vmul.f32 %v2760, %v2984
        %v3017 = vmul.f32 %v2761, %v2985
        %v3018 = vmul.f32 %v2762, %v2986
        %v3019 = vmul.f32 %v2763, %v2987
        %v3020 = vmul.f32 %v2764, %v2988
        %v3021 = vmul.f32 %v2765, %v2989
        %v3022 = vmul.f32 %v2766, %v2990
        %v3023 = vmul.f32 %v2767, %v2991
        %v3024 = vmul.f32 %v2768, %v2992
        %v3025 = vmul.f32 %v2769, %v2993
        %v3026 = vmul.f32 %v2770, %v2994
        %v3027 = vmul.f32 %v2771, %v2995
        %v3028 = vmul.f32 %v2772, %v2996
        %v3029 = vmul.f32 %v2773, %v2997
        %v3030 = vmul.f32 %v2774, %v2998
        %v3031 = vmul.f32 %v2775, %v2999
        %v3032 = vmul.f32 %v2776, %v3000
        %v3033 = vmul.f32 %v2777, %v3001
        %v3034 = vmul.f32 %v2778, %v3002
        %v3035 = vmul.f32 %v2779, %v3003
        %v3036 = vmul.f32 %v2780, %v3004
        %v3037 = vmul.f32 %v2781, %v3005
        %v3038 = vmul.f32 %v2782, %v3006
        %v3039 = vmul.f32 %v2783, %v3007
        %v3040 = vmul.f32 %v2784, %v3008
        %v3041 = vmul.f32 %v2785, %v3009
        %v3042 = vmul.f32 %v2786, %v3010
        %v3043 = vpack.c.bf16 %v3013, %v3011
        %v3044 = vpack.c.bf16 %v3014, %v3012
        %v3045 = vpack.c.bf16 %v3017, %v3015
        %v3046 = vpack.c.bf16 %v3018, %v3016
        %v3047 = vpack.c.bf16 %v3021, %v3019
        %v3048 = vpack.c.bf16 %v3022, %v3020
        %v3049 = vpack.c.bf16 %v3025, %v3023
        %v3050 = vpack.c.bf16 %v3026, %v3024
        %v3051 = vpack.c.bf16 %v3029, %v3027
        %v3052 = vpack.c.bf16 %v3030, %v3028
        %v3053 = vpack.c.bf16 %v3033, %v3031
        %v3054 = vpack.c.bf16 %v3034, %v3032
        %v3055 = vpack.c.bf16 %v3037, %v3035
        %v3056 = vpack.c.bf16 %v3038, %v3036
        %v3057 = vpack.c.bf16 %v3041, %v3039
        %v3058 = vpack.c.bf16 %v3042, %v3040
        %v3059 = vld [vmem:[#allocation14] sm:$0xf]
        %v3060 = vld [vmem:[#allocation14 + $0x4] sm:$0xf]
        %v3061 = vld [vmem:[#allocation14 + $0x8] sm:$0xf]
        %v3062 = vld [vmem:[#allocation14 + $0xc] sm:$0xf]
        %v3063 = vld [vmem:[#allocation14 + $0x10] sm:$0xf]
        %v3064 = vld [vmem:[#allocation14 + $0x14] sm:$0xf]
        %v3065 = vld [vmem:[#allocation14 + $0x18] sm:$0xf]
        %v3066 = vld [vmem:[#allocation14 + $0x1c] sm:$0xf]
        %v3067 = vld [vmem:[#allocation14 + $0x20] sm:$0xf]
        %v3068 = vld [vmem:[#allocation14 + $0x24] sm:$0xf]
        %v3069 = vld [vmem:[#allocation14 + $0x28] sm:$0xf]
        %v3070 = vld [vmem:[#allocation14 + $0x2c] sm:$0xf]
        %v3071 = vld [vmem:[#allocation14 + $0x30] sm:$0xf]
        %v3072 = vld [vmem:[#allocation14 + $0x34] sm:$0xf]
        %v3073 = vld [vmem:[#allocation14 + $0x38] sm:$0xf]
        %v3074 = vld [vmem:[#allocation14 + $0x3c] sm:$0xf]
        %v3075 = vld [vmem:[#allocation14 + $0x40] sm:$0xf]
        %v3076 = vld [vmem:[#allocation14 + $0x44] sm:$0xf]
        %v3077 = vld [vmem:[#allocation14 + $0x48] sm:$0xf]
        %v3078 = vld [vmem:[#allocation14 + $0x4c] sm:$0xf]
        %v3079 = vld [vmem:[#allocation14 + $0x50] sm:$0xf]
        %v3080 = vld [vmem:[#allocation14 + $0x54] sm:$0xf]
        %v3081 = vld [vmem:[#allocation14 + $0x58] sm:$0xf]
        %v3082 = vld [vmem:[#allocation14 + $0x5c] sm:$0xf]
        %v3083 = vld [vmem:[#allocation14 + $0x60] sm:$0xf]
        %v3084 = vld [vmem:[#allocation14 + $0x64] sm:$0xf]
        %v3085 = vld [vmem:[#allocation14 + $0x68] sm:$0xf]
        %v3086 = vld [vmem:[#allocation14 + $0x6c] sm:$0xf]
        %v3087 = vld [vmem:[#allocation14 + $0x70] sm:$0xf]
        %v3088 = vld [vmem:[#allocation14 + $0x74] sm:$0xf]
        %v3089 = vld [vmem:[#allocation14 + $0x78] sm:$0xf]
        %v3090 = vld [vmem:[#allocation14 + $0x7c] sm:$0xf]
        %v3091 = vld [vmem:[%s11] sm:$0x1]
        %v3093 = vlaneseq
        %v3094 = vshrl.u32 %v3093, 7
        %v3095 = vsub.s32 0, %v3094
        %v3096 = vrot.slane %v3091, %v3095
        %v3130 = vunpack.c.l.b16 %v3059
        %v3131 = vunpack.c.l.b16 %v3060
        %v3132 = vunpack.c.l.b16 %v3061
        %v3133 = vunpack.c.l.b16 %v3062
        %v3134 = vunpack.c.l.b16 %v3063
        %v3135 = vunpack.c.l.b16 %v3064
        %v3136 = vunpack.c.l.b16 %v3065
        %v3137 = vunpack.c.l.b16 %v3066
        %v3138 = vunpack.c.l.b16 %v3067
        %v3139 = vunpack.c.l.b16 %v3068
        %v3140 = vunpack.c.l.b16 %v3069
        %v3141 = vunpack.c.l.b16 %v3070
        %v3142 = vunpack.c.l.b16 %v3071
        %v3143 = vunpack.c.l.b16 %v3072
        %v3144 = vunpack.c.l.b16 %v3073
        %v3145 = vunpack.c.l.b16 %v3074
        %v3146 = vunpack.c.l.b16 %v3075
        %v3147 = vunpack.c.l.b16 %v3076
        %v3148 = vunpack.c.l.b16 %v3077
        %v3149 = vunpack.c.l.b16 %v3078
        %v3150 = vunpack.c.l.b16 %v3079
        %v3151 = vunpack.c.l.b16 %v3080
        %v3152 = vunpack.c.l.b16 %v3081
        %v3153 = vunpack.c.l.b16 %v3082
        %v3154 = vunpack.c.l.b16 %v3083
        %v3155 = vunpack.c.l.b16 %v3084
        %v3156 = vunpack.c.l.b16 %v3085
        %v3157 = vunpack.c.l.b16 %v3086
        %v3158 = vunpack.c.l.b16 %v3087
        %v3159 = vunpack.c.l.b16 %v3088
        %v3160 = vunpack.c.l.b16 %v3089
        %v3161 = vunpack.c.l.b16 %v3090
        %v3162 = vpack.c.b16 %v3131, %v3130
        %v3163 = vpack.c.b16 %v3133, %v3132
        %v3164 = vpack.c.b16 %v3135, %v3134
        %v3165 = vpack.c.b16 %v3137, %v3136
        %v3166 = vpack.c.b16 %v3139, %v3138
        %v3167 = vpack.c.b16 %v3141, %v3140
        %v3168 = vpack.c.b16 %v3143, %v3142
        %v3169 = vpack.c.b16 %v3145, %v3144
        %v3170 = vpack.c.b16 %v3147, %v3146
        %v3171 = vpack.c.b16 %v3149, %v3148
        %v3172 = vpack.c.b16 %v3151, %v3150
        %v3173 = vpack.c.b16 %v3153, %v3152
        %v3174 = vpack.c.b16 %v3155, %v3154
        %v3175 = vpack.c.b16 %v3157, %v3156
        %v3176 = vpack.c.b16 %v3159, %v3158
        %v3177 = vpack.c.b16 %v3161, %v3160
        %3194 = vmatprep.subr.bf16.mxu0 0
        %3195 = vmatpush1.bf16.msra.mxu0 %v3162
        %3196 = vmatprep.subr.bf16.mxu0 0
        %3197 = vmatpush1.bf16.msra.mxu0 %v3163
        %3198 = vmatprep.subr.bf16.mxu0 0
        %3199 = vmatpush1.bf16.msra.mxu0 %v3164
        %3200 = vmatprep.subr.bf16.mxu0 0
        %3201 = vmatpush1.bf16.msra.mxu0 %v3165
        %3202 = vmatprep.subr.bf16.mxu0 0
        %3203 = vmatpush1.bf16.msra.mxu0 %v3166
        %3204 = vmatprep.subr.bf16.mxu0 0
        %3205 = vmatpush1.bf16.msra.mxu0 %v3167
        %3206 = vmatprep.subr.bf16.mxu0 0
        %3207 = vmatpush1.bf16.msra.mxu0 %v3168
        %3208 = vmatprep.subr.bf16.mxu0 0
        %3209 = vmatpush1.bf16.msra.mxu0 %v3169
        %3210 = vmatprep.subr.bf16.mxu0 0
        %3211 = vmatpush1.bf16.msra.mxu0 %v3170
        %3212 = vmatprep.subr.bf16.mxu0 0
        %3213 = vmatpush1.bf16.msra.mxu0 %v3171
        %3214 = vmatprep.subr.bf16.mxu0 0
        %3215 = vmatpush1.bf16.msra.mxu0 %v3172
        %3216 = vmatprep.subr.bf16.mxu0 0
        %3217 = vmatpush1.bf16.msra.mxu0 %v3173
        %3218 = vmatprep.subr.bf16.mxu0 0
        %3219 = vmatpush1.bf16.msra.mxu0 %v3174
        %3220 = vmatprep.subr.bf16.mxu0 0
        %3221 = vmatpush1.bf16.msra.mxu0 %v3175
        %3222 = vmatprep.subr.bf16.mxu0 0
        %3223 = vmatpush1.bf16.msra.mxu0 %v3176
        %3224 = vmatprep.subr.bf16.mxu0 0
        %3225 = vmatpush1.bf16.msra.mxu0 %v3177
        %3226 = vmatprep.mubr.bf16.mxu0 %v3044
        %3227 = vmatmul.mubr.bf16.gmra.mrb[0].mxu0 %v3043
        %v3228 = vpop.f32.mrb[0].mxu0
        %v3229 = vadd.f32 %v3096, %v3228
        %v3230 = vpop.f32.mrb[0].mxu0
        %v3231 = vpop.f32.mrb[0].mxu0
        %v3232 = vadd.f32 %v3096, %v3231
        %v3233 = vpop.f32.mrb[0].mxu0
        %3234 = vmatprep.mubr.bf16.mxu0 %v3046
        %3235 = vmatmul.mubr.bf16.gmra.mrb[0].mxu0 %v3045
        %v3236 = vpop.f32.mrb[0].mxu0
        %v3237 = vadd.f32 %v3096, %v3236
        %v3238 = vpop.f32.mrb[0].mxu0
        %v3239 = vpop.f32.mrb[0].mxu0
        %v3240 = vadd.f32 %v3096, %v3239
        %v3241 = vpop.f32.mrb[0].mxu0
        %3242 = vmatprep.mubr.bf16.mxu0 %v3048
        %3243 = vmatmul.mubr.bf16.gmra.mrb[0].mxu0 %v3047
        %v3244 = vpop.f32.mrb[0].mxu0
        %v3245 = vadd.f32 %v3096, %v3244
        %v3246 = vpop.f32.mrb[0].mxu0
        %v3247 = vpop.f32.mrb[0].mxu0
        %v3248 = vadd.f32 %v3096, %v3247
        %v3249 = vpop.f32.mrb[0].mxu0
        %3250 = vmatprep.mubr.bf16.mxu0 %v3050
        %3251 = vmatmul.mubr.bf16.gmra.mrb[0].mxu0 %v3049
        %v3252 = vpop.f32.mrb[0].mxu0
        %v3253 = vadd.f32 %v3096, %v3252
        %v3254 = vpop.f32.mrb[0].mxu0
        %v3255 = vpop.f32.mrb[0].mxu0
        %v3256 = vadd.f32 %v3096, %v3255
        %v3257 = vpop.f32.mrb[0].mxu0
        %3258 = vmatprep.mubr.bf16.mxu0 %v3052
        %3259 = vmatmul.mubr.bf16.gmra.mrb[0].mxu0 %v3051
        %v3260 = vpop.f32.mrb[0].mxu0
        %v3261 = vadd.f32 %v3096, %v3260
        %v3262 = vpop.f32.mrb[0].mxu0
        %v3263 = vpop.f32.mrb[0].mxu0
        %v3264 = vadd.f32 %v3096, %v3263
        %v3265 = vpop.f32.mrb[0].mxu0
        %3266 = vmatprep.mubr.bf16.mxu0 %v3054
        %3267 = vmatmul.mubr.bf16.gmra.mrb[0].mxu0 %v3053
        %v3268 = vpop.f32.mrb[0].mxu0
        %v3269 = vadd.f32 %v3096, %v3268
        %v3270 = vpop.f32.mrb[0].mxu0
        %v3271 = vpop.f32.mrb[0].mxu0
        %v3272 = vadd.f32 %v3096, %v3271
        %v3273 = vpop.f32.mrb[0].mxu0
        %3274 = vmatprep.mubr.bf16.mxu0 %v3056
        %3275 = vmatmul.mubr.bf16.gmra.mrb[0].mxu0 %v3055
        %v3276 = vpop.f32.mrb[0].mxu0
        %v3277 = vadd.f32 %v3096, %v3276
        %v3278 = vpop.f32.mrb[0].mxu0
        %v3279 = vpop.f32.mrb[0].mxu0
        %v3280 = vadd.f32 %v3096, %v3279
        %v3281 = vpop.f32.mrb[0].mxu0
        %3282 = vmatprep.mubr.bf16.mxu0 %v3058
        %3283 = vmatmul.mubr.bf16.gmra.mrb[0].mxu0 %v3057
        %v3284 = vpop.f32.mrb[0].mxu0
        %v3285 = vadd.f32 %v3096, %v3284
        %v3286 = vpop.f32.mrb[0].mxu0
        %v3287 = vpop.f32.mrb[0].mxu0
        %v3288 = vadd.f32 %v3096, %v3287
        %v3289 = vpop.f32.mrb[0].mxu0
        %3290 = vdwg.mxu0
        %v3291 = vadd.f32 %v2510, %v3229
        %v3292 = vadd.f32 %v2511, %v3232
        %v3293 = vadd.f32 %v2512, %v3237
        %v3294 = vadd.f32 %v2513, %v3240
        %v3295 = vadd.f32 %v2514, %v3245
        %v3296 = vadd.f32 %v2515, %v3248
        %v3297 = vadd.f32 %v2516, %v3253
        %v3298 = vadd.f32 %v2517, %v3256
        %v3299 = vadd.f32 %v2518, %v3261
        %v3300 = vadd.f32 %v2519, %v3264
        %v3301 = vadd.f32 %v2520, %v3269
        %v3302 = vadd.f32 %v2521, %v3272
        %v3303 = vadd.f32 %v2522, %v3277
        %v3304 = vadd.f32 %v2523, %v3280
        %v3305 = vadd.f32 %v2524, %v3285
        %v3306 = vadd.f32 %v2525, %v3288
        %v3307 = vld [vmem:[%s12] sm:$0x1]
        %v3308 = vld [vmem:[%s13] sm:$0x1]
        %3309 = vadd.xlane.f32.xlu0 %v3291
        %v3310 = vpop.xlane.xlu0 %3309
        %3311 = vadd.xlane.f32.xlu0 %v3292
        %v3312 = vpop.xlane.xlu0 %3311
        %3313 = vadd.xlane.f32.xlu0 %v3293
        %v3314 = vpop.xlane.xlu0 %3313
        %3315 = vadd.xlane.f32.xlu0 %v3294
        %v3316 = vpop.xlane.xlu0 %3315
        %3317 = vadd.xlane.f32.xlu0 %v3295
        %v3318 = vpop.xlane.xlu0 %3317
        %3319 = vadd.xlane.f32.xlu0 %v3296
        %v3320 = vpop.xlane.xlu0 %3319
        %3321 = vadd.xlane.f32.xlu0 %v3297
        %v3322 = vpop.xlane.xlu0 %3321
        %3323 = vadd.xlane.f32.xlu0 %v3298
        %v3324 = vpop.xlane.xlu0 %3323
        %3325 = vadd.xlane.f32.xlu0 %v3299
        %v3326 = vpop.xlane.xlu0 %3325
        %3327 = vadd.xlane.f32.xlu0 %v3300
        %v3328 = vpop.xlane.xlu0 %3327
        %3329 = vadd.xlane.f32.xlu0 %v3301
        %v3330 = vpop.xlane.xlu0 %3329
        %3331 = vadd.xlane.f32.xlu0 %v3302
        %v3332 = vpop.xlane.xlu0 %3331
        %3333 = vadd.xlane.f32.xlu0 %v3303
        %v3334 = vpop.xlane.xlu0 %3333
        %3335 = vadd.xlane.f32.xlu0 %v3304
        %v3336 = vpop.xlane.xlu0 %3335
        %3337 = vadd.xlane.f32.xlu0 %v3305
        %v3338 = vpop.xlane.xlu0 %3337
        %3339 = vadd.xlane.f32.xlu0 %v3306
        %v3340 = vpop.xlane.xlu0 %3339
        %v3341 = vmul.f32 %v3310, %v2337
        %v3342 = vmul.f32 %v3312, %v2337
        %v3343 = vmul.f32 %v3314, %v2337
        %v3344 = vmul.f32 %v3316, %v2337
        %v3345 = vmul.f32 %v3318, %v2337
        %v3346 = vmul.f32 %v3320, %v2337
        %v3347 = vmul.f32 %v3322, %v2337
        %v3348 = vmul.f32 %v3324, %v2337
        %v3349 = vmul.f32 %v3326, %v2337
        %v3350 = vmul.f32 %v3328, %v2337
        %v3351 = vmul.f32 %v3330, %v2337
        %v3352 = vmul.f32 %v3332, %v2337
        %v3353 = vmul.f32 %v3334, %v2337
        %v3354 = vmul.f32 %v3336, %v2337
        %v3355 = vmul.f32 %v3338, %v2337
        %v3356 = vmul.f32 %v3340, %v2337
        %v3357 = vsub.f32 %v3291, %v3341
        %v3358 = vsub.f32 %v3292, %v3342
        %v3359 = vsub.f32 %v3293, %v3343
        %v3360 = vsub.f32 %v3294, %v3344
        %v3361 = vsub.f32 %v3295, %v3345
        %v3362 = vsub.f32 %v3296, %v3346
        %v3363 = vsub.f32 %v3297, %v3347
        %v3364 = vsub.f32 %v3298, %v3348
        %v3365 = vsub.f32 %v3299, %v3349
        %v3366 = vsub.f32 %v3300, %v3350
        %v3367 = vsub.f32 %v3301, %v3351
        %v3368 = vsub.f32 %v3302, %v3352
        %v3369 = vsub.f32 %v3303, %v3353
        %v3370 = vsub.f32 %v3304, %v3354
        %v3371 = vsub.f32 %v3305, %v3355
        %v3372 = vsub.f32 %v3306, %v3356
        %v3373 = vmul.f32 %v3357, %v3357
        %v3374 = vmul.f32 %v3358, %v3358
        %v3375 = vmul.f32 %v3359, %v3359
        %v3376 = vmul.f32 %v3360, %v3360
        %v3377 = vmul.f32 %v3361, %v3361
        %v3378 = vmul.f32 %v3362, %v3362
        %v3379 = vmul.f32 %v3363, %v3363
        %v3380 = vmul.f32 %v3364, %v3364
        %v3381 = vmul.f32 %v3365, %v3365
        %v3382 = vmul.f32 %v3366, %v3366
        %v3383 = vmul.f32 %v3367, %v3367
        %v3384 = vmul.f32 %v3368, %v3368
        %v3385 = vmul.f32 %v3369, %v3369
        %v3386 = vmul.f32 %v3370, %v3370
        %v3387 = vmul.f32 %v3371, %v3371
        %v3388 = vmul.f32 %v3372, %v3372
        %3389 = vadd.xlane.f32.xlu0 %v3373
        %v3390 = vpop.xlane.xlu0 %3389
        %3391 = vadd.xlane.f32.xlu0 %v3374
        %v3392 = vpop.xlane.xlu0 %3391
        %3393 = vadd.xlane.f32.xlu0 %v3375
        %v3394 = vpop.xlane.xlu0 %3393
        %3395 = vadd.xlane.f32.xlu0 %v3376
        %v3396 = vpop.xlane.xlu0 %3395
        %3397 = vadd.xlane.f32.xlu0 %v3377
        %v3398 = vpop.xlane.xlu0 %3397
        %3399 = vadd.xlane.f32.xlu0 %v3378
        %v3400 = vpop.xlane.xlu0 %3399
        %3401 = vadd.xlane.f32.xlu0 %v3379
        %v3402 = vpop.xlane.xlu0 %3401
        %3403 = vadd.xlane.f32.xlu0 %v3380
        %v3404 = vpop.xlane.xlu0 %3403
        %3405 = vadd.xlane.f32.xlu0 %v3381
        %v3406 = vpop.xlane.xlu0 %3405
        %3407 = vadd.xlane.f32.xlu0 %v3382
        %v3408 = vpop.xlane.xlu0 %3407
        %3409 = vadd.xlane.f32.xlu0 %v3383
        %v3410 = vpop.xlane.xlu0 %3409
        %3411 = vadd.xlane.f32.xlu0 %v3384
        %v3412 = vpop.xlane.xlu0 %3411
        %3413 = vadd.xlane.f32.xlu0 %v3385
        %v3414 = vpop.xlane.xlu0 %3413
        %3415 = vadd.xlane.f32.xlu0 %v3386
        %v3416 = vpop.xlane.xlu0 %3415
        %3417 = vadd.xlane.f32.xlu0 %v3387
        %v3418 = vpop.xlane.xlu0 %3417
        %3419 = vadd.xlane.f32.xlu0 %v3388
        %v3420 = vpop.xlane.xlu0 %3419
        %v3421 = vmul.f32 %v3390, %v2337
        %v3422 = vmul.f32 %v3392, %v2337
        %v3423 = vmul.f32 %v3394, %v2337
        %v3424 = vmul.f32 %v3396, %v2337
        %v3425 = vmul.f32 %v3398, %v2337
        %v3426 = vmul.f32 %v3400, %v2337
        %v3427 = vmul.f32 %v3402, %v2337
        %v3428 = vmul.f32 %v3404, %v2337
        %v3429 = vmul.f32 %v3406, %v2337
        %v3430 = vmul.f32 %v3408, %v2337
        %v3431 = vmul.f32 %v3410, %v2337
        %v3432 = vmul.f32 %v3412, %v2337
        %v3433 = vmul.f32 %v3414, %v2337
        %v3434 = vmul.f32 %v3416, %v2337
        %v3435 = vmul.f32 %v3418, %v2337
        %v3436 = vmul.f32 %v3420, %v2337
        %v3437 = vadd.f32 %v3421, 1e-12
        %v3438 = vadd.f32 %v3422, 1e-12
        %v3439 = vadd.f32 %v3423, 1e-12
        %v3440 = vadd.f32 %v3424, 1e-12
        %v3441 = vadd.f32 %v3425, 1e-12
        %v3442 = vadd.f32 %v3426, 1e-12
        %v3443 = vadd.f32 %v3427, 1e-12
        %v3444 = vadd.f32 %v3428, 1e-12
        %v3445 = vadd.f32 %v3429, 1e-12
        %v3446 = vadd.f32 %v3430, 1e-12
        %v3447 = vadd.f32 %v3431, 1e-12
        %v3448 = vadd.f32 %v3432, 1e-12
        %v3449 = vadd.f32 %v3433, 1e-12
        %v3450 = vadd.f32 %v3434, 1e-12
        %v3451 = vadd.f32 %v3435, 1e-12
        %v3452 = vadd.f32 %v3436, 1e-12
        %v3453 = vrsqrt.pop %v3437
        %v3454 = vrsqrt.pop %v3438
        %v3455 = vrsqrt.pop %v3439
        %v3456 = vrsqrt.pop %v3440
        %v3457 = vrsqrt.pop %v3441
        %v3458 = vrsqrt.pop %v3442
        %v3459 = vrsqrt.pop %v3443
        %v3460 = vrsqrt.pop %v3444
        %v3461 = vrsqrt.pop %v3445
        %v3462 = vrsqrt.pop %v3446
        %v3463 = vrsqrt.pop %v3447
        %v3464 = vrsqrt.pop %v3448
        %v3465 = vrsqrt.pop %v3449
        %v3466 = vrsqrt.pop %v3450
        %v3467 = vrsqrt.pop %v3451
        %v3468 = vrsqrt.pop %v3452
        %v3469 = vmul.f32 %v3357, %v3453
        %v3470 = vmul.f32 %v3358, %v3454
        %v3471 = vmul.f32 %v3359, %v3455
        %v3472 = vmul.f32 %v3360, %v3456
        %v3473 = vmul.f32 %v3361, %v3457
        %v3474 = vmul.f32 %v3362, %v3458
        %v3475 = vmul.f32 %v3363, %v3459
        %v3476 = vmul.f32 %v3364, %v3460
        %v3477 = vmul.f32 %v3365, %v3461
        %v3478 = vmul.f32 %v3366, %v3462
        %v3479 = vmul.f32 %v3367, %v3463
        %v3480 = vmul.f32 %v3368, %v3464
        %v3481 = vmul.f32 %v3369, %v3465
        %v3482 = vmul.f32 %v3370, %v3466
        %v3483 = vmul.f32 %v3371, %v3467
        %v3484 = vmul.f32 %v3372, %v3468
        %v3486 = vlaneseq
        %v3487 = vshrl.u32 %v3486, 7
        %v3488 = vsub.s32 0, %v3487
        %v3489 = vrot.slane %v3307, %v3488
        %v3491 = vmul.f32 %v3469, %v3489
        %v3492 = vmul.f32 %v3470, %v3489
        %v3493 = vmul.f32 %v3471, %v3489
        %v3494 = vmul.f32 %v3472, %v3489
        %v3495 = vmul.f32 %v3473, %v3489
        %v3496 = vmul.f32 %v3474, %v3489
        %v3497 = vmul.f32 %v3475, %v3489
        %v3498 = vmul.f32 %v3476, %v3489
        %v3499 = vmul.f32 %v3477, %v3489
        %v3500 = vmul.f32 %v3478, %v3489
        %v3501 = vmul.f32 %v3479, %v3489
        %v3502 = vmul.f32 %v3480, %v3489
        %v3503 = vmul.f32 %v3481, %v3489
        %v3504 = vmul.f32 %v3482, %v3489
        %v3505 = vmul.f32 %v3483, %v3489
        %v3506 = vmul.f32 %v3484, %v3489
        %v3508 = vlaneseq
        %v3509 = vshrl.u32 %v3508, 7
        %v3510 = vsub.s32 0, %v3509
        %v3511 = vrot.slane %v3308, %v3510
        %v3513 = vadd.f32 %v3491, %v3511
        %v3514 = vadd.f32 %v3492, %v3511
        %v3515 = vadd.f32 %v3493, %v3511
        %v3516 = vadd.f32 %v3494, %v3511
        %v3517 = vadd.f32 %v3495, %v3511
        %v3518 = vadd.f32 %v3496, %v3511
        %v3519 = vadd.f32 %v3497, %v3511
        %v3520 = vadd.f32 %v3498, %v3511
        %v3521 = vadd.f32 %v3499, %v3511
        %v3522 = vadd.f32 %v3500, %v3511
        %v3523 = vadd.f32 %v3501, %v3511
        %v3524 = vadd.f32 %v3502, %v3511
        %v3525 = vadd.f32 %v3503, %v3511
        %v3526 = vadd.f32 %v3504, %v3511
        %v3527 = vadd.f32 %v3505, %v3511
        %v3528 = vadd.f32 %v3506, %v3511
        %3529 = vst [vmem:[%s613] sm:$0xff] %v3513
        %3530 = vst [vmem:[%s613 + $0x8] sm:$0xff] %v3514
        %3531 = vst [vmem:[%s613 + $0x10] sm:$0xff] %v3515
        %3532 = vst [vmem:[%s613 + $0x18] sm:$0xff] %v3516
        %3533 = vst [vmem:[%s613 + $0x20] sm:$0xff] %v3517
        %3534 = vst [vmem:[%s613 + $0x28] sm:$0xff] %v3518
        %3535 = vst [vmem:[%s613 + $0x30] sm:$0xff] %v3519
        %3536 = vst [vmem:[%s613 + $0x38] sm:$0xff] %v3520
        %3537 = vst [vmem:[%s613 + $0x40] sm:$0xff] %v3521
        %3538 = vst [vmem:[%s613 + $0x48] sm:$0xff] %v3522
        %3539 = vst [vmem:[%s613 + $0x50] sm:$0xff] %v3523
        %3540 = vst [vmem:[%s613 + $0x58] sm:$0xff] %v3524
        %3541 = vst [vmem:[%s613 + $0x60] sm:$0xff] %v3525
        %3542 = vst [vmem:[%s613 + $0x68] sm:$0xff] %v3526
        %3543 = vst [vmem:[%s613 + $0x70] sm:$0xff] %v3527
        %3544 = vst [vmem:[%s613 + $0x78] sm:$0xff] %v3528
        %s3545 = sand.u32 %s349, 1
        %s3546 = scalar_lea.sflag [#allocation4], %s3545
        %s3547 = sand.u32 %s349, 1
        %s3548 = smul.addr %s3547, 128
        %s3549 = scalar_lea.vmem [#allocation16], %s3548
        // Predicated region
        $region109: #{tpu_custom_call.1} parent=75 // pred_check
          %p3550 = pneg %p359
        $region110: #{tpu_custom_call.1} parent=75 // pred_check_branch
          %3552 = sbr.rel (%p3550) target = $region112
        $region111: #{tpu_custom_call.1} parent=75 // pred_region
          %s3553 = smul.u32 8, %s37
          %s3555 = ssub.s32 2048, 2048
          %3556 = vsyncadd %s3546, %s3555
          %s3557 = smul.addr %s3553, 2
          %s3558 = smul.addr %s3557, 128
          %s3559 = scalar_lea.hbm %s14, %s3558
          %s3560 = sshll.u32 %s3549, 4
          %s3561 = int_to_ptr.vmem [resolvable:$true] %s3560
          %3566 = dma.vmem_to_hbm [thread:$0]  %s3561, 2048, %s3559, %s3546, 128, 128, 8
        $region112: #{tpu_custom_call.1} parent=75 // pred_fallthru
          _
      $region76: #{tpu_custom_call.1} parent=5 // pred_fallthru
        _
      %p3567 = scmp.le.s32.totalorder 2, %s32
      // Predicated region
      $region113: #{tpu_custom_call.1} parent=5 // pred_check
        %p3568 = pneg %p3567
      $region114: #{tpu_custom_call.1} parent=5 // pred_check_branch
        %3570 = sbr.rel (%p3568) target = $region116
      $region115: #{tpu_custom_call.1} parent=5 // pred_region
        %s3571 = ssub.s32 %s32, 2
        // Predicated region
        $region117: #{tpu_custom_call.1} parent=115 // pred_check
          %p3572 = pneg %p365
        $region118: #{tpu_custom_call.1} parent=115 // pred_check_branch
          %3574 = sbr.rel (%p3572) target = $region120
        $region119: #{tpu_custom_call.1} parent=115 // pred_region
          %s3575 = sand.u32 %s350, 1
          %s3576 = scalar_lea.sflag [#allocation4], %s3575
          %s3577 = sand.u32 %s350, 1
          %s3578 = smul.addr %s3577, 128
          %s3579 = scalar_lea.vmem [#allocation16], %s3578
          %3580 = dma.done %s3576, 2048
        $region120: #{tpu_custom_call.1} parent=115 // pred_fallthru
          _
      $region116: #{tpu_custom_call.1} parent=5 // pred_fallthru
        _
    $region6: #{tpu_custom_call.1} parent=1 // loop_footer
      %s36 = sadd.s32 1, %s32
    $region7: #{tpu_custom_call.1} parent=1 // loop_footer_branch
      %31 = sbr.rel target = $region3
    $region8: #{tpu_custom_call.1} parent=1 // loop_exit
      _
    %3581 = vsyncpa [#allocation3], 1
    %s3582 = scalar_lea.sflag [#allocation3], 1
    %3583 = vsyncpa %s3582, 1
    %3584 = vsyncpa [#allocation6], 1
    %s3585 = scalar_lea.sflag [#allocation6], 1
    %3586 = vsyncpa %s3585, 1
    %3587 = vsyncpa [#allocation9], 1
    %3588 = vsyncpa [#allocation12], 1
    %3589 = vsyncpa [#allocation15], 1
    %3590 = vsyncpa [#allocation4], 1
    %s3591 = scalar_lea.sflag [#allocation4], 1
    %3592 = vsyncpa %s3591, 1

</llo_original>
